<compile_context>
chip_gen: v6e
topology: v6e:2x2x1
jax: 0.10.0
libtpu: 0.0.40
codegen_flags: <defaults>
</compile_context>

<pallas_src>
import functools

import jax
import jax.numpy as jnp
from jax import lax
from jax.experimental import pallas as pl
from jax.experimental.pallas import tpu as pltpu


# --------------------------------------------------------------------------
# Fused kernel: one output time-slice per grid step.
# --------------------------------------------------------------------------
def _fused_layer_kernel(xp_ref, wdw_ref, bdw_ref, wpw_ref, bpw_ref, o_ref, *,
                        dilation):
    # xp_ref : (1, Tp, Hp, Wp, C)  zero-padded input, one batch element
    # wdw_ref: (27, C)             BN-folded depthwise weights, row = kt*9+kh*3+kw
    # bdw_ref: (1, C)              BN-folded depthwise bias
    # wpw_ref: (C, C)              1x1x1 conv weight, layout (cin, cout)
    # bpw_ref: (1, C)              1x1x1 conv bias
    # o_ref  : (1, 1, H, W, C)     one output time slice
    t = pl.program_id(1)
    H, W, C = o_ref.shape[2], o_ref.shape[3], o_ref.shape[4]

    # Depthwise 3x3x3 dilated conv: accumulate all 27 taps in registers,
    # starting from the (BN-folded) bias.  Single store at the end.
    acc = jnp.broadcast_to(bdw_ref[0], (H, W, C)).astype(jnp.float32)
    res = None
    for kt in range(3):
        # padded time index for this tap; (1, Hp, Wp, C) slab stays in VMEM/vregs
        slab = xp_ref[0, pl.ds(t + kt * dilation, 1), :, :, :]
        if kt == 1:
            # residual = original (unpadded) x at time t — reuse the resident
            # center slab instead of an extra HBM read of x.
            res = slab[0, 1:1 + H, 1:1 + W, :]
        for kh in range(3):
            row = slab[0, kh:kh + H, :, :]            # (H, Wp, C)
            for kw in range(3):
                w_tap = wdw_ref[kt * 9 + kh * 3 + kw]  # (C,)
                acc = acc + row[:, kw:kw + W, :] * w_tap

    acc = jnp.maximum(acc, 0.0)                        # ReLU (BN already folded)

    # 1x1x1 conv == (H*W, C) @ (C, C) on the MXU, f32 accumulation.
    y = jnp.dot(acc.reshape(H * W, C), wpw_ref[...],
                preferred_element_type=jnp.float32)
    y = y + bpw_ref[...]

    # residual add + single lane-dense store
    o_ref[0, 0] = (y.reshape(H, W, C) + res).astype(o_ref.dtype)


# --------------------------------------------------------------------------
# Wrapper: PyTorch NCDHW in / NCDHW out, eval-mode BN folded into the conv.
# --------------------------------------------------------------------------
def dilated_residual_3d_forward(x_ncdhw, params, *, dilation):
    """x_ncdhw: (B, C, T, H, W) float32 — same layout as the PyTorch module."""
    eps = 1e-5
    w_dw = params["conv_dilated_w"]          # (3, 3, 3, C)
    b_dw = params["conv_dilated_b"]          # (C,)
    w_pw = params["conv_1x1_w"]              # (C, C)  (cin, cout)
    b_pw = params["conv_1x1_b"]              # (C,)

    # Fold eval-mode BatchNorm3d into the depthwise conv weights/bias.
    inv = params["bn_gamma"] / jnp.sqrt(params["bn_running_var"] + eps)
    w_dw_f = (w_dw * inv).astype(jnp.float32)
    b_dw_f = ((b_dw - params["bn_running_mean"]) * inv
              + params["bn_beta"]).astype(jnp.float32)

    # NCDHW -> channels-last (B, T, H, W, C); pad time by dilation (both sides)
    # and space by 1 (both sides), exactly like Conv3d(padding=(d, 1, 1)).
    x = jnp.transpose(x_ncdhw, (0, 2, 3, 4, 1)).astype(jnp.float32)
    B, T, H, W, C = x.shape
    xp = jnp.pad(x, ((0, 0), (dilation, dilation), (1, 1), (1, 1), (0, 0)))
    Tp, Hp, Wp = T + 2 * dilation, H + 2, W + 2

    kern = functools.partial(_fused_layer_kernel, dilation=dilation)
    out = pl.pallas_call(
        kern,
        out_shape=jax.ShapeDtypeStruct((B, T, H, W, C), jnp.float32),
        grid=(B, T),
        in_specs=[
            # whole padded sample per batch element; block index is constant in
            # t, so Pallas DMAs it once per b and reuses it for all T steps.
            pl.BlockSpec((1, Tp, Hp, Wp, C), lambda b, t: (b, 0, 0, 0, 0)),
            pl.BlockSpec((27, C), lambda b, t: (0, 0)),
            pl.BlockSpec((1, C), lambda b, t: (0, 0)),
            pl.BlockSpec((C, C), lambda b, t: (0, 0)),
            pl.BlockSpec((1, C), lambda b, t: (0, 0)),
        ],
        out_specs=pl.BlockSpec((1, 1, H, W, C), lambda b, t: (b, t, 0, 0, 0)),
        compiler_params=pltpu.CompilerParams(
            dimension_semantics=("parallel", "arbitrary"),
            vmem_limit_bytes=32 * 1024 * 1024,
        ),
    )(xp, w_dw_f.reshape(27, C), b_dw_f.reshape(1, C),
      w_pw.astype(jnp.float32), b_pw.reshape(1, C).astype(jnp.float32))

    return jnp.transpose(out, (0, 4, 1, 2, 3))          # back to (B, C, T, H, W)


# --------------------------------------------------------------------------
# Pure-JAX reference (eval-mode module semantics) for correctness checking.
# --------------------------------------------------------------------------
def dilated_residual_3d_reference(x_ncdhw, params, *, dilation):
    eps = 1e-5
    x = jnp.transpose(x_ncdhw, (0, 2, 3, 4, 1)).astype(jnp.float32)  # (B,T,H,W,C)
    C = x.shape[-1]
    rhs = params["conv_dilated_w"][:, :, :, None, :]                  # DHWIO
    y = lax.conv_general_dilated(
        x, rhs, window_strides=(1, 1, 1),
        padding=((dilation, dilation), (1, 1), (1, 1)),
        rhs_dilation=(dilation, 1, 1),
        dimension_numbers=("NDHWC", "DHWIO", "NDHWC"),
        feature_group_count=C,
        precision=lax.Precision.HIGHEST,
    ) + params["conv_dilated_b"]
    y = (y - params["bn_running_mean"]) / jnp.sqrt(params["bn_running_var"] + eps)
    y = y * params["bn_gamma"] + params["bn_beta"]
    y = jnp.maximum(y, 0.0)
    y = jnp.einsum("bthwc,cd->bthwd", y, params["conv_1x1_w"],
                   precision=lax.Precision.HIGHEST) + params["conv_1x1_b"]
    y = x + y                                                         # dropout = id
    return jnp.transpose(y, (0, 4, 1, 2, 3))


# --------------------------------------------------------------------------
# Deterministic synthetic parameters.
# --------------------------------------------------------------------------
def init_params(key, channels):
    ks = jax.random.split(key, 8)

    def w(k, shape, std=0.05):
        return jax.random.normal(k, shape, jnp.float32) * std

    return dict(
        conv_dilated_w=w(ks[0], (3, 3, 3, channels)),
        conv_dilated_b=w(ks[1], (channels,), 0.02),
        bn_gamma=1.0 + w(ks[2], (channels,), 0.02),
        bn_beta=w(ks[3], (channels,), 0.02),
        bn_running_mean=w(ks[4], (channels,), 0.1),
        bn_running_var=1.0 + jnp.abs(w(ks[5], (channels,), 0.1)),
        conv_1x1_w=w(ks[6], (channels, channels)),
        conv_1x1_b=w(ks[7], (channels,), 0.02),
    )


# --------------------------------------------------------------------------
if __name__ == "__main__":
    # Small shapes consistent with the module (NCDHW). C=128 keeps every
    # load/store lane-dense; the kernel remains correct for any C.
    B, C, T, H, W = 2, 128, 8, 16, 16
    DILATION = 2

    key = jax.random.PRNGKey(0)
    kx, kp = jax.random.split(key)
    x = jax.random.normal(kx, (B, C, T, H, W), jnp.float32)
    params = init_params(kp, C)

    fwd = jax.jit(functools.partial(dilated_residual_3d_forward, dilation=DILATION))
    out = jax.block_until_ready(fwd(x, params))
    assert out.shape == (B, C, T, H, W), out.shape

    ref_fn = jax.jit(functools.partial(dilated_residual_3d_reference,
                                       dilation=DILATION))
    ref = jax.block_until_ready(ref_fn(x, params))
    err = float(jnp.max(jnp.abs(out - ref)))
    assert jnp.all(jnp.isfinite(out)), "non-finite output"
    assert err < 5e-3, f"max abs error vs reference: {err}"

    print("KERNEL_OK")
</pallas_src>

<mosaic_0001>
module attributes {stable_mosaic.version = 11 : i64} {
  func.func @_fused_layer_kernel(%arg0: i32, %arg1: i32, %arg2: memref<1x12x18x18x128xf32, #tpu.memory_space<vmem>>, %arg3: memref<27x128xf32, #tpu.memory_space<vmem>>, %arg4: memref<1x128xf32, #tpu.memory_space<vmem>>, %arg5: memref<128x128xf32, #tpu.memory_space<vmem>>, %arg6: memref<1x128xf32, #tpu.memory_space<vmem>>, %arg7: memref<1x1x16x16x128xf32, #tpu.memory_space<vmem>>) attributes {dimension_semantics = [#tpu.dimension_semantics<parallel>, #tpu.dimension_semantics<arbitrary>], iteration_bounds = array<i64: 2, 8>, scalar_prefetch = 0 : i64, scratch_operands = 0 : i64, tpu.core_type = #tpu.core_type<tc>, window_params = [{transform_indices = @transform_0, window_bounds = array<i64: 1, 12, 18, 18, 128>}, {pipeline_mode = #tpu.pipeline_mode<synchronous>, transform_indices = @transform_1, window_bounds = array<i64: 27, 128>}, {pipeline_mode = #tpu.pipeline_mode<synchronous>, transform_indices = @transform_2, window_bounds = array<i64: 1, 128>}, {pipeline_mode = #tpu.pipeline_mode<synchronous>, transform_indices = @transform_3, window_bounds = array<i64: 128, 128>}, {pipeline_mode = #tpu.pipeline_mode<synchronous>, transform_indices = @transform_4, window_bounds = array<i64: 1, 128>}, {transform_indices = @transform_5, window_bounds = array<i64: 1, 1, 16, 16, 128>}]} {
    %c0 = arith.constant 0 : index
    %c0_0 = arith.constant 0 : index
    %0 = vector.load %arg4[%c0, %c0_0] : memref<1x128xf32, #tpu.memory_space<vmem>>, vector<1x128xf32>
    %1 = vector.shape_cast %0 : vector<1x128xf32> to vector<128xf32>
    %2 = vector.shape_cast %1 : vector<128xf32> to vector<1x1x128xf32>
    %3 = vector.broadcast %2 : vector<1x1x128xf32> to vector<16x16x128xf32>
    %c0_i32 = arith.constant 0 : i32
    %4 = arith.addi %arg1, %c0_i32 : i32
    %c0_1 = arith.constant 0 : index
    %5 = arith.index_cast %4 : i32 to index
    %c0_2 = arith.constant 0 : index
    %c0_3 = arith.constant 0 : index
    %c0_4 = arith.constant 0 : index
    %6 = vector.load %arg2[%c0_1, %5, %c0_2, %c0_3, %c0_4] : memref<1x12x18x18x128xf32, #tpu.memory_space<vmem>>, vector<1x1x18x18x128xf32>
    %7 = vector.shape_cast %6 : vector<1x1x18x18x128xf32> to vector<1x18x18x128xf32>
    %8 = vector.extract_strided_slice %7 {offsets = [0, 0, 0, 0], sizes = [1, 16, 18, 128], strides = [1, 1, 1, 1]} : vector<1x18x18x128xf32> to vector<1x16x18x128xf32>
    %9 = vector.shape_cast %8 : vector<1x16x18x128xf32> to vector<16x18x128xf32>
    %c0_5 = arith.constant 0 : index
    %c0_6 = arith.constant 0 : index
    %10 = vector.load %arg3[%c0_5, %c0_6] : memref<27x128xf32, #tpu.memory_space<vmem>>, vector<1x128xf32>
    %11 = vector.shape_cast %10 : vector<1x128xf32> to vector<128xf32>
    %12 = vector.extract_strided_slice %9 {offsets = [0, 0, 0], sizes = [16, 16, 128], strides = [1, 1, 1]} : vector<16x18x128xf32> to vector<16x16x128xf32>
    %13 = vector.shape_cast %11 : vector<128xf32> to vector<1x1x128xf32>
    %14 = vector.broadcast %13 : vector<1x1x128xf32> to vector<16x16x128xf32>
    %15 = arith.mulf %12, %14 : vector<16x16x128xf32>
    %16 = arith.addf %3, %15 : vector<16x16x128xf32>
    %c1 = arith.constant 1 : index
    %c0_7 = arith.constant 0 : index
    %17 = vector.load %arg3[%c1, %c0_7] : memref<27x128xf32, #tpu.memory_space<vmem>>, vector<1x128xf32>
    %18 = vector.shape_cast %17 : vector<1x128xf32> to vector<128xf32>
    %19 = vector.extract_strided_slice %9 {offsets = [0, 1, 0], sizes = [16, 16, 128], strides = [1, 1, 1]} : vector<16x18x128xf32> to vector<16x16x128xf32>
    %20 = vector.shape_cast %18 : vector<128xf32> to vector<1x1x128xf32>
    %21 = vector.broadcast %20 : vector<1x1x128xf32> to vector<16x16x128xf32>
    %22 = arith.mulf %19, %21 : vector<16x16x128xf32>
    %23 = arith.addf %16, %22 : vector<16x16x128xf32>
    %c2 = arith.constant 2 : index
    %c0_8 = arith.constant 0 : index
    %24 = vector.load %arg3[%c2, %c0_8] : memref<27x128xf32, #tpu.memory_space<vmem>>, vector<1x128xf32>
    %25 = vector.shape_cast %24 : vector<1x128xf32> to vector<128xf32>
    %26 = vector.extract_strided_slice %9 {offsets = [0, 2, 0], sizes = [16, 16, 128], strides = [1, 1, 1]} : vector<16x18x128xf32> to vector<16x16x128xf32>
    %27 = vector.shape_cast %25 : vector<128xf32> to vector<1x1x128xf32>
    %28 = vector.broadcast %27 : vector<1x1x128xf32> to vector<16x16x128xf32>
    %29 = arith.mulf %26, %28 : vector<16x16x128xf32>
    %30 = arith.addf %23, %29 : vector<16x16x128xf32>
    %31 = vector.extract_strided_slice %7 {offsets = [0, 1, 0, 0], sizes = [1, 16, 18, 128], strides = [1, 1, 1, 1]} : vector<1x18x18x128xf32> to vector<1x16x18x128xf32>
    %32 = vector.shape_cast %31 : vector<1x16x18x128xf32> to vector<16x18x128xf32>
    %c3 = arith.constant 3 : index
    %c0_9 = arith.constant 0 : index
    %33 = vector.load %arg3[%c3, %c0_9] : memref<27x128xf32, #tpu.memory_space<vmem>>, vector<1x128xf32>
    %34 = vector.shape_cast %33 : vector<1x128xf32> to vector<128xf32>
    %35 = vector.extract_strided_slice %32 {offsets = [0, 0, 0], sizes = [16, 16, 128], strides = [1, 1, 1]} : vector<16x18x128xf32> to vector<16x16x128xf32>
    %36 = vector.shape_cast %34 : vector<128xf32> to vector<1x1x128xf32>
    %37 = vector.broadcast %36 : vector<1x1x128xf32> to vector<16x16x128xf32>
    %38 = arith.mulf %35, %37 : vector<16x16x128xf32>
    %39 = arith.addf %30, %38 : vector<16x16x128xf32>
    %c4 = arith.constant 4 : index
    %c0_10 = arith.constant 0 : index
    %40 = vector.load %arg3[%c4, %c0_10] : memref<27x128xf32, #tpu.memory_space<vmem>>, vector<1x128xf32>
    %41 = vector.shape_cast %40 : vector<1x128xf32> to vector<128xf32>
    %42 = vector.extract_strided_slice %32 {offsets = [0, 1, 0], sizes = [16, 16, 128], strides = [1, 1, 1]} : vector<16x18x128xf32> to vector<16x16x128xf32>
    %43 = vector.shape_cast %41 : vector<128xf32> to vector<1x1x128xf32>
    %44 = vector.broadcast %43 : vector<1x1x128xf32> to vector<16x16x128xf32>
    %45 = arith.mulf %42, %44 : vector<16x16x128xf32>
    %46 = arith.addf %39, %45 : vector<16x16x128xf32>
    %c5 = arith.constant 5 : index
    %c0_11 = arith.constant 0 : index
    %47 = vector.load %arg3[%c5, %c0_11] : memref<27x128xf32, #tpu.memory_space<vmem>>, vector<1x128xf32>
    %48 = vector.shape_cast %47 : vector<1x128xf32> to vector<128xf32>
    %49 = vector.extract_strided_slice %32 {offsets = [0, 2, 0], sizes = [16, 16, 128], strides = [1, 1, 1]} : vector<16x18x128xf32> to vector<16x16x128xf32>
    %50 = vector.shape_cast %48 : vector<128xf32> to vector<1x1x128xf32>
    %51 = vector.broadcast %50 : vector<1x1x128xf32> to vector<16x16x128xf32>
    %52 = arith.mulf %49, %51 : vector<16x16x128xf32>
    %53 = arith.addf %46, %52 : vector<16x16x128xf32>
    %54 = vector.extract_strided_slice %7 {offsets = [0, 2, 0, 0], sizes = [1, 16, 18, 128], strides = [1, 1, 1, 1]} : vector<1x18x18x128xf32> to vector<1x16x18x128xf32>
    %55 = vector.shape_cast %54 : vector<1x16x18x128xf32> to vector<16x18x128xf32>
    %c6 = arith.constant 6 : index
    %c0_12 = arith.constant 0 : index
    %56 = vector.load %arg3[%c6, %c0_12] : memref<27x128xf32, #tpu.memory_space<vmem>>, vector<1x128xf32>
    %57 = vector.shape_cast %56 : vector<1x128xf32> to vector<128xf32>
    %58 = vector.extract_strided_slice %55 {offsets = [0, 0, 0], sizes = [16, 16, 128], strides = [1, 1, 1]} : vector<16x18x128xf32> to vector<16x16x128xf32>
    %59 = vector.shape_cast %57 : vector<128xf32> to vector<1x1x128xf32>
    %60 = vector.broadcast %59 : vector<1x1x128xf32> to vector<16x16x128xf32>
    %61 = arith.mulf %58, %60 : vector<16x16x128xf32>
    %62 = arith.addf %53, %61 : vector<16x16x128xf32>
    %c7 = arith.constant 7 : index
    %c0_13 = arith.constant 0 : index
    %63 = vector.load %arg3[%c7, %c0_13] : memref<27x128xf32, #tpu.memory_space<vmem>>, vector<1x128xf32>
    %64 = vector.shape_cast %63 : vector<1x128xf32> to vector<128xf32>
    %65 = vector.extract_strided_slice %55 {offsets = [0, 1, 0], sizes = [16, 16, 128], strides = [1, 1, 1]} : vector<16x18x128xf32> to vector<16x16x128xf32>
    %66 = vector.shape_cast %64 : vector<128xf32> to vector<1x1x128xf32>
    %67 = vector.broadcast %66 : vector<1x1x128xf32> to vector<16x16x128xf32>
    %68 = arith.mulf %65, %67 : vector<16x16x128xf32>
    %69 = arith.addf %62, %68 : vector<16x16x128xf32>
    %c8 = arith.constant 8 : index
    %c0_14 = arith.constant 0 : index
    %70 = vector.load %arg3[%c8, %c0_14] : memref<27x128xf32, #tpu.memory_space<vmem>>, vector<1x128xf32>
    %71 = vector.shape_cast %70 : vector<1x128xf32> to vector<128xf32>
    %72 = vector.extract_strided_slice %55 {offsets = [0, 2, 0], sizes = [16, 16, 128], strides = [1, 1, 1]} : vector<16x18x128xf32> to vector<16x16x128xf32>
    %73 = vector.shape_cast %71 : vector<128xf32> to vector<1x1x128xf32>
    %74 = vector.broadcast %73 : vector<1x1x128xf32> to vector<16x16x128xf32>
    %75 = arith.mulf %72, %74 : vector<16x16x128xf32>
    %76 = arith.addf %69, %75 : vector<16x16x128xf32>
    %c2_i32 = arith.constant 2 : i32
    %77 = arith.addi %arg1, %c2_i32 : i32
    %c0_15 = arith.constant 0 : index
    %78 = arith.index_cast %77 : i32 to index
    %c0_16 = arith.constant 0 : index
    %c0_17 = arith.constant 0 : index
    %c0_18 = arith.constant 0 : index
    %79 = vector.load %arg2[%c0_15, %78, %c0_16, %c0_17, %c0_18] : memref<1x12x18x18x128xf32, #tpu.memory_space<vmem>>, vector<1x1x18x18x128xf32>
    %80 = vector.shape_cast %79 : vector<1x1x18x18x128xf32> to vector<1x18x18x128xf32>
    %81 = vector.extract_strided_slice %80 {offsets = [0, 1, 1, 0], sizes = [1, 16, 16, 128], strides = [1, 1, 1, 1]} : vector<1x18x18x128xf32> to vector<1x16x16x128xf32>
    %82 = vector.shape_cast %81 : vector<1x16x16x128xf32> to vector<16x16x128xf32>
    %83 = vector.extract_strided_slice %80 {offsets = [0, 0, 0, 0], sizes = [1, 16, 18, 128], strides = [1, 1, 1, 1]} : vector<1x18x18x128xf32> to vector<1x16x18x128xf32>
    %84 = vector.shape_cast %83 : vector<1x16x18x128xf32> to vector<16x18x128xf32>
    %c9 = arith.constant 9 : index
    %c0_19 = arith.constant 0 : index
    %85 = vector.load %arg3[%c9, %c0_19] : memref<27x128xf32, #tpu.memory_space<vmem>>, vector<1x128xf32>
    %86 = vector.shape_cast %85 : vector<1x128xf32> to vector<128xf32>
    %87 = vector.extract_strided_slice %84 {offsets = [0, 0, 0], sizes = [16, 16, 128], strides = [1, 1, 1]} : vector<16x18x128xf32> to vector<16x16x128xf32>
    %88 = vector.shape_cast %86 : vector<128xf32> to vector<1x1x128xf32>
    %89 = vector.broadcast %88 : vector<1x1x128xf32> to vector<16x16x128xf32>
    %90 = arith.mulf %87, %89 : vector<16x16x128xf32>
    %91 = arith.addf %76, %90 : vector<16x16x128xf32>
    %c10 = arith.constant 10 : index
    %c0_20 = arith.constant 0 : index
    %92 = vector.load %arg3[%c10, %c0_20] : memref<27x128xf32, #tpu.memory_space<vmem>>, vector<1x128xf32>
    %93 = vector.shape_cast %92 : vector<1x128xf32> to vector<128xf32>
    %94 = vector.extract_strided_slice %84 {offsets = [0, 1, 0], sizes = [16, 16, 128], strides = [1, 1, 1]} : vector<16x18x128xf32> to vector<16x16x128xf32>
    %95 = vector.shape_cast %93 : vector<128xf32> to vector<1x1x128xf32>
    %96 = vector.broadcast %95 : vector<1x1x128xf32> to vector<16x16x128xf32>
    %97 = arith.mulf %94, %96 : vector<16x16x128xf32>
    %98 = arith.addf %91, %97 : vector<16x16x128xf32>
    %c11 = arith.constant 11 : index
    %c0_21 = arith.constant 0 : index
    %99 = vector.load %arg3[%c11, %c0_21] : memref<27x128xf32, #tpu.memory_space<vmem>>, vector<1x128xf32>
    %100 = vector.shape_cast %99 : vector<1x128xf32> to vector<128xf32>
    %101 = vector.extract_strided_slice %84 {offsets = [0, 2, 0], sizes = [16, 16, 128], strides = [1, 1, 1]} : vector<16x18x128xf32> to vector<16x16x128xf32>
    %102 = vector.shape_cast %100 : vector<128xf32> to vector<1x1x128xf32>
    %103 = vector.broadcast %102 : vector<1x1x128xf32> to vector<16x16x128xf32>
    %104 = arith.mulf %101, %103 : vector<16x16x128xf32>
    %105 = arith.addf %98, %104 : vector<16x16x128xf32>
    %106 = vector.extract_strided_slice %80 {offsets = [0, 1, 0, 0], sizes = [1, 16, 18, 128], strides = [1, 1, 1, 1]} : vector<1x18x18x128xf32> to vector<1x16x18x128xf32>
    %107 = vector.shape_cast %106 : vector<1x16x18x128xf32> to vector<16x18x128xf32>
    %c12 = arith.constant 12 : index
    %c0_22 = arith.constant 0 : index
    %108 = vector.load %arg3[%c12, %c0_22] : memref<27x128xf32, #tpu.memory_space<vmem>>, vector<1x128xf32>
    %109 = vector.shape_cast %108 : vector<1x128xf32> to vector<128xf32>
    %110 = vector.extract_strided_slice %107 {offsets = [0, 0, 0], sizes = [16, 16, 128], strides = [1, 1, 1]} : vector<16x18x128xf32> to vector<16x16x128xf32>
    %111 = vector.shape_cast %109 : vector<128xf32> to vector<1x1x128xf32>
    %112 = vector.broadcast %111 : vector<1x1x128xf32> to vector<16x16x128xf32>
    %113 = arith.mulf %110, %112 : vector<16x16x128xf32>
    %114 = arith.addf %105, %113 : vector<16x16x128xf32>
    %c13 = arith.constant 13 : index
    %c0_23 = arith.constant 0 : index
    %115 = vector.load %arg3[%c13, %c0_23] : memref<27x128xf32, #tpu.memory_space<vmem>>, vector<1x128xf32>
    %116 = vector.shape_cast %115 : vector<1x128xf32> to vector<128xf32>
    %117 = vector.extract_strided_slice %107 {offsets = [0, 1, 0], sizes = [16, 16, 128], strides = [1, 1, 1]} : vector<16x18x128xf32> to vector<16x16x128xf32>
    %118 = vector.shape_cast %116 : vector<128xf32> to vector<1x1x128xf32>
    %119 = vector.broadcast %118 : vector<1x1x128xf32> to vector<16x16x128xf32>
    %120 = arith.mulf %117, %119 : vector<16x16x128xf32>
    %121 = arith.addf %114, %120 : vector<16x16x128xf32>
    %c14 = arith.constant 14 : index
    %c0_24 = arith.constant 0 : index
    %122 = vector.load %arg3[%c14, %c0_24] : memref<27x128xf32, #tpu.memory_space<vmem>>, vector<1x128xf32>
    %123 = vector.shape_cast %122 : vector<1x128xf32> to vector<128xf32>
    %124 = vector.extract_strided_slice %107 {offsets = [0, 2, 0], sizes = [16, 16, 128], strides = [1, 1, 1]} : vector<16x18x128xf32> to vector<16x16x128xf32>
    %125 = vector.shape_cast %123 : vector<128xf32> to vector<1x1x128xf32>
    %126 = vector.broadcast %125 : vector<1x1x128xf32> to vector<16x16x128xf32>
    %127 = arith.mulf %124, %126 : vector<16x16x128xf32>
    %128 = arith.addf %121, %127 : vector<16x16x128xf32>
    %129 = vector.extract_strided_slice %80 {offsets = [0, 2, 0, 0], sizes = [1, 16, 18, 128], strides = [1, 1, 1, 1]} : vector<1x18x18x128xf32> to vector<1x16x18x128xf32>
    %130 = vector.shape_cast %129 : vector<1x16x18x128xf32> to vector<16x18x128xf32>
    %c15 = arith.constant 15 : index
    %c0_25 = arith.constant 0 : index
    %131 = vector.load %arg3[%c15, %c0_25] : memref<27x128xf32, #tpu.memory_space<vmem>>, vector<1x128xf32>
    %132 = vector.shape_cast %131 : vector<1x128xf32> to vector<128xf32>
    %133 = vector.extract_strided_slice %130 {offsets = [0, 0, 0], sizes = [16, 16, 128], strides = [1, 1, 1]} : vector<16x18x128xf32> to vector<16x16x128xf32>
    %134 = vector.shape_cast %132 : vector<128xf32> to vector<1x1x128xf32>
    %135 = vector.broadcast %134 : vector<1x1x128xf32> to vector<16x16x128xf32>
    %136 = arith.mulf %133, %135 : vector<16x16x128xf32>
    %137 = arith.addf %128, %136 : vector<16x16x128xf32>
    %c16 = arith.constant 16 : index
    %c0_26 = arith.constant 0 : index
    %138 = vector.load %arg3[%c16, %c0_26] : memref<27x128xf32, #tpu.memory_space<vmem>>, vector<1x128xf32>
    %139 = vector.shape_cast %138 : vector<1x128xf32> to vector<128xf32>
    %140 = vector.extract_strided_slice %130 {offsets = [0, 1, 0], sizes = [16, 16, 128], strides = [1, 1, 1]} : vector<16x18x128xf32> to vector<16x16x128xf32>
    %141 = vector.shape_cast %139 : vector<128xf32> to vector<1x1x128xf32>
    %142 = vector.broadcast %141 : vector<1x1x128xf32> to vector<16x16x128xf32>
    %143 = arith.mulf %140, %142 : vector<16x16x128xf32>
    %144 = arith.addf %137, %143 : vector<16x16x128xf32>
    %c17 = arith.constant 17 : index
    %c0_27 = arith.constant 0 : index
    %145 = vector.load %arg3[%c17, %c0_27] : memref<27x128xf32, #tpu.memory_space<vmem>>, vector<1x128xf32>
    %146 = vector.shape_cast %145 : vector<1x128xf32> to vector<128xf32>
    %147 = vector.extract_strided_slice %130 {offsets = [0, 2, 0], sizes = [16, 16, 128], strides = [1, 1, 1]} : vector<16x18x128xf32> to vector<16x16x128xf32>
    %148 = vector.shape_cast %146 : vector<128xf32> to vector<1x1x128xf32>
    %149 = vector.broadcast %148 : vector<1x1x128xf32> to vector<16x16x128xf32>
    %150 = arith.mulf %147, %149 : vector<16x16x128xf32>
    %151 = arith.addf %144, %150 : vector<16x16x128xf32>
    %c4_i32 = arith.constant 4 : i32
    %152 = arith.addi %arg1, %c4_i32 : i32
    %c0_28 = arith.constant 0 : index
    %153 = arith.index_cast %152 : i32 to index
    %c0_29 = arith.constant 0 : index
    %c0_30 = arith.constant 0 : index
    %c0_31 = arith.constant 0 : index
    %154 = vector.load %arg2[%c0_28, %153, %c0_29, %c0_30, %c0_31] : memref<1x12x18x18x128xf32, #tpu.memory_space<vmem>>, vector<1x1x18x18x128xf32>
    %155 = vector.shape_cast %154 : vector<1x1x18x18x128xf32> to vector<1x18x18x128xf32>
    %156 = vector.extract_strided_slice %155 {offsets = [0, 0, 0, 0], sizes = [1, 16, 18, 128], strides = [1, 1, 1, 1]} : vector<1x18x18x128xf32> to vector<1x16x18x128xf32>
    %157 = vector.shape_cast %156 : vector<1x16x18x128xf32> to vector<16x18x128xf32>
    %c18 = arith.constant 18 : index
    %c0_32 = arith.constant 0 : index
    %158 = vector.load %arg3[%c18, %c0_32] : memref<27x128xf32, #tpu.memory_space<vmem>>, vector<1x128xf32>
    %159 = vector.shape_cast %158 : vector<1x128xf32> to vector<128xf32>
    %160 = vector.extract_strided_slice %157 {offsets = [0, 0, 0], sizes = [16, 16, 128], strides = [1, 1, 1]} : vector<16x18x128xf32> to vector<16x16x128xf32>
    %161 = vector.shape_cast %159 : vector<128xf32> to vector<1x1x128xf32>
    %162 = vector.broadcast %161 : vector<1x1x128xf32> to vector<16x16x128xf32>
    %163 = arith.mulf %160, %162 : vector<16x16x128xf32>
    %164 = arith.addf %151, %163 : vector<16x16x128xf32>
    %c19 = arith.constant 19 : index
    %c0_33 = arith.constant 0 : index
    %165 = vector.load %arg3[%c19, %c0_33] : memref<27x128xf32, #tpu.memory_space<vmem>>, vector<1x128xf32>
    %166 = vector.shape_cast %165 : vector<1x128xf32> to vector<128xf32>
    %167 = vector.extract_strided_slice %157 {offsets = [0, 1, 0], sizes = [16, 16, 128], strides = [1, 1, 1]} : vector<16x18x128xf32> to vector<16x16x128xf32>
    %168 = vector.shape_cast %166 : vector<128xf32> to vector<1x1x128xf32>
    %169 = vector.broadcast %168 : vector<1x1x128xf32> to vector<16x16x128xf32>
    %170 = arith.mulf %167, %169 : vector<16x16x128xf32>
    %171 = arith.addf %164, %170 : vector<16x16x128xf32>
    %c20 = arith.constant 20 : index
    %c0_34 = arith.constant 0 : index
    %172 = vector.load %arg3[%c20, %c0_34] : memref<27x128xf32, #tpu.memory_space<vmem>>, vector<1x128xf32>
    %173 = vector.shape_cast %172 : vector<1x128xf32> to vector<128xf32>
    %174 = vector.extract_strided_slice %157 {offsets = [0, 2, 0], sizes = [16, 16, 128], strides = [1, 1, 1]} : vector<16x18x128xf32> to vector<16x16x128xf32>
    %175 = vector.shape_cast %173 : vector<128xf32> to vector<1x1x128xf32>
    %176 = vector.broadcast %175 : vector<1x1x128xf32> to vector<16x16x128xf32>
    %177 = arith.mulf %174, %176 : vector<16x16x128xf32>
    %178 = arith.addf %171, %177 : vector<16x16x128xf32>
    %179 = vector.extract_strided_slice %155 {offsets = [0, 1, 0, 0], sizes = [1, 16, 18, 128], strides = [1, 1, 1, 1]} : vector<1x18x18x128xf32> to vector<1x16x18x128xf32>
    %180 = vector.shape_cast %179 : vector<1x16x18x128xf32> to vector<16x18x128xf32>
    %c21 = arith.constant 21 : index
    %c0_35 = arith.constant 0 : index
    %181 = vector.load %arg3[%c21, %c0_35] : memref<27x128xf32, #tpu.memory_space<vmem>>, vector<1x128xf32>
    %182 = vector.shape_cast %181 : vector<1x128xf32> to vector<128xf32>
    %183 = vector.extract_strided_slice %180 {offsets = [0, 0, 0], sizes = [16, 16, 128], strides = [1, 1, 1]} : vector<16x18x128xf32> to vector<16x16x128xf32>
    %184 = vector.shape_cast %182 : vector<128xf32> to vector<1x1x128xf32>
    %185 = vector.broadcast %184 : vector<1x1x128xf32> to vector<16x16x128xf32>
    %186 = arith.mulf %183, %185 : vector<16x16x128xf32>
    %187 = arith.addf %178, %186 : vector<16x16x128xf32>
    %c22 = arith.constant 22 : index
    %c0_36 = arith.constant 0 : index
    %188 = vector.load %arg3[%c22, %c0_36] : memref<27x128xf32, #tpu.memory_space<vmem>>, vector<1x128xf32>
    %189 = vector.shape_cast %188 : vector<1x128xf32> to vector<128xf32>
    %190 = vector.extract_strided_slice %180 {offsets = [0, 1, 0], sizes = [16, 16, 128], strides = [1, 1, 1]} : vector<16x18x128xf32> to vector<16x16x128xf32>
    %191 = vector.shape_cast %189 : vector<128xf32> to vector<1x1x128xf32>
    %192 = vector.broadcast %191 : vector<1x1x128xf32> to vector<16x16x128xf32>
    %193 = arith.mulf %190, %192 : vector<16x16x128xf32>
    %194 = arith.addf %187, %193 : vector<16x16x128xf32>
    %c23 = arith.constant 23 : index
    %c0_37 = arith.constant 0 : index
    %195 = vector.load %arg3[%c23, %c0_37] : memref<27x128xf32, #tpu.memory_space<vmem>>, vector<1x128xf32>
    %196 = vector.shape_cast %195 : vector<1x128xf32> to vector<128xf32>
    %197 = vector.extract_strided_slice %180 {offsets = [0, 2, 0], sizes = [16, 16, 128], strides = [1, 1, 1]} : vector<16x18x128xf32> to vector<16x16x128xf32>
    %198 = vector.shape_cast %196 : vector<128xf32> to vector<1x1x128xf32>
    %199 = vector.broadcast %198 : vector<1x1x128xf32> to vector<16x16x128xf32>
    %200 = arith.mulf %197, %199 : vector<16x16x128xf32>
    %201 = arith.addf %194, %200 : vector<16x16x128xf32>
    %202 = vector.extract_strided_slice %155 {offsets = [0, 2, 0, 0], sizes = [1, 16, 18, 128], strides = [1, 1, 1, 1]} : vector<1x18x18x128xf32> to vector<1x16x18x128xf32>
    %203 = vector.shape_cast %202 : vector<1x16x18x128xf32> to vector<16x18x128xf32>
    %c24 = arith.constant 24 : index
    %c0_38 = arith.constant 0 : index
    %204 = vector.load %arg3[%c24, %c0_38] : memref<27x128xf32, #tpu.memory_space<vmem>>, vector<1x128xf32>
    %205 = vector.shape_cast %204 : vector<1x128xf32> to vector<128xf32>
    %206 = vector.extract_strided_slice %203 {offsets = [0, 0, 0], sizes = [16, 16, 128], strides = [1, 1, 1]} : vector<16x18x128xf32> to vector<16x16x128xf32>
    %207 = vector.shape_cast %205 : vector<128xf32> to vector<1x1x128xf32>
    %208 = vector.broadcast %207 : vector<1x1x128xf32> to vector<16x16x128xf32>
    %209 = arith.mulf %206, %208 : vector<16x16x128xf32>
    %210 = arith.addf %201, %209 : vector<16x16x128xf32>
    %c25 = arith.constant 25 : index
    %c0_39 = arith.constant 0 : index
    %211 = vector.load %arg3[%c25, %c0_39] : memref<27x128xf32, #tpu.memory_space<vmem>>, vector<1x128xf32>
    %212 = vector.shape_cast %211 : vector<1x128xf32> to vector<128xf32>
    %213 = vector.extract_strided_slice %203 {offsets = [0, 1, 0], sizes = [16, 16, 128], strides = [1, 1, 1]} : vector<16x18x128xf32> to vector<16x16x128xf32>
    %214 = vector.shape_cast %212 : vector<128xf32> to vector<1x1x128xf32>
    %215 = vector.broadcast %214 : vector<1x1x128xf32> to vector<16x16x128xf32>
    %216 = arith.mulf %213, %215 : vector<16x16x128xf32>
    %217 = arith.addf %210, %216 : vector<16x16x128xf32>
    %c26 = arith.constant 26 : index
    %c0_40 = arith.constant 0 : index
    %218 = vector.load %arg3[%c26, %c0_40] : memref<27x128xf32, #tpu.memory_space<vmem>>, vector<1x128xf32>
    %219 = vector.shape_cast %218 : vector<1x128xf32> to vector<128xf32>
    %220 = vector.extract_strided_slice %203 {offsets = [0, 2, 0], sizes = [16, 16, 128], strides = [1, 1, 1]} : vector<16x18x128xf32> to vector<16x16x128xf32>
    %221 = vector.shape_cast %219 : vector<128xf32> to vector<1x1x128xf32>
    %222 = vector.broadcast %221 : vector<1x1x128xf32> to vector<16x16x128xf32>
    %223 = arith.mulf %220, %222 : vector<16x16x128xf32>
    %224 = arith.addf %217, %223 : vector<16x16x128xf32>
    %cst = arith.constant 0.000000e+00 : f32
    %225 = vector.broadcast %cst : f32 to vector<16x16x128xf32>
    %226 = arith.maximumf %224, %225 : vector<16x16x128xf32>
    %227 = vector.shape_cast %226 : vector<16x16x128xf32> to vector<256x128xf32>
    %c0_41 = arith.constant 0 : index
    %c0_42 = arith.constant 0 : index
    %228 = vector.load %arg5[%c0_41, %c0_42] : memref<128x128xf32, #tpu.memory_space<vmem>>, vector<128x128xf32>
    %cst_43 = arith.constant dense<0.000000e+00> : vector<256x128xf32>
    %229 = tpu.matmul %227, %228, %cst_43 {dimension_numbers = #tpu.dot_dimension_numbers<[1], [0], [0], [1], [0, 0, 1, 1], [], []>} : vector<256x128xf32>, vector<128x128xf32>, vector<256x128xf32> -> vector<256x128xf32>
    %c0_44 = arith.constant 0 : index
    %c0_45 = arith.constant 0 : index
    %230 = vector.load %arg6[%c0_44, %c0_45] : memref<1x128xf32, #tpu.memory_space<vmem>>, vector<1x128xf32>
    %231 = vector.broadcast %230 : vector<1x128xf32> to vector<256x128xf32>
    %232 = arith.addf %229, %231 : vector<256x128xf32>
    %233 = vector.shape_cast %232 : vector<256x128xf32> to vector<16x16x128xf32>
    %234 = arith.addf %233, %82 : vector<16x16x128xf32>
    %c0_46 = arith.constant 0 : index
    %c0_47 = arith.constant 0 : index
    %c0_48 = arith.constant 0 : index
    %c0_49 = arith.constant 0 : index
    %c0_50 = arith.constant 0 : index
    %235 = vector.load %arg7[%c0_46, %c0_47, %c0_48, %c0_49, %c0_50] : memref<1x1x16x16x128xf32, #tpu.memory_space<vmem>>, vector<1x1x16x16x128xf32>
    %236 = vector.shape_cast %235 : vector<1x1x16x16x128xf32> to vector<16x16x128xf32>
    %237 = vector.shape_cast %234 : vector<16x16x128xf32> to vector<1x1x16x16x128xf32>
    tpu.vector_store %arg7[%c0_46, %c0_47, %c0_48, %c0_49, %c0_50], %237 {strides = array<i32>} : memref<1x1x16x16x128xf32, #tpu.memory_space<vmem>>, vector<1x1x16x16x128xf32>,
    return
  }
  func.func @transform_0(%arg0: i32, %arg1: i32) -> (i32, i32, i32, i32, i32) {
    %c0_i32 = arith.constant 0 : i32
    %c0_i32_0 = arith.constant 0 : i32
    %c0_i32_1 = arith.constant 0 : i32
    %c0_i32_2 = arith.constant 0 : i32
    %c0_i32_3 = arith.constant 0 : i32
    return %arg0, %c0_i32, %c0_i32_0, %c0_i32_1, %c0_i32_2 : i32, i32, i32, i32, i32
  }
  func.func @transform_1(%arg0: i32, %arg1: i32) -> (i32, i32) {
    %c0_i32 = arith.constant 0 : i32
    %c0_i32_0 = arith.constant 0 : i32
    %c0_i32_1 = arith.constant 0 : i32
    return %c0_i32, %c0_i32_0 : i32, i32
  }
  func.func @transform_2(%arg0: i32, %arg1: i32) -> (i32, i32) {
    %c0_i32 = arith.constant 0 : i32
    %c0_i32_0 = arith.constant 0 : i32
    %c0_i32_1 = arith.constant 0 : i32
    return %c0_i32, %c0_i32_0 : i32, i32
  }
  func.func @transform_3(%arg0: i32, %arg1: i32) -> (i32, i32) {
    %c0_i32 = arith.constant 0 : i32
    %c0_i32_0 = arith.constant 0 : i32
    %c0_i32_1 = arith.constant 0 : i32
    return %c0_i32, %c0_i32_0 : i32, i32
  }
  func.func @transform_4(%arg0: i32, %arg1: i32) -> (i32, i32) {
    %c0_i32 = arith.constant 0 : i32
    %c0_i32_0 = arith.constant 0 : i32
    %c0_i32_1 = arith.constant 0 : i32
    return %c0_i32, %c0_i32_0 : i32, i32
  }
  func.func @transform_5(%arg0: i32, %arg1: i32) -> (i32, i32, i32, i32, i32) {
    %c0_i32 = arith.constant 0 : i32
    %c0_i32_0 = arith.constant 0 : i32
    %c0_i32_1 = arith.constant 0 : i32
    %c0_i32_2 = arith.constant 0 : i32
    return %arg0, %arg1, %c0_i32, %c0_i32_0, %c0_i32_1 : i32, i32, i32, i32, i32
  }
}

</mosaic_0001>

<llo_original>
// kernel: dilated_residual_3d_forward.1
$region0: #{dilated_residual_3d_forward.1}
  #allocation0 [shape = 'u32[]', space=smem, size = 0x4, offset = 0x4, fixed_abs, tag = 'smem constant byte address 0x4 - core index']
  #allocation1 [shape = 'u32[144,128]{1,0:T(1,128)}', space=vmem, size = 0x12000, scoped, tag = 'internal scratch']
  %s0 = inlined_call_operand.vmem [shape: f32[2,12,18,18,128], index: 0, kind: input, shape index: {}]
  %s1 = inlined_call_operand.vmem [shape: f32[27,128], index: 1, kind: input, shape index: {}]
  %s2 = inlined_call_operand.vmem [shape: f32[1,128], index: 2, kind: input, shape index: {}]
  %s3 = inlined_call_operand.vmem [shape: f32[128,128], index: 3, kind: input, shape index: {}]
  %s4 = inlined_call_operand.vmem [shape: f32[1,128], index: 4, kind: input, shape index: {}]
  %s5 = inlined_call_operand.hbm [shape: f32[2,8,16,16,128], index: 5, kind: output, shape index: {}]
  %s6 = sld [smem:[#allocation0]]
  $region53: #{dilated_residual_3d_forward.1} parent=0
    _
  %s8 = ssub.s32 1, %s6
  %s9 = scalar_select 0, %s8, %s6
  $region1: #{dilated_residual_3d_forward.1} parent=0
    #allocation2 [shape = 'u8[262144]{0}', space=vmem, size = 0x40000, scoped, tag = 'output window, operand 0']
    #allocation3 [shape = 's32[2]{0}', space=sflag, size = 0x8, scoped, tag = 'scoped memory for dilated_residual_3d_forward.1']
    %10 = vsyncpa [#allocation3], 0
    %s11 = scalar_lea.sflag [#allocation3], 1
    %12 = vsyncpa %s11, 0
    loop: start=0, step=1, limit=18
    $region2: #{dilated_residual_3d_forward.1} parent=1 // loop_pre_header
      _
    $region3: #{dilated_residual_3d_forward.1} parent=1 // loop_header
      %s14 = sphi 0, %s18
      %p15 = scmp.ge.s32.totalorder %s14, 18
      %s21 = sphi 0, %s33
      %s22 = sphi 0, %s29
      %s23 = sphi 0, %s21
      %s24 = sphi 0, %s22
      %s25 = sphi 0, %s23
      %s26 = sphi 0, %s24
      %s36 = sphi 0, %s38
      %s39 = sphi 0, %s36
      %s40 = sphi 0, %s39
      %s56 = sphi 0, %s40
      %s60 = sphi 0, %s60
      %s62 = sphi 0, %s60
      %s63 = sphi 0, %s62
      %s77 = sphi 0, %s63
      %s81 = sphi 0, %s81
      %s83 = sphi 0, %s81
      %s84 = sphi 0, %s83
      %s98 = sphi 0, %s84
      %s102 = sphi 0, %s102
      %s104 = sphi 0, %s102
      %s105 = sphi 0, %s104
      %s119 = sphi 0, %s105
      %s123 = sphi 0, %s123
      %s125 = sphi 0, %s123
      %s126 = sphi 0, %s125
      %s140 = sphi 0, %s126
      %s148 = sphi 0, %s150
      %s151 = sphi 0, %s148
      %s152 = sphi 0, %s151
      %s168 = sphi 0, %s152
    $region4: #{dilated_residual_3d_forward.1} parent=1 // loop_header_branch
      %17 = sbr.rel (%p15) target = $region8
    $region5: #{dilated_residual_3d_forward.1} parent=1 // loop_body
      %s19 = ssub.s32 %s14, 1
      %s20 = ssub.s32 %s14, 2
      %s27 = sadd.s32 1, %s22
      %p28 = scmp.ge.s32.totalorder %s27, 8
      %s29 = scalar_select %p28, 0, %s27
      %s30 = sadd.s32 1, %s21
      %s31 = scalar_select %p28, %s30, %s21
      %p32 = scmp.ge.s32.totalorder %s31, 2
      %s33 = scalar_select %p32, 0, %s31
      %s34 = ssub.s32 %s21, %s33
      %p35 = scmp.eq.s32.totalorder %s34, 0
      %s37 = sadd.s32 %s36, 1
      %s38 = scalar_select %p35, %s36, %s37
      %p41 = pneg %p35
      %p42 = scmp.eq.s32.totalorder %s14, 15
      %p43 = por %p41, %p42
      %p44 = scmp.ne.s32.totalorder %s36, %s39
      %p45 = scmp.eq.s32.totalorder %s14, 0
      %p46 = por %p44, %p45
      %p47 = scmp.ne.s32.totalorder %s36, %s39
      %p48 = scmp.eq.s32.totalorder %s19, 15
      %p49 = por %p47, %p48
      %p50 = scmp.ne.s32.totalorder %s39, %s40
      %p51 = scmp.eq.s32.totalorder %s19, 0
      %p52 = por %p50, %p51
      %p53 = scmp.ne.s32.totalorder %s39, %s40
      %p54 = scmp.eq.s32.totalorder %s20, 15
      %p55 = por %p53, %p54
      %p57 = scmp.ne.s32.totalorder %s40, %s56
      %p58 = scmp.eq.s32.totalorder %s20, 0
      %p59 = por %p57, %p58
      %s61 = sadd.s32 %s60, 1
      %p64 = scmp.eq.s32.totalorder %s14, 15
      %p65 = scmp.ne.s32.totalorder %s60, %s62
      %p66 = scmp.eq.s32.totalorder %s14, 0
      %p67 = por %p65, %p66
      %p68 = scmp.ne.s32.totalorder %s60, %s62
      %p69 = scmp.eq.s32.totalorder %s19, 15
      %p70 = por %p68, %p69
      %p71 = scmp.ne.s32.totalorder %s62, %s63
      %p72 = scmp.eq.s32.totalorder %s19, 0
      %p73 = por %p71, %p72
      %p74 = scmp.ne.s32.totalorder %s62, %s63
      %p75 = scmp.eq.s32.totalorder %s20, 15
      %p76 = por %p74, %p75
      %p78 = scmp.ne.s32.totalorder %s63, %s77
      %p79 = scmp.eq.s32.totalorder %s20, 0
      %p80 = por %p78, %p79
      %s82 = sadd.s32 %s81, 1
      %p85 = scmp.eq.s32.totalorder %s14, 15
      %p86 = scmp.ne.s32.totalorder %s81, %s83
      %p87 = scmp.eq.s32.totalorder %s14, 0
      %p88 = por %p86, %p87
      %p89 = scmp.ne.s32.totalorder %s81, %s83
      %p90 = scmp.eq.s32.totalorder %s19, 15
      %p91 = por %p89, %p90
      %p92 = scmp.ne.s32.totalorder %s83, %s84
      %p93 = scmp.eq.s32.totalorder %s19, 0
      %p94 = por %p92, %p93
      %p95 = scmp.ne.s32.totalorder %s83, %s84
      %p96 = scmp.eq.s32.totalorder %s20, 15
      %p97 = por %p95, %p96
      %p99 = scmp.ne.s32.totalorder %s84, %s98
      %p100 = scmp.eq.s32.totalorder %s20, 0
      %p101 = por %p99, %p100
      %s103 = sadd.s32 %s102, 1
      %p106 = scmp.eq.s32.totalorder %s14, 15
      %p107 = scmp.ne.s32.totalorder %s102, %s104
      %p108 = scmp.eq.s32.totalorder %s14, 0
      %p109 = por %p107, %p108
      %p110 = scmp.ne.s32.totalorder %s102, %s104
      %p111 = scmp.eq.s32.totalorder %s19, 15
      %p112 = por %p110, %p111
      %p113 = scmp.ne.s32.totalorder %s104, %s105
      %p114 = scmp.eq.s32.totalorder %s19, 0
      %p115 = por %p113, %p114
      %p116 = scmp.ne.s32.totalorder %s104, %s105
      %p117 = scmp.eq.s32.totalorder %s20, 15
      %p118 = por %p116, %p117
      %p120 = scmp.ne.s32.totalorder %s105, %s119
      %p121 = scmp.eq.s32.totalorder %s20, 0
      %p122 = por %p120, %p121
      %s124 = sadd.s32 %s123, 1
      %p127 = scmp.eq.s32.totalorder %s14, 15
      %p128 = scmp.ne.s32.totalorder %s123, %s125
      %p129 = scmp.eq.s32.totalorder %s14, 0
      %p130 = por %p128, %p129
      %p131 = scmp.ne.s32.totalorder %s123, %s125
      %p132 = scmp.eq.s32.totalorder %s19, 15
      %p133 = por %p131, %p132
      %p134 = scmp.ne.s32.totalorder %s125, %s126
      %p135 = scmp.eq.s32.totalorder %s19, 0
      %p136 = por %p134, %p135
      %p137 = scmp.ne.s32.totalorder %s125, %s126
      %p138 = scmp.eq.s32.totalorder %s20, 15
      %p139 = por %p137, %p138
      %p141 = scmp.ne.s32.totalorder %s126, %s140
      %p142 = scmp.eq.s32.totalorder %s20, 0
      %p143 = por %p141, %p142
      %s144 = ssub.s32 %s21, %s33
      %s145 = ssub.s32 %s22, %s29
      %s146 = sor.u32 %s144, %s145
      %p147 = scmp.eq.s32.totalorder %s146, 0
      %s149 = sadd.s32 %s148, 1
      %s150 = scalar_select %p147, %s148, %s149
      %p153 = pneg %p147
      %p154 = scmp.eq.s32.totalorder %s14, 15
      %p155 = por %p153, %p154
      %p156 = scmp.ne.s32.totalorder %s148, %s151
      %p157 = scmp.eq.s32.totalorder %s14, 0
      %p158 = por %p156, %p157
      %p159 = scmp.ne.s32.totalorder %s148, %s151
      %p160 = scmp.eq.s32.totalorder %s19, 15
      %p161 = por %p159, %p160
      %p162 = scmp.ne.s32.totalorder %s151, %s152
      %p163 = scmp.eq.s32.totalorder %s19, 0
      %p164 = por %p162, %p163
      %p165 = scmp.ne.s32.totalorder %s151, %s152
      %p166 = scmp.eq.s32.totalorder %s20, 15
      %p167 = por %p165, %p166
      %p169 = scmp.ne.s32.totalorder %s152, %s168
      %p170 = scmp.eq.s32.totalorder %s20, 0
      %p171 = por %p169, %p170
      %p172 = scmp.le.s32.totalorder 1, %s14
      %p173 = scmp.lt.s32.totalorder %s14, 17
      %p174 = pnand %p172, %p173
      %p175 = pneg %p174
      // Predicated region
      $region9: #{dilated_residual_3d_forward.1} parent=5 // pred_check
        _
      $region10: #{dilated_residual_3d_forward.1} parent=5 // pred_check_branch
        %177 = sbr.rel (%p174) target = $region12
      $region11: #{dilated_residual_3d_forward.1} parent=5 // pred_region
        %s178 = ssub.s32 %s14, 1
        // Predicated region
        $region13: #{dilated_residual_3d_forward.1} parent=11 // pred_check
          %p179 = pneg %p73
        $region14: #{dilated_residual_3d_forward.1} parent=11 // pred_check_branch
          %181 = sbr.rel (%p179) target = $region16
        $region15: #{dilated_residual_3d_forward.1} parent=11 // pred_region
          _
        $region16: #{dilated_residual_3d_forward.1} parent=11 // pred_fallthru
          _
        // Predicated region
        $region17: #{dilated_residual_3d_forward.1} parent=11 // pred_check
          %p182 = pneg %p94
        $region18: #{dilated_residual_3d_forward.1} parent=11 // pred_check_branch
          %184 = sbr.rel (%p182) target = $region20
        $region19: #{dilated_residual_3d_forward.1} parent=11 // pred_region
          _
        $region20: #{dilated_residual_3d_forward.1} parent=11 // pred_fallthru
          _
        // Predicated region
        $region21: #{dilated_residual_3d_forward.1} parent=11 // pred_check
          %p185 = pneg %p115
        $region22: #{dilated_residual_3d_forward.1} parent=11 // pred_check_branch
          %187 = sbr.rel (%p185) target = $region24
        $region23: #{dilated_residual_3d_forward.1} parent=11 // pred_region
          _
        $region24: #{dilated_residual_3d_forward.1} parent=11 // pred_fallthru
          _
        // Predicated region
        $region25: #{dilated_residual_3d_forward.1} parent=11 // pred_check
          %p188 = pneg %p136
        $region26: #{dilated_residual_3d_forward.1} parent=11 // pred_check_branch
          %190 = sbr.rel (%p188) target = $region28
        $region27: #{dilated_residual_3d_forward.1} parent=11 // pred_region
          _
        $region28: #{dilated_residual_3d_forward.1} parent=11 // pred_fallthru
          _
      $region12: #{dilated_residual_3d_forward.1} parent=5 // pred_fallthru
        _
      %p191 = scmp.lt.s32.totalorder %s14, 16
      // Predicated region
      $region29: #{dilated_residual_3d_forward.1} parent=5 // pred_check
        %p192 = pneg %p191
      $region30: #{dilated_residual_3d_forward.1} parent=5 // pred_check_branch
        %194 = sbr.rel (%p192) target = $region32
      $region31: #{dilated_residual_3d_forward.1} parent=5 // pred_region
        // Predicated region
        $region33: #{dilated_residual_3d_forward.1} parent=31 // pred_check
          %p195 = pneg %p46
        $region34: #{dilated_residual_3d_forward.1} parent=31 // pred_check_branch
          %197 = sbr.rel (%p195) target = $region36
        $region35: #{dilated_residual_3d_forward.1} parent=31 // pred_region
          %p198 = scmp.lt.s32.totalorder %s21, 1
          %s199 = scalar_select %p198, %s21, 1
          %s200 = smul.addr %s199, 648
          %s201 = smul.addr %s200, 8
          %s202 = scalar_lea.vmem %s0, %s201
        $region36: #{dilated_residual_3d_forward.1} parent=31 // pred_fallthru
          _
      $region32: #{dilated_residual_3d_forward.1} parent=5 // pred_fallthru
        _
      %p203 = scmp.le.s32.totalorder 1, %s14
      %p204 = scmp.lt.s32.totalorder %s14, 17
      %p205 = pnand %p203, %p204
      %p206 = pneg %p205
      // Predicated region
      $region37: #{dilated_residual_3d_forward.1} parent=5 // pred_check
        _
      $region38: #{dilated_residual_3d_forward.1} parent=5 // pred_check_branch
        %208 = sbr.rel (%p205) target = $region40
      $region39: #{dilated_residual_3d_forward.1} parent=5 // pred_region
        %s209 = ssub.s32 %s14, 1
        %p210 = scmp.lt.s32.totalorder %s23, 1
        %s211 = scalar_select %p210, %s23, 1
        %s212 = smul.addr %s211, 648
        %s213 = smul.addr %s212, 8
        %s214 = scalar_lea.vmem %s0, %s213
        %p215 = pneg %p52
        %p216 = pneg %p49
        %p217 = pneg %p73
        %p218 = pneg %p70
        %p219 = pneg %p94
        %p220 = pneg %p91
        %p221 = pneg %p115
        %p222 = pneg %p112
        %p223 = pneg %p136
        %p224 = pneg %p133
        %p225 = pneg %p164
        %p226 = pneg %p161
        %s227 = sand.u32 %s151, 1
        %s228 = scalar_lea.sflag [#allocation3], %s227
        %s229 = sand.u32 %s151, 1
        %s230 = smul.addr %s229, 256
        %s231 = scalar_lea.vmem [#allocation2], %s230
        %p232 = scmp.lt.s32.totalorder %s23, 1
        %s233 = scalar_select %p232, %s23, 1
        %s234 = smul.addr %s233, 648
        %s235 = smul.addr %s234, 8
        %s236 = scalar_lea.vmem %s0, %s235
        %v237 = vld [vmem:[%s2] sm:$0x1]
        %v239 = vlaneseq
        %v240 = vshrl.u32 %v239, 7
        %v241 = vsub.s32 0, %v240
        %v242 = vrot.slane %v237, %v241
        %s244 = smul.u32 %s24, 432
        %s245 = scalar_lea.vmem %s236, %s244
        %v246 = vld [vmem:[%s245] sm:$0xff]
        %v247 = vld [vmem:[%s245 + $0x8] sm:$0xff]
        %v248 = vld [vmem:[%s245 + $0x10] sm:$0x3]
        %v249 = vld [vmem:[%s245 + $0x18] sm:$0xff]
        %v250 = vld [vmem:[%s245 + $0x20] sm:$0xff]
        %v251 = vld [vmem:[%s245 + $0x28] sm:$0x3]
        %v252 = vld [vmem:[%s245 + $0x30] sm:$0xff]
        %v253 = vld [vmem:[%s245 + $0x38] sm:$0xff]
        %v254 = vld [vmem:[%s245 + $0x40] sm:$0x3]
        %v255 = vld [vmem:[%s245 + $0x48] sm:$0xff]
        %v256 = vld [vmem:[%s245 + $0x50] sm:$0xff]
        %v257 = vld [vmem:[%s245 + $0x58] sm:$0x3]
        %v258 = vld [vmem:[%s245 + $0x60] sm:$0xff]
        %v259 = vld [vmem:[%s245 + $0x68] sm:$0xff]
        %v260 = vld [vmem:[%s245 + $0x70] sm:$0x3]
        %v261 = vld [vmem:[%s245 + $0x78] sm:$0xff]
        %v262 = vld [vmem:[%s245 + $0x80] sm:$0xff]
        %v263 = vld [vmem:[%s245 + $0x88] sm:$0x3]
        %v264 = vld [vmem:[%s245 + $0x90] sm:$0xff]
        %v265 = vld [vmem:[%s245 + $0x98] sm:$0xff]
        %v266 = vld [vmem:[%s245 + $0xa0] sm:$0x3]
        %v267 = vld [vmem:[%s245 + $0xa8] sm:$0xff]
        %v268 = vld [vmem:[%s245 + $0xb0] sm:$0xff]
        %v269 = vld [vmem:[%s245 + $0xb8] sm:$0x3]
        %v270 = vld [vmem:[%s245 + $0xc0] sm:$0xff]
        %v271 = vld [vmem:[%s245 + $0xc8] sm:$0xff]
        %v272 = vld [vmem:[%s245 + $0xd0] sm:$0x3]
        %v273 = vld [vmem:[%s245 + $0xd8] sm:$0xff]
        %v274 = vld [vmem:[%s245 + $0xe0] sm:$0xff]
        %v275 = vld [vmem:[%s245 + $0xe8] sm:$0x3]
        %v276 = vld [vmem:[%s245 + $0xf0] sm:$0xff]
        %v277 = vld [vmem:[%s245 + $0xf8] sm:$0xff]
        %v278 = vld [vmem:[%s245 + $0x100] sm:$0x3]
        %v279 = vld [vmem:[%s245 + $0x108] sm:$0xff]
        %v280 = vld [vmem:[%s245 + $0x110] sm:$0xff]
        %v281 = vld [vmem:[%s245 + $0x118] sm:$0x3]
        %v282 = vld [vmem:[%s245 + $0x120] sm:$0xff]
        %v283 = vld [vmem:[%s245 + $0x128] sm:$0xff]
        %v284 = vld [vmem:[%s245 + $0x130] sm:$0x3]
        %v285 = vld [vmem:[%s245 + $0x138] sm:$0xff]
        %v286 = vld [vmem:[%s245 + $0x140] sm:$0xff]
        %v287 = vld [vmem:[%s245 + $0x148] sm:$0x3]
        %v288 = vld [vmem:[%s245 + $0x150] sm:$0xff]
        %v289 = vld [vmem:[%s245 + $0x158] sm:$0xff]
        %v290 = vld [vmem:[%s245 + $0x160] sm:$0x3]
        %v291 = vld [vmem:[%s245 + $0x168] sm:$0xff]
        %v292 = vld [vmem:[%s245 + $0x170] sm:$0xff]
        %v293 = vld [vmem:[%s245 + $0x178] sm:$0x3]
        %v294 = vld [vmem:[%s245 + $0x180] sm:$0xff]
        %v295 = vld [vmem:[%s245 + $0x188] sm:$0xff]
        %v296 = vld [vmem:[%s245 + $0x190] sm:$0x3]
        %v297 = vld [vmem:[%s245 + $0x198] sm:$0xff]
        %v298 = vld [vmem:[%s245 + $0x1a0] sm:$0xff]
        %v299 = vld [vmem:[%s245 + $0x1a8] sm:$0x3]
        %v300 = vld [vmem:[%s1] sm:$0x1]
        %v301 = vlaneseq
        %v302 = vshrl.u32 %v301, 7
        %v303 = vsub.s32 0, %v302
        %v304 = vrot.slane %v300, %v303
        %v305 = vmul.f32 %v246, %v304
        %v306 = vmul.f32 %v247, %v304
        %v307 = vmul.f32 %v249, %v304
        %v308 = vmul.f32 %v250, %v304
        %v309 = vmul.f32 %v252, %v304
        %v310 = vmul.f32 %v253, %v304
        %v311 = vmul.f32 %v255, %v304
        %v312 = vmul.f32 %v256, %v304
        %v313 = vmul.f32 %v258, %v304
        %v314 = vmul.f32 %v259, %v304
        %v315 = vmul.f32 %v261, %v304
        %v316 = vmul.f32 %v262, %v304
        %v317 = vmul.f32 %v264, %v304
        %v318 = vmul.f32 %v265, %v304
        %v319 = vmul.f32 %v267, %v304
        %v320 = vmul.f32 %v268, %v304
        %v321 = vmul.f32 %v270, %v304
        %v322 = vmul.f32 %v271, %v304
        %v323 = vmul.f32 %v273, %v304
        %v324 = vmul.f32 %v274, %v304
        %v325 = vmul.f32 %v276, %v304
        %v326 = vmul.f32 %v277, %v304
        %v327 = vmul.f32 %v279, %v304
        %v328 = vmul.f32 %v280, %v304
        %v329 = vmul.f32 %v282, %v304
        %v330 = vmul.f32 %v283, %v304
        %v331 = vmul.f32 %v285, %v304
        %v332 = vmul.f32 %v286, %v304
        %v333 = vmul.f32 %v288, %v304
        %v334 = vmul.f32 %v289, %v304
        %v335 = vmul.f32 %v291, %v304
        %v336 = vmul.f32 %v292, %v304
        %v337 = vadd.f32 %v242, %v305
        %v338 = vadd.f32 %v242, %v306
        %v339 = vadd.f32 %v242, %v307
        %v340 = vadd.f32 %v242, %v308
        %v341 = vadd.f32 %v242, %v309
        %v342 = vadd.f32 %v242, %v310
        %v343 = vadd.f32 %v242, %v311
        %v344 = vadd.f32 %v242, %v312
        %v345 = vadd.f32 %v242, %v313
        %v346 = vadd.f32 %v242, %v314
        %v347 = vadd.f32 %v242, %v315
        %v348 = vadd.f32 %v242, %v316
        %v349 = vadd.f32 %v242, %v317
        %v350 = vadd.f32 %v242, %v318
        %v351 = vadd.f32 %v242, %v319
        %v352 = vadd.f32 %v242, %v320
        %v353 = vadd.f32 %v242, %v321
        %v354 = vadd.f32 %v242, %v322
        %v355 = vadd.f32 %v242, %v323
        %v356 = vadd.f32 %v242, %v324
        %v357 = vadd.f32 %v242, %v325
        %v358 = vadd.f32 %v242, %v326
        %v359 = vadd.f32 %v242, %v327
        %v360 = vadd.f32 %v242, %v328
        %v361 = vadd.f32 %v242, %v329
        %v362 = vadd.f32 %v242, %v330
        %v363 = vadd.f32 %v242, %v331
        %v364 = vadd.f32 %v242, %v332
        %v365 = vadd.f32 %v242, %v333
        %v366 = vadd.f32 %v242, %v334
        %v367 = vadd.f32 %v242, %v335
        %v368 = vadd.f32 %v242, %v336
        %v369 = vld [vmem:[%s1 + $0x1] sm:$0x1]
        %v370 = vlaneseq
        %v371 = vshrl.u32 %v370, 7
        %v372 = vsub.s32 0, %v371
        %v373 = vrot.slane %v369, %v372
        %v374 = vmul.f32 %v246, %v373
        %v375 = vmul.f32 %v247, %v373
        %v376 = vmul.f32 %v248, %v373
        %v377 = vmul.f32 %v249, %v373
        %v378 = vmul.f32 %v250, %v373
        %v379 = vmul.f32 %v251, %v373
        %v380 = vmul.f32 %v252, %v373
        %v381 = vmul.f32 %v253, %v373
        %v382 = vmul.f32 %v254, %v373
        %v383 = vmul.f32 %v255, %v373
        %v384 = vmul.f32 %v256, %v373
        %v385 = vmul.f32 %v257, %v373
        %v386 = vmul.f32 %v258, %v373
        %v387 = vmul.f32 %v259, %v373
        %v388 = vmul.f32 %v260, %v373
        %v389 = vmul.f32 %v261, %v373
        %v390 = vmul.f32 %v262, %v373
        %v391 = vmul.f32 %v263, %v373
        %v392 = vmul.f32 %v264, %v373
        %v393 = vmul.f32 %v265, %v373
        %v394 = vmul.f32 %v266, %v373
        %v395 = vmul.f32 %v267, %v373
        %v396 = vmul.f32 %v268, %v373
        %v397 = vmul.f32 %v269, %v373
        %v398 = vmul.f32 %v270, %v373
        %v399 = vmul.f32 %v271, %v373
        %v400 = vmul.f32 %v272, %v373
        %v401 = vmul.f32 %v273, %v373
        %v402 = vmul.f32 %v274, %v373
        %v403 = vmul.f32 %v275, %v373
        %v404 = vmul.f32 %v276, %v373
        %v405 = vmul.f32 %v277, %v373
        %v406 = vmul.f32 %v278, %v373
        %v407 = vmul.f32 %v279, %v373
        %v408 = vmul.f32 %v280, %v373
        %v409 = vmul.f32 %v281, %v373
        %v410 = vmul.f32 %v282, %v373
        %v411 = vmul.f32 %v283, %v373
        %v412 = vmul.f32 %v284, %v373
        %v413 = vmul.f32 %v285, %v373
        %v414 = vmul.f32 %v286, %v373
        %v415 = vmul.f32 %v287, %v373
        %v416 = vmul.f32 %v288, %v373
        %v417 = vmul.f32 %v289, %v373
        %v418 = vmul.f32 %v290, %v373
        %v419 = vmul.f32 %v291, %v373
        %v420 = vmul.f32 %v292, %v373
        %v421 = vmul.f32 %v293, %v373
        %vm470 = vcmask 1046528
        %v471 = vrot.slane %v374, 1
        %v472 = vrot.slane %v375, 1
        %v473 = vsel %vm470, %v471, %v472
        %v474 = vrot.slane %v376, 1
        %v475 = vsel %vm470, %v472, %v474
        %v476 = vrot.slane %v377, 1
        %v477 = vrot.slane %v378, 1
        %v478 = vsel %vm470, %v476, %v477
        %v479 = vrot.slane %v379, 1
        %v480 = vsel %vm470, %v477, %v479
        %v481 = vrot.slane %v380, 1
        %v482 = vrot.slane %v381, 1
        %v483 = vsel %vm470, %v481, %v482
        %v484 = vrot.slane %v382, 1
        %v485 = vsel %vm470, %v482, %v484
        %v486 = vrot.slane %v383, 1
        %v487 = vrot.slane %v384, 1
        %v488 = vsel %vm470, %v486, %v487
        %v489 = vrot.slane %v385, 1
        %v490 = vsel %vm470, %v487, %v489
        %v491 = vrot.slane %v386, 1
        %v492 = vrot.slane %v387, 1
        %v493 = vsel %vm470, %v491, %v492
        %v494 = vrot.slane %v388, 1
        %v495 = vsel %vm470, %v492, %v494
        %v496 = vrot.slane %v389, 1
        %v497 = vrot.slane %v390, 1
        %v498 = vsel %vm470, %v496, %v497
        %v499 = vrot.slane %v391, 1
        %v500 = vsel %vm470, %v497, %v499
        %v501 = vrot.slane %v392, 1
        %v502 = vrot.slane %v393, 1
        %v503 = vsel %vm470, %v501, %v502
        %v504 = vrot.slane %v394, 1
        %v505 = vsel %vm470, %v502, %v504
        %v506 = vrot.slane %v395, 1
        %v507 = vrot.slane %v396, 1
        %v508 = vsel %vm470, %v506, %v507
        %v509 = vrot.slane %v397, 1
        %v510 = vsel %vm470, %v507, %v509
        %v511 = vrot.slane %v398, 1
        %v512 = vrot.slane %v399, 1
        %v513 = vsel %vm470, %v511, %v512
        %v514 = vrot.slane %v400, 1
        %v515 = vsel %vm470, %v512, %v514
        %v516 = vrot.slane %v401, 1
        %v517 = vrot.slane %v402, 1
        %v518 = vsel %vm470, %v516, %v517
        %v519 = vrot.slane %v403, 1
        %v520 = vsel %vm470, %v517, %v519
        %v521 = vrot.slane %v404, 1
        %v522 = vrot.slane %v405, 1
        %v523 = vsel %vm470, %v521, %v522
        %v524 = vrot.slane %v406, 1
        %v525 = vsel %vm470, %v522, %v524
        %v526 = vrot.slane %v407, 1
        %v527 = vrot.slane %v408, 1
        %v528 = vsel %vm470, %v526, %v527
        %v529 = vrot.slane %v409, 1
        %v530 = vsel %vm470, %v527, %v529
        %v531 = vrot.slane %v410, 1
        %v532 = vrot.slane %v411, 1
        %v533 = vsel %vm470, %v531, %v532
        %v534 = vrot.slane %v412, 1
        %v535 = vsel %vm470, %v532, %v534
        %v536 = vrot.slane %v413, 1
        %v537 = vrot.slane %v414, 1
        %v538 = vsel %vm470, %v536, %v537
        %v539 = vrot.slane %v415, 1
        %v540 = vsel %vm470, %v537, %v539
        %v541 = vrot.slane %v416, 1
        %v542 = vrot.slane %v417, 1
        %v543 = vsel %vm470, %v541, %v542
        %v544 = vrot.slane %v418, 1
        %v545 = vsel %vm470, %v542, %v544
        %v546 = vrot.slane %v419, 1
        %v547 = vrot.slane %v420, 1
        %v548 = vsel %vm470, %v546, %v547
        %v549 = vrot.slane %v421, 1
        %v550 = vsel %vm470, %v547, %v549
        %v583 = vadd.f32 %v337, %v473
        %v584 = vadd.f32 %v338, %v475
        %v585 = vadd.f32 %v339, %v478
        %v586 = vadd.f32 %v340, %v480
        %v587 = vadd.f32 %v341, %v483
        %v588 = vadd.f32 %v342, %v485
        %v589 = vadd.f32 %v343, %v488
        %v590 = vadd.f32 %v344, %v490
        %v591 = vadd.f32 %v345, %v493
        %v592 = vadd.f32 %v346, %v495
        %v593 = vadd.f32 %v347, %v498
        %v594 = vadd.f32 %v348, %v500
        %v595 = vadd.f32 %v349, %v503
        %v596 = vadd.f32 %v350, %v505
        %v597 = vadd.f32 %v351, %v508
        %v598 = vadd.f32 %v352, %v510
        %v599 = vadd.f32 %v353, %v513
        %v600 = vadd.f32 %v354, %v515
        %v601 = vadd.f32 %v355, %v518
        %v602 = vadd.f32 %v356, %v520
        %v603 = vadd.f32 %v357, %v523
        %v604 = vadd.f32 %v358, %v525
        %v605 = vadd.f32 %v359, %v528
        %v606 = vadd.f32 %v360, %v530
        %v607 = vadd.f32 %v361, %v533
        %v608 = vadd.f32 %v362, %v535
        %v609 = vadd.f32 %v363, %v538
        %v610 = vadd.f32 %v364, %v540
        %v611 = vadd.f32 %v365, %v543
        %v612 = vadd.f32 %v366, %v545
        %v613 = vadd.f32 %v367, %v548
        %v614 = vadd.f32 %v368, %v550
        %v615 = vld [vmem:[%s1 + $0x2] sm:$0x1]
        %v616 = vlaneseq
        %v617 = vshrl.u32 %v616, 7
        %v618 = vsub.s32 0, %v617
        %v619 = vrot.slane %v615, %v618
        %v620 = vmul.f32 %v246, %v619
        %v621 = vmul.f32 %v247, %v619
        %v622 = vmul.f32 %v248, %v619
        %v623 = vmul.f32 %v249, %v619
        %v624 = vmul.f32 %v250, %v619
        %v625 = vmul.f32 %v251, %v619
        %v626 = vmul.f32 %v252, %v619
        %v627 = vmul.f32 %v253, %v619
        %v628 = vmul.f32 %v254, %v619
        %v629 = vmul.f32 %v255, %v619
        %v630 = vmul.f32 %v256, %v619
        %v631 = vmul.f32 %v257, %v619
        %v632 = vmul.f32 %v258, %v619
        %v633 = vmul.f32 %v259, %v619
        %v634 = vmul.f32 %v260, %v619
        %v635 = vmul.f32 %v261, %v619
        %v636 = vmul.f32 %v262, %v619
        %v637 = vmul.f32 %v263, %v619
        %v638 = vmul.f32 %v264, %v619
        %v639 = vmul.f32 %v265, %v619
        %v640 = vmul.f32 %v266, %v619
        %v641 = vmul.f32 %v267, %v619
        %v642 = vmul.f32 %v268, %v619
        %v643 = vmul.f32 %v269, %v619
        %v644 = vmul.f32 %v270, %v619
        %v645 = vmul.f32 %v271, %v619
        %v646 = vmul.f32 %v272, %v619
        %v647 = vmul.f32 %v273, %v619
        %v648 = vmul.f32 %v274, %v619
        %v649 = vmul.f32 %v275, %v619
        %v650 = vmul.f32 %v276, %v619
        %v651 = vmul.f32 %v277, %v619
        %v652 = vmul.f32 %v278, %v619
        %v653 = vmul.f32 %v279, %v619
        %v654 = vmul.f32 %v280, %v619
        %v655 = vmul.f32 %v281, %v619
        %v656 = vmul.f32 %v282, %v619
        %v657 = vmul.f32 %v283, %v619
        %v658 = vmul.f32 %v284, %v619
        %v659 = vmul.f32 %v285, %v619
        %v660 = vmul.f32 %v286, %v619
        %v661 = vmul.f32 %v287, %v619
        %v662 = vmul.f32 %v288, %v619
        %v663 = vmul.f32 %v289, %v619
        %v664 = vmul.f32 %v290, %v619
        %v665 = vmul.f32 %v291, %v619
        %v666 = vmul.f32 %v292, %v619
        %v667 = vmul.f32 %v293, %v619
        %vm716 = vcmask 1045504
        %v717 = vrot.slane %v620, 2
        %v718 = vrot.slane %v621, 2
        %v719 = vsel %vm716, %v717, %v718
        %v720 = vrot.slane %v622, 2
        %v721 = vsel %vm716, %v718, %v720
        %v722 = vrot.slane %v623, 2
        %v723 = vrot.slane %v624, 2
        %v724 = vsel %vm716, %v722, %v723
        %v725 = vrot.slane %v625, 2
        %v726 = vsel %vm716, %v723, %v725
        %v727 = vrot.slane %v626, 2
        %v728 = vrot.slane %v627, 2
        %v729 = vsel %vm716, %v727, %v728
        %v730 = vrot.slane %v628, 2
        %v731 = vsel %vm716, %v728, %v730
        %v732 = vrot.slane %v629, 2
        %v733 = vrot.slane %v630, 2
        %v734 = vsel %vm716, %v732, %v733
        %v735 = vrot.slane %v631, 2
        %v736 = vsel %vm716, %v733, %v735
        %v737 = vrot.slane %v632, 2
        %v738 = vrot.slane %v633, 2
        %v739 = vsel %vm716, %v737, %v738
        %v740 = vrot.slane %v634, 2
        %v741 = vsel %vm716, %v738, %v740
        %v742 = vrot.slane %v635, 2
        %v743 = vrot.slane %v636, 2
        %v744 = vsel %vm716, %v742, %v743
        %v745 = vrot.slane %v637, 2
        %v746 = vsel %vm716, %v743, %v745
        %v747 = vrot.slane %v638, 2
        %v748 = vrot.slane %v639, 2
        %v749 = vsel %vm716, %v747, %v748
        %v750 = vrot.slane %v640, 2
        %v751 = vsel %vm716, %v748, %v750
        %v752 = vrot.slane %v641, 2
        %v753 = vrot.slane %v642, 2
        %v754 = vsel %vm716, %v752, %v753
        %v755 = vrot.slane %v643, 2
        %v756 = vsel %vm716, %v753, %v755
        %v757 = vrot.slane %v644, 2
        %v758 = vrot.slane %v645, 2
        %v759 = vsel %vm716, %v757, %v758
        %v760 = vrot.slane %v646, 2
        %v761 = vsel %vm716, %v758, %v760
        %v762 = vrot.slane %v647, 2
        %v763 = vrot.slane %v648, 2
        %v764 = vsel %vm716, %v762, %v763
        %v765 = vrot.slane %v649, 2
        %v766 = vsel %vm716, %v763, %v765
        %v767 = vrot.slane %v650, 2
        %v768 = vrot.slane %v651, 2
        %v769 = vsel %vm716, %v767, %v768
        %v770 = vrot.slane %v652, 2
        %v771 = vsel %vm716, %v768, %v770
        %v772 = vrot.slane %v653, 2
        %v773 = vrot.slane %v654, 2
        %v774 = vsel %vm716, %v772, %v773
        %v775 = vrot.slane %v655, 2
        %v776 = vsel %vm716, %v773, %v775
        %v777 = vrot.slane %v656, 2
        %v778 = vrot.slane %v657, 2
        %v779 = vsel %vm716, %v777, %v778
        %v780 = vrot.slane %v658, 2
        %v781 = vsel %vm716, %v778, %v780
        %v782 = vrot.slane %v659, 2
        %v783 = vrot.slane %v660, 2
        %v784 = vsel %vm716, %v782, %v783
        %v785 = vrot.slane %v661, 2
        %v786 = vsel %vm716, %v783, %v785
        %v787 = vrot.slane %v662, 2
        %v788 = vrot.slane %v663, 2
        %v789 = vsel %vm716, %v787, %v788
        %v790 = vrot.slane %v664, 2
        %v791 = vsel %vm716, %v788, %v790
        %v792 = vrot.slane %v665, 2
        %v793 = vrot.slane %v666, 2
        %v794 = vsel %vm716, %v792, %v793
        %v795 = vrot.slane %v667, 2
        %v796 = vsel %vm716, %v793, %v795
        %v829 = vadd.f32 %v583, %v719
        %v830 = vadd.f32 %v584, %v721
        %v831 = vadd.f32 %v585, %v724
        %v832 = vadd.f32 %v586, %v726
        %v833 = vadd.f32 %v587, %v729
        %v834 = vadd.f32 %v588, %v731
        %v835 = vadd.f32 %v589, %v734
        %v836 = vadd.f32 %v590, %v736
        %v837 = vadd.f32 %v591, %v739
        %v838 = vadd.f32 %v592, %v741
        %v839 = vadd.f32 %v593, %v744
        %v840 = vadd.f32 %v594, %v746
        %v841 = vadd.f32 %v595, %v749
        %v842 = vadd.f32 %v596, %v751
        %v843 = vadd.f32 %v597, %v754
        %v844 = vadd.f32 %v598, %v756
        %v845 = vadd.f32 %v599, %v759
        %v846 = vadd.f32 %v600, %v761
        %v847 = vadd.f32 %v601, %v764
        %v848 = vadd.f32 %v602, %v766
        %v849 = vadd.f32 %v603, %v769
        %v850 = vadd.f32 %v604, %v771
        %v851 = vadd.f32 %v605, %v774
        %v852 = vadd.f32 %v606, %v776
        %v853 = vadd.f32 %v607, %v779
        %v854 = vadd.f32 %v608, %v781
        %v855 = vadd.f32 %v609, %v784
        %v856 = vadd.f32 %v610, %v786
        %v857 = vadd.f32 %v611, %v789
        %v858 = vadd.f32 %v612, %v791
        %v859 = vadd.f32 %v613, %v794
        %v860 = vadd.f32 %v614, %v796
        %v861 = vld [vmem:[%s1 + $0x3] sm:$0x1]
        %v862 = vlaneseq
        %v863 = vshrl.u32 %v862, 7
        %v864 = vsub.s32 0, %v863
        %v865 = vrot.slane %v861, %v864
        %v866 = vmul.f32 %v249, %v865
        %v867 = vmul.f32 %v250, %v865
        %v868 = vmul.f32 %v252, %v865
        %v869 = vmul.f32 %v253, %v865
        %v870 = vmul.f32 %v255, %v865
        %v871 = vmul.f32 %v256, %v865
        %v872 = vmul.f32 %v258, %v865
        %v873 = vmul.f32 %v259, %v865
        %v874 = vmul.f32 %v261, %v865
        %v875 = vmul.f32 %v262, %v865
        %v876 = vmul.f32 %v264, %v865
        %v877 = vmul.f32 %v265, %v865
        %v878 = vmul.f32 %v267, %v865
        %v879 = vmul.f32 %v268, %v865
        %v880 = vmul.f32 %v270, %v865
        %v881 = vmul.f32 %v271, %v865
        %v882 = vmul.f32 %v273, %v865
        %v883 = vmul.f32 %v274, %v865
        %v884 = vmul.f32 %v276, %v865
        %v885 = vmul.f32 %v277, %v865
        %v886 = vmul.f32 %v279, %v865
        %v887 = vmul.f32 %v280, %v865
        %v888 = vmul.f32 %v282, %v865
        %v889 = vmul.f32 %v283, %v865
        %v890 = vmul.f32 %v285, %v865
        %v891 = vmul.f32 %v286, %v865
        %v892 = vmul.f32 %v288, %v865
        %v893 = vmul.f32 %v289, %v865
        %v894 = vmul.f32 %v291, %v865
        %v895 = vmul.f32 %v292, %v865
        %v896 = vmul.f32 %v294, %v865
        %v897 = vmul.f32 %v295, %v865
        %v898 = vadd.f32 %v829, %v866
        %v899 = vadd.f32 %v830, %v867
        %v900 = vadd.f32 %v831, %v868
        %v901 = vadd.f32 %v832, %v869
        %v902 = vadd.f32 %v833, %v870
        %v903 = vadd.f32 %v834, %v871
        %v904 = vadd.f32 %v835, %v872
        %v905 = vadd.f32 %v836, %v873
        %v906 = vadd.f32 %v837, %v874
        %v907 = vadd.f32 %v838, %v875
        %v908 = vadd.f32 %v839, %v876
        %v909 = vadd.f32 %v840, %v877
        %v910 = vadd.f32 %v841, %v878
        %v911 = vadd.f32 %v842, %v879
        %v912 = vadd.f32 %v843, %v880
        %v913 = vadd.f32 %v844, %v881
        %v914 = vadd.f32 %v845, %v882
        %v915 = vadd.f32 %v846, %v883
        %v916 = vadd.f32 %v847, %v884
        %v917 = vadd.f32 %v848, %v885
        %v918 = vadd.f32 %v849, %v886
        %v919 = vadd.f32 %v850, %v887
        %v920 = vadd.f32 %v851, %v888
        %v921 = vadd.f32 %v852, %v889
        %v922 = vadd.f32 %v853, %v890
        %v923 = vadd.f32 %v854, %v891
        %v924 = vadd.f32 %v855, %v892
        %v925 = vadd.f32 %v856, %v893
        %v926 = vadd.f32 %v857, %v894
        %v927 = vadd.f32 %v858, %v895
        %v928 = vadd.f32 %v859, %v896
        %v929 = vadd.f32 %v860, %v897
        %v930 = vld [vmem:[%s1 + $0x4] sm:$0x1]
        %v931 = vlaneseq
        %v932 = vshrl.u32 %v931, 7
        %v933 = vsub.s32 0, %v932
        %v934 = vrot.slane %v930, %v933
        %v935 = vmul.f32 %v249, %v934
        %v936 = vmul.f32 %v250, %v934
        %v937 = vmul.f32 %v251, %v934
        %v938 = vmul.f32 %v252, %v934
        %v939 = vmul.f32 %v253, %v934
        %v940 = vmul.f32 %v254, %v934
        %v941 = vmul.f32 %v255, %v934
        %v942 = vmul.f32 %v256, %v934
        %v943 = vmul.f32 %v257, %v934
        %v944 = vmul.f32 %v258, %v934
        %v945 = vmul.f32 %v259, %v934
        %v946 = vmul.f32 %v260, %v934
        %v947 = vmul.f32 %v261, %v934
        %v948 = vmul.f32 %v262, %v934
        %v949 = vmul.f32 %v263, %v934
        %v950 = vmul.f32 %v264, %v934
        %v951 = vmul.f32 %v265, %v934
        %v952 = vmul.f32 %v266, %v934
        %v953 = vmul.f32 %v267, %v934
        %v954 = vmul.f32 %v268, %v934
        %v955 = vmul.f32 %v269, %v934
        %v956 = vmul.f32 %v270, %v934
        %v957 = vmul.f32 %v271, %v934
        %v958 = vmul.f32 %v272, %v934
        %v959 = vmul.f32 %v273, %v934
        %v960 = vmul.f32 %v274, %v934
        %v961 = vmul.f32 %v275, %v934
        %v962 = vmul.f32 %v276, %v934
        %v963 = vmul.f32 %v277, %v934
        %v964 = vmul.f32 %v278, %v934
        %v965 = vmul.f32 %v279, %v934
        %v966 = vmul.f32 %v280, %v934
        %v967 = vmul.f32 %v281, %v934
        %v968 = vmul.f32 %v282, %v934
        %v969 = vmul.f32 %v283, %v934
        %v970 = vmul.f32 %v284, %v934
        %v971 = vmul.f32 %v285, %v934
        %v972 = vmul.f32 %v286, %v934
        %v973 = vmul.f32 %v287, %v934
        %v974 = vmul.f32 %v288, %v934
        %v975 = vmul.f32 %v289, %v934
        %v976 = vmul.f32 %v290, %v934
        %v977 = vmul.f32 %v291, %v934
        %v978 = vmul.f32 %v292, %v934
        %v979 = vmul.f32 %v293, %v934
        %v980 = vmul.f32 %v294, %v934
        %v981 = vmul.f32 %v295, %v934
        %v982 = vmul.f32 %v296, %v934
        %v1031 = vrot.slane %v935, 1
        %v1032 = vrot.slane %v936, 1
        %v1033 = vsel %vm470, %v1031, %v1032
        %v1034 = vrot.slane %v937, 1
        %v1035 = vsel %vm470, %v1032, %v1034
        %v1036 = vrot.slane %v938, 1
        %v1037 = vrot.slane %v939, 1
        %v1038 = vsel %vm470, %v1036, %v1037
        %v1039 = vrot.slane %v940, 1
        %v1040 = vsel %vm470, %v1037, %v1039
        %v1041 = vrot.slane %v941, 1
        %v1042 = vrot.slane %v942, 1
        %v1043 = vsel %vm470, %v1041, %v1042
        %v1044 = vrot.slane %v943, 1
        %v1045 = vsel %vm470, %v1042, %v1044
        %v1046 = vrot.slane %v944, 1
        %v1047 = vrot.slane %v945, 1
        %v1048 = vsel %vm470, %v1046, %v1047
        %v1049 = vrot.slane %v946, 1
        %v1050 = vsel %vm470, %v1047, %v1049
        %v1051 = vrot.slane %v947, 1
        %v1052 = vrot.slane %v948, 1
        %v1053 = vsel %vm470, %v1051, %v1052
        %v1054 = vrot.slane %v949, 1
        %v1055 = vsel %vm470, %v1052, %v1054
        %v1056 = vrot.slane %v950, 1
        %v1057 = vrot.slane %v951, 1
        %v1058 = vsel %vm470, %v1056, %v1057
        %v1059 = vrot.slane %v952, 1
        %v1060 = vsel %vm470, %v1057, %v1059
        %v1061 = vrot.slane %v953, 1
        %v1062 = vrot.slane %v954, 1
        %v1063 = vsel %vm470, %v1061, %v1062
        %v1064 = vrot.slane %v955, 1
        %v1065 = vsel %vm470, %v1062, %v1064
        %v1066 = vrot.slane %v956, 1
        %v1067 = vrot.slane %v957, 1
        %v1068 = vsel %vm470, %v1066, %v1067
        %v1069 = vrot.slane %v958, 1
        %v1070 = vsel %vm470, %v1067, %v1069
        %v1071 = vrot.slane %v959, 1
        %v1072 = vrot.slane %v960, 1
        %v1073 = vsel %vm470, %v1071, %v1072
        %v1074 = vrot.slane %v961, 1
        %v1075 = vsel %vm470, %v1072, %v1074
        %v1076 = vrot.slane %v962, 1
        %v1077 = vrot.slane %v963, 1
        %v1078 = vsel %vm470, %v1076, %v1077
        %v1079 = vrot.slane %v964, 1
        %v1080 = vsel %vm470, %v1077, %v1079
        %v1081 = vrot.slane %v965, 1
        %v1082 = vrot.slane %v966, 1
        %v1083 = vsel %vm470, %v1081, %v1082
        %v1084 = vrot.slane %v967, 1
        %v1085 = vsel %vm470, %v1082, %v1084
        %v1086 = vrot.slane %v968, 1
        %v1087 = vrot.slane %v969, 1
        %v1088 = vsel %vm470, %v1086, %v1087
        %v1089 = vrot.slane %v970, 1
        %v1090 = vsel %vm470, %v1087, %v1089
        %v1091 = vrot.slane %v971, 1
        %v1092 = vrot.slane %v972, 1
        %v1093 = vsel %vm470, %v1091, %v1092
        %v1094 = vrot.slane %v973, 1
        %v1095 = vsel %vm470, %v1092, %v1094
        %v1096 = vrot.slane %v974, 1
        %v1097 = vrot.slane %v975, 1
        %v1098 = vsel %vm470, %v1096, %v1097
        %v1099 = vrot.slane %v976, 1
        %v1100 = vsel %vm470, %v1097, %v1099
        %v1101 = vrot.slane %v977, 1
        %v1102 = vrot.slane %v978, 1
        %v1103 = vsel %vm470, %v1101, %v1102
        %v1104 = vrot.slane %v979, 1
        %v1105 = vsel %vm470, %v1102, %v1104
        %v1106 = vrot.slane %v980, 1
        %v1107 = vrot.slane %v981, 1
        %v1108 = vsel %vm470, %v1106, %v1107
        %v1109 = vrot.slane %v982, 1
        %v1110 = vsel %vm470, %v1107, %v1109
        %v1143 = vadd.f32 %v898, %v1033
        %v1144 = vadd.f32 %v899, %v1035
        %v1145 = vadd.f32 %v900, %v1038
        %v1146 = vadd.f32 %v901, %v1040
        %v1147 = vadd.f32 %v902, %v1043
        %v1148 = vadd.f32 %v903, %v1045
        %v1149 = vadd.f32 %v904, %v1048
        %v1150 = vadd.f32 %v905, %v1050
        %v1151 = vadd.f32 %v906, %v1053
        %v1152 = vadd.f32 %v907, %v1055
        %v1153 = vadd.f32 %v908, %v1058
        %v1154 = vadd.f32 %v909, %v1060
        %v1155 = vadd.f32 %v910, %v1063
        %v1156 = vadd.f32 %v911, %v1065
        %v1157 = vadd.f32 %v912, %v1068
        %v1158 = vadd.f32 %v913, %v1070
        %v1159 = vadd.f32 %v914, %v1073
        %v1160 = vadd.f32 %v915, %v1075
        %v1161 = vadd.f32 %v916, %v1078
        %v1162 = vadd.f32 %v917, %v1080
        %v1163 = vadd.f32 %v918, %v1083
        %v1164 = vadd.f32 %v919, %v1085
        %v1165 = vadd.f32 %v920, %v1088
        %v1166 = vadd.f32 %v921, %v1090
        %v1167 = vadd.f32 %v922, %v1093
        %v1168 = vadd.f32 %v923, %v1095
        %v1169 = vadd.f32 %v924, %v1098
        %v1170 = vadd.f32 %v925, %v1100
        %v1171 = vadd.f32 %v926, %v1103
        %v1172 = vadd.f32 %v927, %v1105
        %v1173 = vadd.f32 %v928, %v1108
        %v1174 = vadd.f32 %v929, %v1110
        %v1175 = vld [vmem:[%s1 + $0x5] sm:$0x1]
        %v1176 = vlaneseq
        %v1177 = vshrl.u32 %v1176, 7
        %v1178 = vsub.s32 0, %v1177
        %v1179 = vrot.slane %v1175, %v1178
        %v1180 = vmul.f32 %v249, %v1179
        %v1181 = vmul.f32 %v250, %v1179
        %v1182 = vmul.f32 %v251, %v1179
        %v1183 = vmul.f32 %v252, %v1179
        %v1184 = vmul.f32 %v253, %v1179
        %v1185 = vmul.f32 %v254, %v1179
        %v1186 = vmul.f32 %v255, %v1179
        %v1187 = vmul.f32 %v256, %v1179
        %v1188 = vmul.f32 %v257, %v1179
        %v1189 = vmul.f32 %v258, %v1179
        %v1190 = vmul.f32 %v259, %v1179
        %v1191 = vmul.f32 %v260, %v1179
        %v1192 = vmul.f32 %v261, %v1179
        %v1193 = vmul.f32 %v262, %v1179
        %v1194 = vmul.f32 %v263, %v1179
        %v1195 = vmul.f32 %v264, %v1179
        %v1196 = vmul.f32 %v265, %v1179
        %v1197 = vmul.f32 %v266, %v1179
        %v1198 = vmul.f32 %v267, %v1179
        %v1199 = vmul.f32 %v268, %v1179
        %v1200 = vmul.f32 %v269, %v1179
        %v1201 = vmul.f32 %v270, %v1179
        %v1202 = vmul.f32 %v271, %v1179
        %v1203 = vmul.f32 %v272, %v1179
        %v1204 = vmul.f32 %v273, %v1179
        %v1205 = vmul.f32 %v274, %v1179
        %v1206 = vmul.f32 %v275, %v1179
        %v1207 = vmul.f32 %v276, %v1179
        %v1208 = vmul.f32 %v277, %v1179
        %v1209 = vmul.f32 %v278, %v1179
        %v1210 = vmul.f32 %v279, %v1179
        %v1211 = vmul.f32 %v280, %v1179
        %v1212 = vmul.f32 %v281, %v1179
        %v1213 = vmul.f32 %v282, %v1179
        %v1214 = vmul.f32 %v283, %v1179
        %v1215 = vmul.f32 %v284, %v1179
        %v1216 = vmul.f32 %v285, %v1179
        %v1217 = vmul.f32 %v286, %v1179
        %v1218 = vmul.f32 %v287, %v1179
        %v1219 = vmul.f32 %v288, %v1179
        %v1220 = vmul.f32 %v289, %v1179
        %v1221 = vmul.f32 %v290, %v1179
        %v1222 = vmul.f32 %v291, %v1179
        %v1223 = vmul.f32 %v292, %v1179
        %v1224 = vmul.f32 %v293, %v1179
        %v1225 = vmul.f32 %v294, %v1179
        %v1226 = vmul.f32 %v295, %v1179
        %v1227 = vmul.f32 %v296, %v1179
        %v1276 = vrot.slane %v1180, 2
        %v1277 = vrot.slane %v1181, 2
        %v1278 = vsel %vm716, %v1276, %v1277
        %v1279 = vrot.slane %v1182, 2
        %v1280 = vsel %vm716, %v1277, %v1279
        %v1281 = vrot.slane %v1183, 2
        %v1282 = vrot.slane %v1184, 2
        %v1283 = vsel %vm716, %v1281, %v1282
        %v1284 = vrot.slane %v1185, 2
        %v1285 = vsel %vm716, %v1282, %v1284
        %v1286 = vrot.slane %v1186, 2
        %v1287 = vrot.slane %v1187, 2
        %v1288 = vsel %vm716, %v1286, %v1287
        %v1289 = vrot.slane %v1188, 2
        %v1290 = vsel %vm716, %v1287, %v1289
        %v1291 = vrot.slane %v1189, 2
        %v1292 = vrot.slane %v1190, 2
        %v1293 = vsel %vm716, %v1291, %v1292
        %v1294 = vrot.slane %v1191, 2
        %v1295 = vsel %vm716, %v1292, %v1294
        %v1296 = vrot.slane %v1192, 2
        %v1297 = vrot.slane %v1193, 2
        %v1298 = vsel %vm716, %v1296, %v1297
        %v1299 = vrot.slane %v1194, 2
        %v1300 = vsel %vm716, %v1297, %v1299
        %v1301 = vrot.slane %v1195, 2
        %v1302 = vrot.slane %v1196, 2
        %v1303 = vsel %vm716, %v1301, %v1302
        %v1304 = vrot.slane %v1197, 2
        %v1305 = vsel %vm716, %v1302, %v1304
        %v1306 = vrot.slane %v1198, 2
        %v1307 = vrot.slane %v1199, 2
        %v1308 = vsel %vm716, %v1306, %v1307
        %v1309 = vrot.slane %v1200, 2
        %v1310 = vsel %vm716, %v1307, %v1309
        %v1311 = vrot.slane %v1201, 2
        %v1312 = vrot.slane %v1202, 2
        %v1313 = vsel %vm716, %v1311, %v1312
        %v1314 = vrot.slane %v1203, 2
        %v1315 = vsel %vm716, %v1312, %v1314
        %v1316 = vrot.slane %v1204, 2
        %v1317 = vrot.slane %v1205, 2
        %v1318 = vsel %vm716, %v1316, %v1317
        %v1319 = vrot.slane %v1206, 2
        %v1320 = vsel %vm716, %v1317, %v1319
        %v1321 = vrot.slane %v1207, 2
        %v1322 = vrot.slane %v1208, 2
        %v1323 = vsel %vm716, %v1321, %v1322
        %v1324 = vrot.slane %v1209, 2
        %v1325 = vsel %vm716, %v1322, %v1324
        %v1326 = vrot.slane %v1210, 2
        %v1327 = vrot.slane %v1211, 2
        %v1328 = vsel %vm716, %v1326, %v1327
        %v1329 = vrot.slane %v1212, 2
        %v1330 = vsel %vm716, %v1327, %v1329
        %v1331 = vrot.slane %v1213, 2
        %v1332 = vrot.slane %v1214, 2
        %v1333 = vsel %vm716, %v1331, %v1332
        %v1334 = vrot.slane %v1215, 2
        %v1335 = vsel %vm716, %v1332, %v1334
        %v1336 = vrot.slane %v1216, 2
        %v1337 = vrot.slane %v1217, 2
        %v1338 = vsel %vm716, %v1336, %v1337
        %v1339 = vrot.slane %v1218, 2
        %v1340 = vsel %vm716, %v1337, %v1339
        %v1341 = vrot.slane %v1219, 2
        %v1342 = vrot.slane %v1220, 2
        %v1343 = vsel %vm716, %v1341, %v1342
        %v1344 = vrot.slane %v1221, 2
        %v1345 = vsel %vm716, %v1342, %v1344
        %v1346 = vrot.slane %v1222, 2
        %v1347 = vrot.slane %v1223, 2
        %v1348 = vsel %vm716, %v1346, %v1347
        %v1349 = vrot.slane %v1224, 2
        %v1350 = vsel %vm716, %v1347, %v1349
        %v1351 = vrot.slane %v1225, 2
        %v1352 = vrot.slane %v1226, 2
        %v1353 = vsel %vm716, %v1351, %v1352
        %v1354 = vrot.slane %v1227, 2
        %v1355 = vsel %vm716, %v1352, %v1354
        %v1388 = vadd.f32 %v1143, %v1278
        %v1389 = vadd.f32 %v1144, %v1280
        %v1390 = vadd.f32 %v1145, %v1283
        %v1391 = vadd.f32 %v1146, %v1285
        %v1392 = vadd.f32 %v1147, %v1288
        %v1393 = vadd.f32 %v1148, %v1290
        %v1394 = vadd.f32 %v1149, %v1293
        %v1395 = vadd.f32 %v1150, %v1295
        %v1396 = vadd.f32 %v1151, %v1298
        %v1397 = vadd.f32 %v1152, %v1300
        %v1398 = vadd.f32 %v1153, %v1303
        %v1399 = vadd.f32 %v1154, %v1305
        %v1400 = vadd.f32 %v1155, %v1308
        %v1401 = vadd.f32 %v1156, %v1310
        %v1402 = vadd.f32 %v1157, %v1313
        %v1403 = vadd.f32 %v1158, %v1315
        %v1404 = vadd.f32 %v1159, %v1318
        %v1405 = vadd.f32 %v1160, %v1320
        %v1406 = vadd.f32 %v1161, %v1323
        %v1407 = vadd.f32 %v1162, %v1325
        %v1408 = vadd.f32 %v1163, %v1328
        %v1409 = vadd.f32 %v1164, %v1330
        %v1410 = vadd.f32 %v1165, %v1333
        %v1411 = vadd.f32 %v1166, %v1335
        %v1412 = vadd.f32 %v1167, %v1338
        %v1413 = vadd.f32 %v1168, %v1340
        %v1414 = vadd.f32 %v1169, %v1343
        %v1415 = vadd.f32 %v1170, %v1345
        %v1416 = vadd.f32 %v1171, %v1348
        %v1417 = vadd.f32 %v1172, %v1350
        %v1418 = vadd.f32 %v1173, %v1353
        %v1419 = vadd.f32 %v1174, %v1355
        %v1420 = vld [vmem:[%s1 + $0x6] sm:$0x1]
        %v1421 = vlaneseq
        %v1422 = vshrl.u32 %v1421, 7
        %v1423 = vsub.s32 0, %v1422
        %v1424 = vrot.slane %v1420, %v1423
        %v1425 = vmul.f32 %v252, %v1424
        %v1426 = vmul.f32 %v253, %v1424
        %v1427 = vmul.f32 %v255, %v1424
        %v1428 = vmul.f32 %v256, %v1424
        %v1429 = vmul.f32 %v258, %v1424
        %v1430 = vmul.f32 %v259, %v1424
        %v1431 = vmul.f32 %v261, %v1424
        %v1432 = vmul.f32 %v262, %v1424
        %v1433 = vmul.f32 %v264, %v1424
        %v1434 = vmul.f32 %v265, %v1424
        %v1435 = vmul.f32 %v267, %v1424
        %v1436 = vmul.f32 %v268, %v1424
        %v1437 = vmul.f32 %v270, %v1424
        %v1438 = vmul.f32 %v271, %v1424
        %v1439 = vmul.f32 %v273, %v1424
        %v1440 = vmul.f32 %v274, %v1424
        %v1441 = vmul.f32 %v276, %v1424
        %v1442 = vmul.f32 %v277, %v1424
        %v1443 = vmul.f32 %v279, %v1424
        %v1444 = vmul.f32 %v280, %v1424
        %v1445 = vmul.f32 %v282, %v1424
        %v1446 = vmul.f32 %v283, %v1424
        %v1447 = vmul.f32 %v285, %v1424
        %v1448 = vmul.f32 %v286, %v1424
        %v1449 = vmul.f32 %v288, %v1424
        %v1450 = vmul.f32 %v289, %v1424
        %v1451 = vmul.f32 %v291, %v1424
        %v1452 = vmul.f32 %v292, %v1424
        %v1453 = vmul.f32 %v294, %v1424
        %v1454 = vmul.f32 %v295, %v1424
        %v1455 = vmul.f32 %v297, %v1424
        %v1456 = vmul.f32 %v298, %v1424
        %v1457 = vadd.f32 %v1388, %v1425
        %v1458 = vadd.f32 %v1389, %v1426
        %v1459 = vadd.f32 %v1390, %v1427
        %v1460 = vadd.f32 %v1391, %v1428
        %v1461 = vadd.f32 %v1392, %v1429
        %v1462 = vadd.f32 %v1393, %v1430
        %v1463 = vadd.f32 %v1394, %v1431
        %v1464 = vadd.f32 %v1395, %v1432
        %v1465 = vadd.f32 %v1396, %v1433
        %v1466 = vadd.f32 %v1397, %v1434
        %v1467 = vadd.f32 %v1398, %v1435
        %v1468 = vadd.f32 %v1399, %v1436
        %v1469 = vadd.f32 %v1400, %v1437
        %v1470 = vadd.f32 %v1401, %v1438
        %v1471 = vadd.f32 %v1402, %v1439
        %v1472 = vadd.f32 %v1403, %v1440
        %v1473 = vadd.f32 %v1404, %v1441
        %v1474 = vadd.f32 %v1405, %v1442
        %v1475 = vadd.f32 %v1406, %v1443
        %v1476 = vadd.f32 %v1407, %v1444
        %v1477 = vadd.f32 %v1408, %v1445
        %v1478 = vadd.f32 %v1409, %v1446
        %v1479 = vadd.f32 %v1410, %v1447
        %v1480 = vadd.f32 %v1411, %v1448
        %v1481 = vadd.f32 %v1412, %v1449
        %v1482 = vadd.f32 %v1413, %v1450
        %v1483 = vadd.f32 %v1414, %v1451
        %v1484 = vadd.f32 %v1415, %v1452
        %v1485 = vadd.f32 %v1416, %v1453
        %v1486 = vadd.f32 %v1417, %v1454
        %v1487 = vadd.f32 %v1418, %v1455
        %v1488 = vadd.f32 %v1419, %v1456
        %v1489 = vld [vmem:[%s1 + $0x7] sm:$0x1]
        %v1490 = vlaneseq
        %v1491 = vshrl.u32 %v1490, 7
        %v1492 = vsub.s32 0, %v1491
        %v1493 = vrot.slane %v1489, %v1492
        %v1494 = vmul.f32 %v252, %v1493
        %v1495 = vmul.f32 %v253, %v1493
        %v1496 = vmul.f32 %v254, %v1493
        %v1497 = vmul.f32 %v255, %v1493
        %v1498 = vmul.f32 %v256, %v1493
        %v1499 = vmul.f32 %v257, %v1493
        %v1500 = vmul.f32 %v258, %v1493
        %v1501 = vmul.f32 %v259, %v1493
        %v1502 = vmul.f32 %v260, %v1493
        %v1503 = vmul.f32 %v261, %v1493
        %v1504 = vmul.f32 %v262, %v1493
        %v1505 = vmul.f32 %v263, %v1493
        %v1506 = vmul.f32 %v264, %v1493
        %v1507 = vmul.f32 %v265, %v1493
        %v1508 = vmul.f32 %v266, %v1493
        %v1509 = vmul.f32 %v267, %v1493
        %v1510 = vmul.f32 %v268, %v1493
        %v1511 = vmul.f32 %v269, %v1493
        %v1512 = vmul.f32 %v270, %v1493
        %v1513 = vmul.f32 %v271, %v1493
        %v1514 = vmul.f32 %v272, %v1493
        %v1515 = vmul.f32 %v273, %v1493
        %v1516 = vmul.f32 %v274, %v1493
        %v1517 = vmul.f32 %v275, %v1493
        %v1518 = vmul.f32 %v276, %v1493
        %v1519 = vmul.f32 %v277, %v1493
        %v1520 = vmul.f32 %v278, %v1493
        %v1521 = vmul.f32 %v279, %v1493
        %v1522 = vmul.f32 %v280, %v1493
        %v1523 = vmul.f32 %v281, %v1493
        %v1524 = vmul.f32 %v282, %v1493
        %v1525 = vmul.f32 %v283, %v1493
        %v1526 = vmul.f32 %v284, %v1493
        %v1527 = vmul.f32 %v285, %v1493
        %v1528 = vmul.f32 %v286, %v1493
        %v1529 = vmul.f32 %v287, %v1493
        %v1530 = vmul.f32 %v288, %v1493
        %v1531 = vmul.f32 %v289, %v1493
        %v1532 = vmul.f32 %v290, %v1493
        %v1533 = vmul.f32 %v291, %v1493
        %v1534 = vmul.f32 %v292, %v1493
        %v1535 = vmul.f32 %v293, %v1493
        %v1536 = vmul.f32 %v294, %v1493
        %v1537 = vmul.f32 %v295, %v1493
        %v1538 = vmul.f32 %v296, %v1493
        %v1539 = vmul.f32 %v297, %v1493
        %v1540 = vmul.f32 %v298, %v1493
        %v1541 = vmul.f32 %v299, %v1493
        %v1590 = vrot.slane %v1494, 1
        %v1591 = vrot.slane %v1495, 1
        %v1592 = vsel %vm470, %v1590, %v1591
        %v1593 = vrot.slane %v1496, 1
        %v1594 = vsel %vm470, %v1591, %v1593
        %v1595 = vrot.slane %v1497, 1
        %v1596 = vrot.slane %v1498, 1
        %v1597 = vsel %vm470, %v1595, %v1596
        %v1598 = vrot.slane %v1499, 1
        %v1599 = vsel %vm470, %v1596, %v1598
        %v1600 = vrot.slane %v1500, 1
        %v1601 = vrot.slane %v1501, 1
        %v1602 = vsel %vm470, %v1600, %v1601
        %v1603 = vrot.slane %v1502, 1
        %v1604 = vsel %vm470, %v1601, %v1603
        %v1605 = vrot.slane %v1503, 1
        %v1606 = vrot.slane %v1504, 1
        %v1607 = vsel %vm470, %v1605, %v1606
        %v1608 = vrot.slane %v1505, 1
        %v1609 = vsel %vm470, %v1606, %v1608
        %v1610 = vrot.slane %v1506, 1
        %v1611 = vrot.slane %v1507, 1
        %v1612 = vsel %vm470, %v1610, %v1611
        %v1613 = vrot.slane %v1508, 1
        %v1614 = vsel %vm470, %v1611, %v1613
        %v1615 = vrot.slane %v1509, 1
        %v1616 = vrot.slane %v1510, 1
        %v1617 = vsel %vm470, %v1615, %v1616
        %v1618 = vrot.slane %v1511, 1
        %v1619 = vsel %vm470, %v1616, %v1618
        %v1620 = vrot.slane %v1512, 1
        %v1621 = vrot.slane %v1513, 1
        %v1622 = vsel %vm470, %v1620, %v1621
        %v1623 = vrot.slane %v1514, 1
        %v1624 = vsel %vm470, %v1621, %v1623
        %v1625 = vrot.slane %v1515, 1
        %v1626 = vrot.slane %v1516, 1
        %v1627 = vsel %vm470, %v1625, %v1626
        %v1628 = vrot.slane %v1517, 1
        %v1629 = vsel %vm470, %v1626, %v1628
        %v1630 = vrot.slane %v1518, 1
        %v1631 = vrot.slane %v1519, 1
        %v1632 = vsel %vm470, %v1630, %v1631
        %v1633 = vrot.slane %v1520, 1
        %v1634 = vsel %vm470, %v1631, %v1633
        %v1635 = vrot.slane %v1521, 1
        %v1636 = vrot.slane %v1522, 1
        %v1637 = vsel %vm470, %v1635, %v1636
        %v1638 = vrot.slane %v1523, 1
        %v1639 = vsel %vm470, %v1636, %v1638
        %v1640 = vrot.slane %v1524, 1
        %v1641 = vrot.slane %v1525, 1
        %v1642 = vsel %vm470, %v1640, %v1641
        %v1643 = vrot.slane %v1526, 1
        %v1644 = vsel %vm470, %v1641, %v1643
        %v1645 = vrot.slane %v1527, 1
        %v1646 = vrot.slane %v1528, 1
        %v1647 = vsel %vm470, %v1645, %v1646
        %v1648 = vrot.slane %v1529, 1
        %v1649 = vsel %vm470, %v1646, %v1648
        %v1650 = vrot.slane %v1530, 1
        %v1651 = vrot.slane %v1531, 1
        %v1652 = vsel %vm470, %v1650, %v1651
        %v1653 = vrot.slane %v1532, 1
        %v1654 = vsel %vm470, %v1651, %v1653
        %v1655 = vrot.slane %v1533, 1
        %v1656 = vrot.slane %v1534, 1
        %v1657 = vsel %vm470, %v1655, %v1656
        %v1658 = vrot.slane %v1535, 1
        %v1659 = vsel %vm470, %v1656, %v1658
        %v1660 = vrot.slane %v1536, 1
        %v1661 = vrot.slane %v1537, 1
        %v1662 = vsel %vm470, %v1660, %v1661
        %v1663 = vrot.slane %v1538, 1
        %v1664 = vsel %vm470, %v1661, %v1663
        %v1665 = vrot.slane %v1539, 1
        %v1666 = vrot.slane %v1540, 1
        %v1667 = vsel %vm470, %v1665, %v1666
        %v1668 = vrot.slane %v1541, 1
        %v1669 = vsel %vm470, %v1666, %v1668
        %v1702 = vadd.f32 %v1457, %v1592
        %v1703 = vadd.f32 %v1458, %v1594
        %v1704 = vadd.f32 %v1459, %v1597
        %v1705 = vadd.f32 %v1460, %v1599
        %v1706 = vadd.f32 %v1461, %v1602
        %v1707 = vadd.f32 %v1462, %v1604
        %v1708 = vadd.f32 %v1463, %v1607
        %v1709 = vadd.f32 %v1464, %v1609
        %v1710 = vadd.f32 %v1465, %v1612
        %v1711 = vadd.f32 %v1466, %v1614
        %v1712 = vadd.f32 %v1467, %v1617
        %v1713 = vadd.f32 %v1468, %v1619
        %v1714 = vadd.f32 %v1469, %v1622
        %v1715 = vadd.f32 %v1470, %v1624
        %v1716 = vadd.f32 %v1471, %v1627
        %v1717 = vadd.f32 %v1472, %v1629
        %v1718 = vadd.f32 %v1473, %v1632
        %v1719 = vadd.f32 %v1474, %v1634
        %v1720 = vadd.f32 %v1475, %v1637
        %v1721 = vadd.f32 %v1476, %v1639
        %v1722 = vadd.f32 %v1477, %v1642
        %v1723 = vadd.f32 %v1478, %v1644
        %v1724 = vadd.f32 %v1479, %v1647
        %v1725 = vadd.f32 %v1480, %v1649
        %v1726 = vadd.f32 %v1481, %v1652
        %v1727 = vadd.f32 %v1482, %v1654
        %v1728 = vadd.f32 %v1483, %v1657
        %v1729 = vadd.f32 %v1484, %v1659
        %v1730 = vadd.f32 %v1485, %v1662
        %v1731 = vadd.f32 %v1486, %v1664
        %v1732 = vadd.f32 %v1487, %v1667
        %v1733 = vadd.f32 %v1488, %v1669
        %v1734 = vld [vmem:[%s1 + $0x8] sm:$0x1]
        %v1735 = vlaneseq
        %v1736 = vshrl.u32 %v1735, 7
        %v1737 = vsub.s32 0, %v1736
        %v1738 = vrot.slane %v1734, %v1737
        %v1739 = vmul.f32 %v252, %v1738
        %v1740 = vmul.f32 %v253, %v1738
        %v1741 = vmul.f32 %v254, %v1738
        %v1742 = vmul.f32 %v255, %v1738
        %v1743 = vmul.f32 %v256, %v1738
        %v1744 = vmul.f32 %v257, %v1738
        %v1745 = vmul.f32 %v258, %v1738
        %v1746 = vmul.f32 %v259, %v1738
        %v1747 = vmul.f32 %v260, %v1738
        %v1748 = vmul.f32 %v261, %v1738
        %v1749 = vmul.f32 %v262, %v1738
        %v1750 = vmul.f32 %v263, %v1738
        %v1751 = vmul.f32 %v264, %v1738
        %v1752 = vmul.f32 %v265, %v1738
        %v1753 = vmul.f32 %v266, %v1738
        %v1754 = vmul.f32 %v267, %v1738
        %v1755 = vmul.f32 %v268, %v1738
        %v1756 = vmul.f32 %v269, %v1738
        %v1757 = vmul.f32 %v270, %v1738
        %v1758 = vmul.f32 %v271, %v1738
        %v1759 = vmul.f32 %v272, %v1738
        %v1760 = vmul.f32 %v273, %v1738
        %v1761 = vmul.f32 %v274, %v1738
        %v1762 = vmul.f32 %v275, %v1738
        %v1763 = vmul.f32 %v276, %v1738
        %v1764 = vmul.f32 %v277, %v1738
        %v1765 = vmul.f32 %v278, %v1738
        %v1766 = vmul.f32 %v279, %v1738
        %v1767 = vmul.f32 %v280, %v1738
        %v1768 = vmul.f32 %v281, %v1738
        %v1769 = vmul.f32 %v282, %v1738
        %v1770 = vmul.f32 %v283, %v1738
        %v1771 = vmul.f32 %v284, %v1738
        %v1772 = vmul.f32 %v285, %v1738
        %v1773 = vmul.f32 %v286, %v1738
        %v1774 = vmul.f32 %v287, %v1738
        %v1775 = vmul.f32 %v288, %v1738
        %v1776 = vmul.f32 %v289, %v1738
        %v1777 = vmul.f32 %v290, %v1738
        %v1778 = vmul.f32 %v291, %v1738
        %v1779 = vmul.f32 %v292, %v1738
        %v1780 = vmul.f32 %v293, %v1738
        %v1781 = vmul.f32 %v294, %v1738
        %v1782 = vmul.f32 %v295, %v1738
        %v1783 = vmul.f32 %v296, %v1738
        %v1784 = vmul.f32 %v297, %v1738
        %v1785 = vmul.f32 %v298, %v1738
        %v1786 = vmul.f32 %v299, %v1738
        %v1835 = vrot.slane %v1739, 2
        %v1836 = vrot.slane %v1740, 2
        %v1837 = vsel %vm716, %v1835, %v1836
        %v1838 = vrot.slane %v1741, 2
        %v1839 = vsel %vm716, %v1836, %v1838
        %v1840 = vrot.slane %v1742, 2
        %v1841 = vrot.slane %v1743, 2
        %v1842 = vsel %vm716, %v1840, %v1841
        %v1843 = vrot.slane %v1744, 2
        %v1844 = vsel %vm716, %v1841, %v1843
        %v1845 = vrot.slane %v1745, 2
        %v1846 = vrot.slane %v1746, 2
        %v1847 = vsel %vm716, %v1845, %v1846
        %v1848 = vrot.slane %v1747, 2
        %v1849 = vsel %vm716, %v1846, %v1848
        %v1850 = vrot.slane %v1748, 2
        %v1851 = vrot.slane %v1749, 2
        %v1852 = vsel %vm716, %v1850, %v1851
        %v1853 = vrot.slane %v1750, 2
        %v1854 = vsel %vm716, %v1851, %v1853
        %v1855 = vrot.slane %v1751, 2
        %v1856 = vrot.slane %v1752, 2
        %v1857 = vsel %vm716, %v1855, %v1856
        %v1858 = vrot.slane %v1753, 2
        %v1859 = vsel %vm716, %v1856, %v1858
        %v1860 = vrot.slane %v1754, 2
        %v1861 = vrot.slane %v1755, 2
        %v1862 = vsel %vm716, %v1860, %v1861
        %v1863 = vrot.slane %v1756, 2
        %v1864 = vsel %vm716, %v1861, %v1863
        %v1865 = vrot.slane %v1757, 2
        %v1866 = vrot.slane %v1758, 2
        %v1867 = vsel %vm716, %v1865, %v1866
        %v1868 = vrot.slane %v1759, 2
        %v1869 = vsel %vm716, %v1866, %v1868
        %v1870 = vrot.slane %v1760, 2
        %v1871 = vrot.slane %v1761, 2
        %v1872 = vsel %vm716, %v1870, %v1871
        %v1873 = vrot.slane %v1762, 2
        %v1874 = vsel %vm716, %v1871, %v1873
        %v1875 = vrot.slane %v1763, 2
        %v1876 = vrot.slane %v1764, 2
        %v1877 = vsel %vm716, %v1875, %v1876
        %v1878 = vrot.slane %v1765, 2
        %v1879 = vsel %vm716, %v1876, %v1878
        %v1880 = vrot.slane %v1766, 2
        %v1881 = vrot.slane %v1767, 2
        %v1882 = vsel %vm716, %v1880, %v1881
        %v1883 = vrot.slane %v1768, 2
        %v1884 = vsel %vm716, %v1881, %v1883
        %v1885 = vrot.slane %v1769, 2
        %v1886 = vrot.slane %v1770, 2
        %v1887 = vsel %vm716, %v1885, %v1886
        %v1888 = vrot.slane %v1771, 2
        %v1889 = vsel %vm716, %v1886, %v1888
        %v1890 = vrot.slane %v1772, 2
        %v1891 = vrot.slane %v1773, 2
        %v1892 = vsel %vm716, %v1890, %v1891
        %v1893 = vrot.slane %v1774, 2
        %v1894 = vsel %vm716, %v1891, %v1893
        %v1895 = vrot.slane %v1775, 2
        %v1896 = vrot.slane %v1776, 2
        %v1897 = vsel %vm716, %v1895, %v1896
        %v1898 = vrot.slane %v1777, 2
        %v1899 = vsel %vm716, %v1896, %v1898
        %v1900 = vrot.slane %v1778, 2
        %v1901 = vrot.slane %v1779, 2
        %v1902 = vsel %vm716, %v1900, %v1901
        %v1903 = vrot.slane %v1780, 2
        %v1904 = vsel %vm716, %v1901, %v1903
        %v1905 = vrot.slane %v1781, 2
        %v1906 = vrot.slane %v1782, 2
        %v1907 = vsel %vm716, %v1905, %v1906
        %v1908 = vrot.slane %v1783, 2
        %v1909 = vsel %vm716, %v1906, %v1908
        %v1910 = vrot.slane %v1784, 2
        %v1911 = vrot.slane %v1785, 2
        %v1912 = vsel %vm716, %v1910, %v1911
        %v1913 = vrot.slane %v1786, 2
        %v1914 = vsel %vm716, %v1911, %v1913
        %v1947 = vadd.f32 %v1702, %v1837
        %v1948 = vadd.f32 %v1703, %v1839
        %v1949 = vadd.f32 %v1704, %v1842
        %v1950 = vadd.f32 %v1705, %v1844
        %v1951 = vadd.f32 %v1706, %v1847
        %v1952 = vadd.f32 %v1707, %v1849
        %v1953 = vadd.f32 %v1708, %v1852
        %v1954 = vadd.f32 %v1709, %v1854
        %v1955 = vadd.f32 %v1710, %v1857
        %v1956 = vadd.f32 %v1711, %v1859
        %v1957 = vadd.f32 %v1712, %v1862
        %v1958 = vadd.f32 %v1713, %v1864
        %v1959 = vadd.f32 %v1714, %v1867
        %v1960 = vadd.f32 %v1715, %v1869
        %v1961 = vadd.f32 %v1716, %v1872
        %v1962 = vadd.f32 %v1717, %v1874
        %v1963 = vadd.f32 %v1718, %v1877
        %v1964 = vadd.f32 %v1719, %v1879
        %v1965 = vadd.f32 %v1720, %v1882
        %v1966 = vadd.f32 %v1721, %v1884
        %v1967 = vadd.f32 %v1722, %v1887
        %v1968 = vadd.f32 %v1723, %v1889
        %v1969 = vadd.f32 %v1724, %v1892
        %v1970 = vadd.f32 %v1725, %v1894
        %v1971 = vadd.f32 %v1726, %v1897
        %v1972 = vadd.f32 %v1727, %v1899
        %v1973 = vadd.f32 %v1728, %v1902
        %v1974 = vadd.f32 %v1729, %v1904
        %v1975 = vadd.f32 %v1730, %v1907
        %v1976 = vadd.f32 %v1731, %v1909
        %v1977 = vadd.f32 %v1732, %v1912
        %v1978 = vadd.f32 %v1733, %v1914
        %s1979 = sadd.s32 %s24, 2
        %s1980 = smul.u32 %s1979, 432
        %s1981 = scalar_lea.vmem %s236, %s1980
        %v1982 = vld [vmem:[%s1981] sm:$0xff]
        %v1983 = vld [vmem:[%s1981 + $0x8] sm:$0xff]
        %v1984 = vld [vmem:[%s1981 + $0x10] sm:$0x3]
        %v1985 = vld [vmem:[%s1981 + $0x18] sm:$0xff]
        %v1986 = vld [vmem:[%s1981 + $0x20] sm:$0xff]
        %v1987 = vld [vmem:[%s1981 + $0x28] sm:$0x3]
        %v1988 = vld [vmem:[%s1981 + $0x30] sm:$0xff]
        %v1989 = vld [vmem:[%s1981 + $0x38] sm:$0xff]
        %v1990 = vld [vmem:[%s1981 + $0x40] sm:$0x3]
        %v1991 = vld [vmem:[%s1981 + $0x48] sm:$0xff]
        %v1992 = vld [vmem:[%s1981 + $0x50] sm:$0xff]
        %v1993 = vld [vmem:[%s1981 + $0x58] sm:$0x3]
        %v1994 = vld [vmem:[%s1981 + $0x60] sm:$0xff]
        %v1995 = vld [vmem:[%s1981 + $0x68] sm:$0xff]
        %v1996 = vld [vmem:[%s1981 + $0x70] sm:$0x3]
        %v1997 = vld [vmem:[%s1981 + $0x78] sm:$0xff]
        %v1998 = vld [vmem:[%s1981 + $0x80] sm:$0xff]
        %v1999 = vld [vmem:[%s1981 + $0x88] sm:$0x3]
        %v2000 = vld [vmem:[%s1981 + $0x90] sm:$0xff]
        %v2001 = vld [vmem:[%s1981 + $0x98] sm:$0xff]
        %v2002 = vld [vmem:[%s1981 + $0xa0] sm:$0x3]
        %v2003 = vld [vmem:[%s1981 + $0xa8] sm:$0xff]
        %v2004 = vld [vmem:[%s1981 + $0xb0] sm:$0xff]
        %v2005 = vld [vmem:[%s1981 + $0xb8] sm:$0x3]
        %v2006 = vld [vmem:[%s1981 + $0xc0] sm:$0xff]
        %v2007 = vld [vmem:[%s1981 + $0xc8] sm:$0xff]
        %v2008 = vld [vmem:[%s1981 + $0xd0] sm:$0x3]
        %v2009 = vld [vmem:[%s1981 + $0xd8] sm:$0xff]
        %v2010 = vld [vmem:[%s1981 + $0xe0] sm:$0xff]
        %v2011 = vld [vmem:[%s1981 + $0xe8] sm:$0x3]
        %v2012 = vld [vmem:[%s1981 + $0xf0] sm:$0xff]
        %v2013 = vld [vmem:[%s1981 + $0xf8] sm:$0xff]
        %v2014 = vld [vmem:[%s1981 + $0x100] sm:$0x3]
        %v2015 = vld [vmem:[%s1981 + $0x108] sm:$0xff]
        %v2016 = vld [vmem:[%s1981 + $0x110] sm:$0xff]
        %v2017 = vld [vmem:[%s1981 + $0x118] sm:$0x3]
        %v2018 = vld [vmem:[%s1981 + $0x120] sm:$0xff]
        %v2019 = vld [vmem:[%s1981 + $0x128] sm:$0xff]
        %v2020 = vld [vmem:[%s1981 + $0x130] sm:$0x3]
        %v2021 = vld [vmem:[%s1981 + $0x138] sm:$0xff]
        %v2022 = vld [vmem:[%s1981 + $0x140] sm:$0xff]
        %v2023 = vld [vmem:[%s1981 + $0x148] sm:$0x3]
        %v2024 = vld [vmem:[%s1981 + $0x150] sm:$0xff]
        %v2025 = vld [vmem:[%s1981 + $0x158] sm:$0xff]
        %v2026 = vld [vmem:[%s1981 + $0x160] sm:$0x3]
        %v2027 = vld [vmem:[%s1981 + $0x168] sm:$0xff]
        %v2028 = vld [vmem:[%s1981 + $0x170] sm:$0xff]
        %v2029 = vld [vmem:[%s1981 + $0x178] sm:$0x3]
        %v2030 = vld [vmem:[%s1981 + $0x180] sm:$0xff]
        %v2031 = vld [vmem:[%s1981 + $0x188] sm:$0xff]
        %v2032 = vld [vmem:[%s1981 + $0x190] sm:$0x3]
        %v2033 = vld [vmem:[%s1981 + $0x198] sm:$0xff]
        %v2034 = vld [vmem:[%s1981 + $0x1a0] sm:$0xff]
        %v2035 = vld [vmem:[%s1981 + $0x1a8] sm:$0x3]
        %v2036 = vld [vmem:[%s1 + $0x9] sm:$0x1]
        %v2037 = vlaneseq
        %v2038 = vshrl.u32 %v2037, 7
        %v2039 = vsub.s32 0, %v2038
        %v2040 = vrot.slane %v2036, %v2039
        %v2041 = vmul.f32 %v1982, %v2040
        %v2042 = vmul.f32 %v1983, %v2040
        %v2043 = vmul.f32 %v1985, %v2040
        %v2044 = vmul.f32 %v1986, %v2040
        %v2045 = vmul.f32 %v1988, %v2040
        %v2046 = vmul.f32 %v1989, %v2040
        %v2047 = vmul.f32 %v1991, %v2040
        %v2048 = vmul.f32 %v1992, %v2040
        %v2049 = vmul.f32 %v1994, %v2040
        %v2050 = vmul.f32 %v1995, %v2040
        %v2051 = vmul.f32 %v1997, %v2040
        %v2052 = vmul.f32 %v1998, %v2040
        %v2053 = vmul.f32 %v2000, %v2040
        %v2054 = vmul.f32 %v2001, %v2040
        %v2055 = vmul.f32 %v2003, %v2040
        %v2056 = vmul.f32 %v2004, %v2040
        %v2057 = vmul.f32 %v2006, %v2040
        %v2058 = vmul.f32 %v2007, %v2040
        %v2059 = vmul.f32 %v2009, %v2040
        %v2060 = vmul.f32 %v2010, %v2040
        %v2061 = vmul.f32 %v2012, %v2040
        %v2062 = vmul.f32 %v2013, %v2040
        %v2063 = vmul.f32 %v2015, %v2040
        %v2064 = vmul.f32 %v2016, %v2040
        %v2065 = vmul.f32 %v2018, %v2040
        %v2066 = vmul.f32 %v2019, %v2040
        %v2067 = vmul.f32 %v2021, %v2040
        %v2068 = vmul.f32 %v2022, %v2040
        %v2069 = vmul.f32 %v2024, %v2040
        %v2070 = vmul.f32 %v2025, %v2040
        %v2071 = vmul.f32 %v2027, %v2040
        %v2072 = vmul.f32 %v2028, %v2040
        %v2073 = vadd.f32 %v1947, %v2041
        %v2074 = vadd.f32 %v1948, %v2042
        %v2075 = vadd.f32 %v1949, %v2043
        %v2076 = vadd.f32 %v1950, %v2044
        %v2077 = vadd.f32 %v1951, %v2045
        %v2078 = vadd.f32 %v1952, %v2046
        %v2079 = vadd.f32 %v1953, %v2047
        %v2080 = vadd.f32 %v1954, %v2048
        %v2081 = vadd.f32 %v1955, %v2049
        %v2082 = vadd.f32 %v1956, %v2050
        %v2083 = vadd.f32 %v1957, %v2051
        %v2084 = vadd.f32 %v1958, %v2052
        %v2085 = vadd.f32 %v1959, %v2053
        %v2086 = vadd.f32 %v1960, %v2054
        %v2087 = vadd.f32 %v1961, %v2055
        %v2088 = vadd.f32 %v1962, %v2056
        %v2089 = vadd.f32 %v1963, %v2057
        %v2090 = vadd.f32 %v1964, %v2058
        %v2091 = vadd.f32 %v1965, %v2059
        %v2092 = vadd.f32 %v1966, %v2060
        %v2093 = vadd.f32 %v1967, %v2061
        %v2094 = vadd.f32 %v1968, %v2062
        %v2095 = vadd.f32 %v1969, %v2063
        %v2096 = vadd.f32 %v1970, %v2064
        %v2097 = vadd.f32 %v1971, %v2065
        %v2098 = vadd.f32 %v1972, %v2066
        %v2099 = vadd.f32 %v1973, %v2067
        %v2100 = vadd.f32 %v1974, %v2068
        %v2101 = vadd.f32 %v1975, %v2069
        %v2102 = vadd.f32 %v1976, %v2070
        %v2103 = vadd.f32 %v1977, %v2071
        %v2104 = vadd.f32 %v1978, %v2072
        %v2105 = vld [vmem:[%s1 + $0xa] sm:$0x1]
        %v2106 = vlaneseq
        %v2107 = vshrl.u32 %v2106, 7
        %v2108 = vsub.s32 0, %v2107
        %v2109 = vrot.slane %v2105, %v2108
        %v2110 = vmul.f32 %v1982, %v2109
        %v2111 = vmul.f32 %v1983, %v2109
        %v2112 = vmul.f32 %v1984, %v2109
        %v2113 = vmul.f32 %v1985, %v2109
        %v2114 = vmul.f32 %v1986, %v2109
        %v2115 = vmul.f32 %v1987, %v2109
        %v2116 = vmul.f32 %v1988, %v2109
        %v2117 = vmul.f32 %v1989, %v2109
        %v2118 = vmul.f32 %v1990, %v2109
        %v2119 = vmul.f32 %v1991, %v2109
        %v2120 = vmul.f32 %v1992, %v2109
        %v2121 = vmul.f32 %v1993, %v2109
        %v2122 = vmul.f32 %v1994, %v2109
        %v2123 = vmul.f32 %v1995, %v2109
        %v2124 = vmul.f32 %v1996, %v2109
        %v2125 = vmul.f32 %v1997, %v2109
        %v2126 = vmul.f32 %v1998, %v2109
        %v2127 = vmul.f32 %v1999, %v2109
        %v2128 = vmul.f32 %v2000, %v2109
        %v2129 = vmul.f32 %v2001, %v2109
        %v2130 = vmul.f32 %v2002, %v2109
        %v2131 = vmul.f32 %v2003, %v2109
        %v2132 = vmul.f32 %v2004, %v2109
        %v2133 = vmul.f32 %v2005, %v2109
        %v2134 = vmul.f32 %v2006, %v2109
        %v2135 = vmul.f32 %v2007, %v2109
        %v2136 = vmul.f32 %v2008, %v2109
        %v2137 = vmul.f32 %v2009, %v2109
        %v2138 = vmul.f32 %v2010, %v2109
        %v2139 = vmul.f32 %v2011, %v2109
        %v2140 = vmul.f32 %v2012, %v2109
        %v2141 = vmul.f32 %v2013, %v2109
        %v2142 = vmul.f32 %v2014, %v2109
        %v2143 = vmul.f32 %v2015, %v2109
        %v2144 = vmul.f32 %v2016, %v2109
        %v2145 = vmul.f32 %v2017, %v2109
        %v2146 = vmul.f32 %v2018, %v2109
        %v2147 = vmul.f32 %v2019, %v2109
        %v2148 = vmul.f32 %v2020, %v2109
        %v2149 = vmul.f32 %v2021, %v2109
        %v2150 = vmul.f32 %v2022, %v2109
        %v2151 = vmul.f32 %v2023, %v2109
        %v2152 = vmul.f32 %v2024, %v2109
        %v2153 = vmul.f32 %v2025, %v2109
        %v2154 = vmul.f32 %v2026, %v2109
        %v2155 = vmul.f32 %v2027, %v2109
        %v2156 = vmul.f32 %v2028, %v2109
        %v2157 = vmul.f32 %v2029, %v2109
        %v2206 = vrot.slane %v2110, 1
        %v2207 = vrot.slane %v2111, 1
        %v2208 = vsel %vm470, %v2206, %v2207
        %v2209 = vrot.slane %v2112, 1
        %v2210 = vsel %vm470, %v2207, %v2209
        %v2211 = vrot.slane %v2113, 1
        %v2212 = vrot.slane %v2114, 1
        %v2213 = vsel %vm470, %v2211, %v2212
        %v2214 = vrot.slane %v2115, 1
        %v2215 = vsel %vm470, %v2212, %v2214
        %v2216 = vrot.slane %v2116, 1
        %v2217 = vrot.slane %v2117, 1
        %v2218 = vsel %vm470, %v2216, %v2217
        %v2219 = vrot.slane %v2118, 1
        %v2220 = vsel %vm470, %v2217, %v2219
        %v2221 = vrot.slane %v2119, 1
        %v2222 = vrot.slane %v2120, 1
        %v2223 = vsel %vm470, %v2221, %v2222
        %v2224 = vrot.slane %v2121, 1
        %v2225 = vsel %vm470, %v2222, %v2224
        %v2226 = vrot.slane %v2122, 1
        %v2227 = vrot.slane %v2123, 1
        %v2228 = vsel %vm470, %v2226, %v2227
        %v2229 = vrot.slane %v2124, 1
        %v2230 = vsel %vm470, %v2227, %v2229
        %v2231 = vrot.slane %v2125, 1
        %v2232 = vrot.slane %v2126, 1
        %v2233 = vsel %vm470, %v2231, %v2232
        %v2234 = vrot.slane %v2127, 1
        %v2235 = vsel %vm470, %v2232, %v2234
        %v2236 = vrot.slane %v2128, 1
        %v2237 = vrot.slane %v2129, 1
        %v2238 = vsel %vm470, %v2236, %v2237
        %v2239 = vrot.slane %v2130, 1
        %v2240 = vsel %vm470, %v2237, %v2239
        %v2241 = vrot.slane %v2131, 1
        %v2242 = vrot.slane %v2132, 1
        %v2243 = vsel %vm470, %v2241, %v2242
        %v2244 = vrot.slane %v2133, 1
        %v2245 = vsel %vm470, %v2242, %v2244
        %v2246 = vrot.slane %v2134, 1
        %v2247 = vrot.slane %v2135, 1
        %v2248 = vsel %vm470, %v2246, %v2247
        %v2249 = vrot.slane %v2136, 1
        %v2250 = vsel %vm470, %v2247, %v2249
        %v2251 = vrot.slane %v2137, 1
        %v2252 = vrot.slane %v2138, 1
        %v2253 = vsel %vm470, %v2251, %v2252
        %v2254 = vrot.slane %v2139, 1
        %v2255 = vsel %vm470, %v2252, %v2254
        %v2256 = vrot.slane %v2140, 1
        %v2257 = vrot.slane %v2141, 1
        %v2258 = vsel %vm470, %v2256, %v2257
        %v2259 = vrot.slane %v2142, 1
        %v2260 = vsel %vm470, %v2257, %v2259
        %v2261 = vrot.slane %v2143, 1
        %v2262 = vrot.slane %v2144, 1
        %v2263 = vsel %vm470, %v2261, %v2262
        %v2264 = vrot.slane %v2145, 1
        %v2265 = vsel %vm470, %v2262, %v2264
        %v2266 = vrot.slane %v2146, 1
        %v2267 = vrot.slane %v2147, 1
        %v2268 = vsel %vm470, %v2266, %v2267
        %v2269 = vrot.slane %v2148, 1
        %v2270 = vsel %vm470, %v2267, %v2269
        %v2271 = vrot.slane %v2149, 1
        %v2272 = vrot.slane %v2150, 1
        %v2273 = vsel %vm470, %v2271, %v2272
        %v2274 = vrot.slane %v2151, 1
        %v2275 = vsel %vm470, %v2272, %v2274
        %v2276 = vrot.slane %v2152, 1
        %v2277 = vrot.slane %v2153, 1
        %v2278 = vsel %vm470, %v2276, %v2277
        %v2279 = vrot.slane %v2154, 1
        %v2280 = vsel %vm470, %v2277, %v2279
        %v2281 = vrot.slane %v2155, 1
        %v2282 = vrot.slane %v2156, 1
        %v2283 = vsel %vm470, %v2281, %v2282
        %v2284 = vrot.slane %v2157, 1
        %v2285 = vsel %vm470, %v2282, %v2284
        %v2318 = vadd.f32 %v2073, %v2208
        %v2319 = vadd.f32 %v2074, %v2210
        %v2320 = vadd.f32 %v2075, %v2213
        %v2321 = vadd.f32 %v2076, %v2215
        %v2322 = vadd.f32 %v2077, %v2218
        %v2323 = vadd.f32 %v2078, %v2220
        %v2324 = vadd.f32 %v2079, %v2223
        %v2325 = vadd.f32 %v2080, %v2225
        %v2326 = vadd.f32 %v2081, %v2228
        %v2327 = vadd.f32 %v2082, %v2230
        %v2328 = vadd.f32 %v2083, %v2233
        %v2329 = vadd.f32 %v2084, %v2235
        %v2330 = vadd.f32 %v2085, %v2238
        %v2331 = vadd.f32 %v2086, %v2240
        %v2332 = vadd.f32 %v2087, %v2243
        %v2333 = vadd.f32 %v2088, %v2245
        %v2334 = vadd.f32 %v2089, %v2248
        %v2335 = vadd.f32 %v2090, %v2250
        %v2336 = vadd.f32 %v2091, %v2253
        %v2337 = vadd.f32 %v2092, %v2255
        %v2338 = vadd.f32 %v2093, %v2258
        %v2339 = vadd.f32 %v2094, %v2260
        %v2340 = vadd.f32 %v2095, %v2263
        %v2341 = vadd.f32 %v2096, %v2265
        %v2342 = vadd.f32 %v2097, %v2268
        %v2343 = vadd.f32 %v2098, %v2270
        %v2344 = vadd.f32 %v2099, %v2273
        %v2345 = vadd.f32 %v2100, %v2275
        %v2346 = vadd.f32 %v2101, %v2278
        %v2347 = vadd.f32 %v2102, %v2280
        %v2348 = vadd.f32 %v2103, %v2283
        %v2349 = vadd.f32 %v2104, %v2285
        %v2350 = vld [vmem:[%s1 + $0xb] sm:$0x1]
        %v2351 = vlaneseq
        %v2352 = vshrl.u32 %v2351, 7
        %v2353 = vsub.s32 0, %v2352
        %v2354 = vrot.slane %v2350, %v2353
        %v2355 = vmul.f32 %v1982, %v2354
        %v2356 = vmul.f32 %v1983, %v2354
        %v2357 = vmul.f32 %v1984, %v2354
        %v2358 = vmul.f32 %v1985, %v2354
        %v2359 = vmul.f32 %v1986, %v2354
        %v2360 = vmul.f32 %v1987, %v2354
        %v2361 = vmul.f32 %v1988, %v2354
        %v2362 = vmul.f32 %v1989, %v2354
        %v2363 = vmul.f32 %v1990, %v2354
        %v2364 = vmul.f32 %v1991, %v2354
        %v2365 = vmul.f32 %v1992, %v2354
        %v2366 = vmul.f32 %v1993, %v2354
        %v2367 = vmul.f32 %v1994, %v2354
        %v2368 = vmul.f32 %v1995, %v2354
        %v2369 = vmul.f32 %v1996, %v2354
        %v2370 = vmul.f32 %v1997, %v2354
        %v2371 = vmul.f32 %v1998, %v2354
        %v2372 = vmul.f32 %v1999, %v2354
        %v2373 = vmul.f32 %v2000, %v2354
        %v2374 = vmul.f32 %v2001, %v2354
        %v2375 = vmul.f32 %v2002, %v2354
        %v2376 = vmul.f32 %v2003, %v2354
        %v2377 = vmul.f32 %v2004, %v2354
        %v2378 = vmul.f32 %v2005, %v2354
        %v2379 = vmul.f32 %v2006, %v2354
        %v2380 = vmul.f32 %v2007, %v2354
        %v2381 = vmul.f32 %v2008, %v2354
        %v2382 = vmul.f32 %v2009, %v2354
        %v2383 = vmul.f32 %v2010, %v2354
        %v2384 = vmul.f32 %v2011, %v2354
        %v2385 = vmul.f32 %v2012, %v2354
        %v2386 = vmul.f32 %v2013, %v2354
        %v2387 = vmul.f32 %v2014, %v2354
        %v2388 = vmul.f32 %v2015, %v2354
        %v2389 = vmul.f32 %v2016, %v2354
        %v2390 = vmul.f32 %v2017, %v2354
        %v2391 = vmul.f32 %v2018, %v2354
        %v2392 = vmul.f32 %v2019, %v2354
        %v2393 = vmul.f32 %v2020, %v2354
        %v2394 = vmul.f32 %v2021, %v2354
        %v2395 = vmul.f32 %v2022, %v2354
        %v2396 = vmul.f32 %v2023, %v2354
        %v2397 = vmul.f32 %v2024, %v2354
        %v2398 = vmul.f32 %v2025, %v2354
        %v2399 = vmul.f32 %v2026, %v2354
        %v2400 = vmul.f32 %v2027, %v2354
        %v2401 = vmul.f32 %v2028, %v2354
        %v2402 = vmul.f32 %v2029, %v2354
        %v2451 = vrot.slane %v2355, 2
        %v2452 = vrot.slane %v2356, 2
        %v2453 = vsel %vm716, %v2451, %v2452
        %v2454 = vrot.slane %v2357, 2
        %v2455 = vsel %vm716, %v2452, %v2454
        %v2456 = vrot.slane %v2358, 2
        %v2457 = vrot.slane %v2359, 2
        %v2458 = vsel %vm716, %v2456, %v2457
        %v2459 = vrot.slane %v2360, 2
        %v2460 = vsel %vm716, %v2457, %v2459
        %v2461 = vrot.slane %v2361, 2
        %v2462 = vrot.slane %v2362, 2
        %v2463 = vsel %vm716, %v2461, %v2462
        %v2464 = vrot.slane %v2363, 2
        %v2465 = vsel %vm716, %v2462, %v2464
        %v2466 = vrot.slane %v2364, 2
        %v2467 = vrot.slane %v2365, 2
        %v2468 = vsel %vm716, %v2466, %v2467
        %v2469 = vrot.slane %v2366, 2
        %v2470 = vsel %vm716, %v2467, %v2469
        %v2471 = vrot.slane %v2367, 2
        %v2472 = vrot.slane %v2368, 2
        %v2473 = vsel %vm716, %v2471, %v2472
        %v2474 = vrot.slane %v2369, 2
        %v2475 = vsel %vm716, %v2472, %v2474
        %v2476 = vrot.slane %v2370, 2
        %v2477 = vrot.slane %v2371, 2
        %v2478 = vsel %vm716, %v2476, %v2477
        %v2479 = vrot.slane %v2372, 2
        %v2480 = vsel %vm716, %v2477, %v2479
        %v2481 = vrot.slane %v2373, 2
        %v2482 = vrot.slane %v2374, 2
        %v2483 = vsel %vm716, %v2481, %v2482
        %v2484 = vrot.slane %v2375, 2
        %v2485 = vsel %vm716, %v2482, %v2484
        %v2486 = vrot.slane %v2376, 2
        %v2487 = vrot.slane %v2377, 2
        %v2488 = vsel %vm716, %v2486, %v2487
        %v2489 = vrot.slane %v2378, 2
        %v2490 = vsel %vm716, %v2487, %v2489
        %v2491 = vrot.slane %v2379, 2
        %v2492 = vrot.slane %v2380, 2
        %v2493 = vsel %vm716, %v2491, %v2492
        %v2494 = vrot.slane %v2381, 2
        %v2495 = vsel %vm716, %v2492, %v2494
        %v2496 = vrot.slane %v2382, 2
        %v2497 = vrot.slane %v2383, 2
        %v2498 = vsel %vm716, %v2496, %v2497
        %v2499 = vrot.slane %v2384, 2
        %v2500 = vsel %vm716, %v2497, %v2499
        %v2501 = vrot.slane %v2385, 2
        %v2502 = vrot.slane %v2386, 2
        %v2503 = vsel %vm716, %v2501, %v2502
        %v2504 = vrot.slane %v2387, 2
        %v2505 = vsel %vm716, %v2502, %v2504
        %v2506 = vrot.slane %v2388, 2
        %v2507 = vrot.slane %v2389, 2
        %v2508 = vsel %vm716, %v2506, %v2507
        %v2509 = vrot.slane %v2390, 2
        %v2510 = vsel %vm716, %v2507, %v2509
        %v2511 = vrot.slane %v2391, 2
        %v2512 = vrot.slane %v2392, 2
        %v2513 = vsel %vm716, %v2511, %v2512
        %v2514 = vrot.slane %v2393, 2
        %v2515 = vsel %vm716, %v2512, %v2514
        %v2516 = vrot.slane %v2394, 2
        %v2517 = vrot.slane %v2395, 2
        %v2518 = vsel %vm716, %v2516, %v2517
        %v2519 = vrot.slane %v2396, 2
        %v2520 = vsel %vm716, %v2517, %v2519
        %v2521 = vrot.slane %v2397, 2
        %v2522 = vrot.slane %v2398, 2
        %v2523 = vsel %vm716, %v2521, %v2522
        %v2524 = vrot.slane %v2399, 2
        %v2525 = vsel %vm716, %v2522, %v2524
        %v2526 = vrot.slane %v2400, 2
        %v2527 = vrot.slane %v2401, 2
        %v2528 = vsel %vm716, %v2526, %v2527
        %v2529 = vrot.slane %v2402, 2
        %v2530 = vsel %vm716, %v2527, %v2529
        %v2563 = vadd.f32 %v2318, %v2453
        %v2564 = vadd.f32 %v2319, %v2455
        %v2565 = vadd.f32 %v2320, %v2458
        %v2566 = vadd.f32 %v2321, %v2460
        %v2567 = vadd.f32 %v2322, %v2463
        %v2568 = vadd.f32 %v2323, %v2465
        %v2569 = vadd.f32 %v2324, %v2468
        %v2570 = vadd.f32 %v2325, %v2470
        %v2571 = vadd.f32 %v2326, %v2473
        %v2572 = vadd.f32 %v2327, %v2475
        %v2573 = vadd.f32 %v2328, %v2478
        %v2574 = vadd.f32 %v2329, %v2480
        %v2575 = vadd.f32 %v2330, %v2483
        %v2576 = vadd.f32 %v2331, %v2485
        %v2577 = vadd.f32 %v2332, %v2488
        %v2578 = vadd.f32 %v2333, %v2490
        %v2579 = vadd.f32 %v2334, %v2493
        %v2580 = vadd.f32 %v2335, %v2495
        %v2581 = vadd.f32 %v2336, %v2498
        %v2582 = vadd.f32 %v2337, %v2500
        %v2583 = vadd.f32 %v2338, %v2503
        %v2584 = vadd.f32 %v2339, %v2505
        %v2585 = vadd.f32 %v2340, %v2508
        %v2586 = vadd.f32 %v2341, %v2510
        %v2587 = vadd.f32 %v2342, %v2513
        %v2588 = vadd.f32 %v2343, %v2515
        %v2589 = vadd.f32 %v2344, %v2518
        %v2590 = vadd.f32 %v2345, %v2520
        %v2591 = vadd.f32 %v2346, %v2523
        %v2592 = vadd.f32 %v2347, %v2525
        %v2593 = vadd.f32 %v2348, %v2528
        %v2594 = vadd.f32 %v2349, %v2530
        %v2595 = vld [vmem:[%s1 + $0xc] sm:$0x1]
        %v2596 = vlaneseq
        %v2597 = vshrl.u32 %v2596, 7
        %v2598 = vsub.s32 0, %v2597
        %v2599 = vrot.slane %v2595, %v2598
        %v2600 = vmul.f32 %v1985, %v2599
        %v2601 = vmul.f32 %v1986, %v2599
        %v2602 = vmul.f32 %v1988, %v2599
        %v2603 = vmul.f32 %v1989, %v2599
        %v2604 = vmul.f32 %v1991, %v2599
        %v2605 = vmul.f32 %v1992, %v2599
        %v2606 = vmul.f32 %v1994, %v2599
        %v2607 = vmul.f32 %v1995, %v2599
        %v2608 = vmul.f32 %v1997, %v2599
        %v2609 = vmul.f32 %v1998, %v2599
        %v2610 = vmul.f32 %v2000, %v2599
        %v2611 = vmul.f32 %v2001, %v2599
        %v2612 = vmul.f32 %v2003, %v2599
        %v2613 = vmul.f32 %v2004, %v2599
        %v2614 = vmul.f32 %v2006, %v2599
        %v2615 = vmul.f32 %v2007, %v2599
        %v2616 = vmul.f32 %v2009, %v2599
        %v2617 = vmul.f32 %v2010, %v2599
        %v2618 = vmul.f32 %v2012, %v2599
        %v2619 = vmul.f32 %v2013, %v2599
        %v2620 = vmul.f32 %v2015, %v2599
        %v2621 = vmul.f32 %v2016, %v2599
        %v2622 = vmul.f32 %v2018, %v2599
        %v2623 = vmul.f32 %v2019, %v2599
        %v2624 = vmul.f32 %v2021, %v2599
        %v2625 = vmul.f32 %v2022, %v2599
        %v2626 = vmul.f32 %v2024, %v2599
        %v2627 = vmul.f32 %v2025, %v2599
        %v2628 = vmul.f32 %v2027, %v2599
        %v2629 = vmul.f32 %v2028, %v2599
        %v2630 = vmul.f32 %v2030, %v2599
        %v2631 = vmul.f32 %v2031, %v2599
        %v2632 = vadd.f32 %v2563, %v2600
        %v2633 = vadd.f32 %v2564, %v2601
        %v2634 = vadd.f32 %v2565, %v2602
        %v2635 = vadd.f32 %v2566, %v2603
        %v2636 = vadd.f32 %v2567, %v2604
        %v2637 = vadd.f32 %v2568, %v2605
        %v2638 = vadd.f32 %v2569, %v2606
        %v2639 = vadd.f32 %v2570, %v2607
        %v2640 = vadd.f32 %v2571, %v2608
        %v2641 = vadd.f32 %v2572, %v2609
        %v2642 = vadd.f32 %v2573, %v2610
        %v2643 = vadd.f32 %v2574, %v2611
        %v2644 = vadd.f32 %v2575, %v2612
        %v2645 = vadd.f32 %v2576, %v2613
        %v2646 = vadd.f32 %v2577, %v2614
        %v2647 = vadd.f32 %v2578, %v2615
        %v2648 = vadd.f32 %v2579, %v2616
        %v2649 = vadd.f32 %v2580, %v2617
        %v2650 = vadd.f32 %v2581, %v2618
        %v2651 = vadd.f32 %v2582, %v2619
        %v2652 = vadd.f32 %v2583, %v2620
        %v2653 = vadd.f32 %v2584, %v2621
        %v2654 = vadd.f32 %v2585, %v2622
        %v2655 = vadd.f32 %v2586, %v2623
        %v2656 = vadd.f32 %v2587, %v2624
        %v2657 = vadd.f32 %v2588, %v2625
        %v2658 = vadd.f32 %v2589, %v2626
        %v2659 = vadd.f32 %v2590, %v2627
        %v2660 = vadd.f32 %v2591, %v2628
        %v2661 = vadd.f32 %v2592, %v2629
        %v2662 = vadd.f32 %v2593, %v2630
        %v2663 = vadd.f32 %v2594, %v2631
        %v2664 = vld [vmem:[%s1 + $0xd] sm:$0x1]
        %v2665 = vlaneseq
        %v2666 = vshrl.u32 %v2665, 7
        %v2667 = vsub.s32 0, %v2666
        %v2668 = vrot.slane %v2664, %v2667
        %v2669 = vmul.f32 %v1985, %v2668
        %v2670 = vmul.f32 %v1986, %v2668
        %v2671 = vmul.f32 %v1987, %v2668
        %v2672 = vmul.f32 %v1988, %v2668
        %v2673 = vmul.f32 %v1989, %v2668
        %v2674 = vmul.f32 %v1990, %v2668
        %v2675 = vmul.f32 %v1991, %v2668
        %v2676 = vmul.f32 %v1992, %v2668
        %v2677 = vmul.f32 %v1993, %v2668
        %v2678 = vmul.f32 %v1994, %v2668
        %v2679 = vmul.f32 %v1995, %v2668
        %v2680 = vmul.f32 %v1996, %v2668
        %v2681 = vmul.f32 %v1997, %v2668
        %v2682 = vmul.f32 %v1998, %v2668
        %v2683 = vmul.f32 %v1999, %v2668
        %v2684 = vmul.f32 %v2000, %v2668
        %v2685 = vmul.f32 %v2001, %v2668
        %v2686 = vmul.f32 %v2002, %v2668
        %v2687 = vmul.f32 %v2003, %v2668
        %v2688 = vmul.f32 %v2004, %v2668
        %v2689 = vmul.f32 %v2005, %v2668
        %v2690 = vmul.f32 %v2006, %v2668
        %v2691 = vmul.f32 %v2007, %v2668
        %v2692 = vmul.f32 %v2008, %v2668
        %v2693 = vmul.f32 %v2009, %v2668
        %v2694 = vmul.f32 %v2010, %v2668
        %v2695 = vmul.f32 %v2011, %v2668
        %v2696 = vmul.f32 %v2012, %v2668
        %v2697 = vmul.f32 %v2013, %v2668
        %v2698 = vmul.f32 %v2014, %v2668
        %v2699 = vmul.f32 %v2015, %v2668
        %v2700 = vmul.f32 %v2016, %v2668
        %v2701 = vmul.f32 %v2017, %v2668
        %v2702 = vmul.f32 %v2018, %v2668
        %v2703 = vmul.f32 %v2019, %v2668
        %v2704 = vmul.f32 %v2020, %v2668
        %v2705 = vmul.f32 %v2021, %v2668
        %v2706 = vmul.f32 %v2022, %v2668
        %v2707 = vmul.f32 %v2023, %v2668
        %v2708 = vmul.f32 %v2024, %v2668
        %v2709 = vmul.f32 %v2025, %v2668
        %v2710 = vmul.f32 %v2026, %v2668
        %v2711 = vmul.f32 %v2027, %v2668
        %v2712 = vmul.f32 %v2028, %v2668
        %v2713 = vmul.f32 %v2029, %v2668
        %v2714 = vmul.f32 %v2030, %v2668
        %v2715 = vmul.f32 %v2031, %v2668
        %v2716 = vmul.f32 %v2032, %v2668
        %v2765 = vrot.slane %v2669, 1
        %v2766 = vrot.slane %v2670, 1
        %v2767 = vsel %vm470, %v2765, %v2766
        %v2768 = vrot.slane %v2671, 1
        %v2769 = vsel %vm470, %v2766, %v2768
        %v2770 = vrot.slane %v2672, 1
        %v2771 = vrot.slane %v2673, 1
        %v2772 = vsel %vm470, %v2770, %v2771
        %v2773 = vrot.slane %v2674, 1
        %v2774 = vsel %vm470, %v2771, %v2773
        %v2775 = vrot.slane %v2675, 1
        %v2776 = vrot.slane %v2676, 1
        %v2777 = vsel %vm470, %v2775, %v2776
        %v2778 = vrot.slane %v2677, 1
        %v2779 = vsel %vm470, %v2776, %v2778
        %v2780 = vrot.slane %v2678, 1
        %v2781 = vrot.slane %v2679, 1
        %v2782 = vsel %vm470, %v2780, %v2781
        %v2783 = vrot.slane %v2680, 1
        %v2784 = vsel %vm470, %v2781, %v2783
        %v2785 = vrot.slane %v2681, 1
        %v2786 = vrot.slane %v2682, 1
        %v2787 = vsel %vm470, %v2785, %v2786
        %v2788 = vrot.slane %v2683, 1
        %v2789 = vsel %vm470, %v2786, %v2788
        %v2790 = vrot.slane %v2684, 1
        %v2791 = vrot.slane %v2685, 1
        %v2792 = vsel %vm470, %v2790, %v2791
        %v2793 = vrot.slane %v2686, 1
        %v2794 = vsel %vm470, %v2791, %v2793
        %v2795 = vrot.slane %v2687, 1
        %v2796 = vrot.slane %v2688, 1
        %v2797 = vsel %vm470, %v2795, %v2796
        %v2798 = vrot.slane %v2689, 1
        %v2799 = vsel %vm470, %v2796, %v2798
        %v2800 = vrot.slane %v2690, 1
        %v2801 = vrot.slane %v2691, 1
        %v2802 = vsel %vm470, %v2800, %v2801
        %v2803 = vrot.slane %v2692, 1
        %v2804 = vsel %vm470, %v2801, %v2803
        %v2805 = vrot.slane %v2693, 1
        %v2806 = vrot.slane %v2694, 1
        %v2807 = vsel %vm470, %v2805, %v2806
        %v2808 = vrot.slane %v2695, 1
        %v2809 = vsel %vm470, %v2806, %v2808
        %v2810 = vrot.slane %v2696, 1
        %v2811 = vrot.slane %v2697, 1
        %v2812 = vsel %vm470, %v2810, %v2811
        %v2813 = vrot.slane %v2698, 1
        %v2814 = vsel %vm470, %v2811, %v2813
        %v2815 = vrot.slane %v2699, 1
        %v2816 = vrot.slane %v2700, 1
        %v2817 = vsel %vm470, %v2815, %v2816
        %v2818 = vrot.slane %v2701, 1
        %v2819 = vsel %vm470, %v2816, %v2818
        %v2820 = vrot.slane %v2702, 1
        %v2821 = vrot.slane %v2703, 1
        %v2822 = vsel %vm470, %v2820, %v2821
        %v2823 = vrot.slane %v2704, 1
        %v2824 = vsel %vm470, %v2821, %v2823
        %v2825 = vrot.slane %v2705, 1
        %v2826 = vrot.slane %v2706, 1
        %v2827 = vsel %vm470, %v2825, %v2826
        %v2828 = vrot.slane %v2707, 1
        %v2829 = vsel %vm470, %v2826, %v2828
        %v2830 = vrot.slane %v2708, 1
        %v2831 = vrot.slane %v2709, 1
        %v2832 = vsel %vm470, %v2830, %v2831
        %v2833 = vrot.slane %v2710, 1
        %v2834 = vsel %vm470, %v2831, %v2833
        %v2835 = vrot.slane %v2711, 1
        %v2836 = vrot.slane %v2712, 1
        %v2837 = vsel %vm470, %v2835, %v2836
        %v2838 = vrot.slane %v2713, 1
        %v2839 = vsel %vm470, %v2836, %v2838
        %v2840 = vrot.slane %v2714, 1
        %v2841 = vrot.slane %v2715, 1
        %v2842 = vsel %vm470, %v2840, %v2841
        %v2843 = vrot.slane %v2716, 1
        %v2844 = vsel %vm470, %v2841, %v2843
        %v2877 = vadd.f32 %v2632, %v2767
        %v2878 = vadd.f32 %v2633, %v2769
        %v2879 = vadd.f32 %v2634, %v2772
        %v2880 = vadd.f32 %v2635, %v2774
        %v2881 = vadd.f32 %v2636, %v2777
        %v2882 = vadd.f32 %v2637, %v2779
        %v2883 = vadd.f32 %v2638, %v2782
        %v2884 = vadd.f32 %v2639, %v2784
        %v2885 = vadd.f32 %v2640, %v2787
        %v2886 = vadd.f32 %v2641, %v2789
        %v2887 = vadd.f32 %v2642, %v2792
        %v2888 = vadd.f32 %v2643, %v2794
        %v2889 = vadd.f32 %v2644, %v2797
        %v2890 = vadd.f32 %v2645, %v2799
        %v2891 = vadd.f32 %v2646, %v2802
        %v2892 = vadd.f32 %v2647, %v2804
        %v2893 = vadd.f32 %v2648, %v2807
        %v2894 = vadd.f32 %v2649, %v2809
        %v2895 = vadd.f32 %v2650, %v2812
        %v2896 = vadd.f32 %v2651, %v2814
        %v2897 = vadd.f32 %v2652, %v2817
        %v2898 = vadd.f32 %v2653, %v2819
        %v2899 = vadd.f32 %v2654, %v2822
        %v2900 = vadd.f32 %v2655, %v2824
        %v2901 = vadd.f32 %v2656, %v2827
        %v2902 = vadd.f32 %v2657, %v2829
        %v2903 = vadd.f32 %v2658, %v2832
        %v2904 = vadd.f32 %v2659, %v2834
        %v2905 = vadd.f32 %v2660, %v2837
        %v2906 = vadd.f32 %v2661, %v2839
        %v2907 = vadd.f32 %v2662, %v2842
        %v2908 = vadd.f32 %v2663, %v2844
        %v2909 = vld [vmem:[%s1 + $0xe] sm:$0x1]
        %v2910 = vlaneseq
        %v2911 = vshrl.u32 %v2910, 7
        %v2912 = vsub.s32 0, %v2911
        %v2913 = vrot.slane %v2909, %v2912
        %v2914 = vmul.f32 %v1985, %v2913
        %v2915 = vmul.f32 %v1986, %v2913
        %v2916 = vmul.f32 %v1987, %v2913
        %v2917 = vmul.f32 %v1988, %v2913
        %v2918 = vmul.f32 %v1989, %v2913
        %v2919 = vmul.f32 %v1990, %v2913
        %v2920 = vmul.f32 %v1991, %v2913
        %v2921 = vmul.f32 %v1992, %v2913
        %v2922 = vmul.f32 %v1993, %v2913
        %v2923 = vmul.f32 %v1994, %v2913
        %v2924 = vmul.f32 %v1995, %v2913
        %v2925 = vmul.f32 %v1996, %v2913
        %v2926 = vmul.f32 %v1997, %v2913
        %v2927 = vmul.f32 %v1998, %v2913
        %v2928 = vmul.f32 %v1999, %v2913
        %v2929 = vmul.f32 %v2000, %v2913
        %v2930 = vmul.f32 %v2001, %v2913
        %v2931 = vmul.f32 %v2002, %v2913
        %v2932 = vmul.f32 %v2003, %v2913
        %v2933 = vmul.f32 %v2004, %v2913
        %v2934 = vmul.f32 %v2005, %v2913
        %v2935 = vmul.f32 %v2006, %v2913
        %v2936 = vmul.f32 %v2007, %v2913
        %v2937 = vmul.f32 %v2008, %v2913
        %v2938 = vmul.f32 %v2009, %v2913
        %v2939 = vmul.f32 %v2010, %v2913
        %v2940 = vmul.f32 %v2011, %v2913
        %v2941 = vmul.f32 %v2012, %v2913
        %v2942 = vmul.f32 %v2013, %v2913
        %v2943 = vmul.f32 %v2014, %v2913
        %v2944 = vmul.f32 %v2015, %v2913
        %v2945 = vmul.f32 %v2016, %v2913
        %v2946 = vmul.f32 %v2017, %v2913
        %v2947 = vmul.f32 %v2018, %v2913
        %v2948 = vmul.f32 %v2019, %v2913
        %v2949 = vmul.f32 %v2020, %v2913
        %v2950 = vmul.f32 %v2021, %v2913
        %v2951 = vmul.f32 %v2022, %v2913
        %v2952 = vmul.f32 %v2023, %v2913
        %v2953 = vmul.f32 %v2024, %v2913
        %v2954 = vmul.f32 %v2025, %v2913
        %v2955 = vmul.f32 %v2026, %v2913
        %v2956 = vmul.f32 %v2027, %v2913
        %v2957 = vmul.f32 %v2028, %v2913
        %v2958 = vmul.f32 %v2029, %v2913
        %v2959 = vmul.f32 %v2030, %v2913
        %v2960 = vmul.f32 %v2031, %v2913
        %v2961 = vmul.f32 %v2032, %v2913
        %v3010 = vrot.slane %v2914, 2
        %v3011 = vrot.slane %v2915, 2
        %v3012 = vsel %vm716, %v3010, %v3011
        %v3013 = vrot.slane %v2916, 2
        %v3014 = vsel %vm716, %v3011, %v3013
        %v3015 = vrot.slane %v2917, 2
        %v3016 = vrot.slane %v2918, 2
        %v3017 = vsel %vm716, %v3015, %v3016
        %v3018 = vrot.slane %v2919, 2
        %v3019 = vsel %vm716, %v3016, %v3018
        %v3020 = vrot.slane %v2920, 2
        %v3021 = vrot.slane %v2921, 2
        %v3022 = vsel %vm716, %v3020, %v3021
        %v3023 = vrot.slane %v2922, 2
        %v3024 = vsel %vm716, %v3021, %v3023
        %v3025 = vrot.slane %v2923, 2
        %v3026 = vrot.slane %v2924, 2
        %v3027 = vsel %vm716, %v3025, %v3026
        %v3028 = vrot.slane %v2925, 2
        %v3029 = vsel %vm716, %v3026, %v3028
        %v3030 = vrot.slane %v2926, 2
        %v3031 = vrot.slane %v2927, 2
        %v3032 = vsel %vm716, %v3030, %v3031
        %v3033 = vrot.slane %v2928, 2
        %v3034 = vsel %vm716, %v3031, %v3033
        %v3035 = vrot.slane %v2929, 2
        %v3036 = vrot.slane %v2930, 2
        %v3037 = vsel %vm716, %v3035, %v3036
        %v3038 = vrot.slane %v2931, 2
        %v3039 = vsel %vm716, %v3036, %v3038
        %v3040 = vrot.slane %v2932, 2
        %v3041 = vrot.slane %v2933, 2
        %v3042 = vsel %vm716, %v3040, %v3041
        %v3043 = vrot.slane %v2934, 2
        %v3044 = vsel %vm716, %v3041, %v3043
        %v3045 = vrot.slane %v2935, 2
        %v3046 = vrot.slane %v2936, 2
        %v3047 = vsel %vm716, %v3045, %v3046
        %v3048 = vrot.slane %v2937, 2
        %v3049 = vsel %vm716, %v3046, %v3048
        %v3050 = vrot.slane %v2938, 2
        %v3051 = vrot.slane %v2939, 2
        %v3052 = vsel %vm716, %v3050, %v3051
        %v3053 = vrot.slane %v2940, 2
        %v3054 = vsel %vm716, %v3051, %v3053
        %v3055 = vrot.slane %v2941, 2
        %v3056 = vrot.slane %v2942, 2
        %v3057 = vsel %vm716, %v3055, %v3056
        %v3058 = vrot.slane %v2943, 2
        %v3059 = vsel %vm716, %v3056, %v3058
        %v3060 = vrot.slane %v2944, 2
        %v3061 = vrot.slane %v2945, 2
        %v3062 = vsel %vm716, %v3060, %v3061
        %v3063 = vrot.slane %v2946, 2
        %v3064 = vsel %vm716, %v3061, %v3063
        %v3065 = vrot.slane %v2947, 2
        %v3066 = vrot.slane %v2948, 2
        %v3067 = vsel %vm716, %v3065, %v3066
        %v3068 = vrot.slane %v2949, 2
        %v3069 = vsel %vm716, %v3066, %v3068
        %v3070 = vrot.slane %v2950, 2
        %v3071 = vrot.slane %v2951, 2
        %v3072 = vsel %vm716, %v3070, %v3071
        %v3073 = vrot.slane %v2952, 2
        %v3074 = vsel %vm716, %v3071, %v3073
        %v3075 = vrot.slane %v2953, 2
        %v3076 = vrot.slane %v2954, 2
        %v3077 = vsel %vm716, %v3075, %v3076
        %v3078 = vrot.slane %v2955, 2
        %v3079 = vsel %vm716, %v3076, %v3078
        %v3080 = vrot.slane %v2956, 2
        %v3081 = vrot.slane %v2957, 2
        %v3082 = vsel %vm716, %v3080, %v3081
        %v3083 = vrot.slane %v2958, 2
        %v3084 = vsel %vm716, %v3081, %v3083
        %v3085 = vrot.slane %v2959, 2
        %v3086 = vrot.slane %v2960, 2
        %v3087 = vsel %vm716, %v3085, %v3086
        %v3088 = vrot.slane %v2961, 2
        %v3089 = vsel %vm716, %v3086, %v3088
        %v3122 = vadd.f32 %v2877, %v3012
        %v3123 = vadd.f32 %v2878, %v3014
        %v3124 = vadd.f32 %v2879, %v3017
        %v3125 = vadd.f32 %v2880, %v3019
        %v3126 = vadd.f32 %v2881, %v3022
        %v3127 = vadd.f32 %v2882, %v3024
        %v3128 = vadd.f32 %v2883, %v3027
        %v3129 = vadd.f32 %v2884, %v3029
        %v3130 = vadd.f32 %v2885, %v3032
        %v3131 = vadd.f32 %v2886, %v3034
        %v3132 = vadd.f32 %v2887, %v3037
        %v3133 = vadd.f32 %v2888, %v3039
        %v3134 = vadd.f32 %v2889, %v3042
        %v3135 = vadd.f32 %v2890, %v3044
        %v3136 = vadd.f32 %v2891, %v3047
        %v3137 = vadd.f32 %v2892, %v3049
        %v3138 = vadd.f32 %v2893, %v3052
        %v3139 = vadd.f32 %v2894, %v3054
        %v3140 = vadd.f32 %v2895, %v3057
        %v3141 = vadd.f32 %v2896, %v3059
        %v3142 = vadd.f32 %v2897, %v3062
        %v3143 = vadd.f32 %v2898, %v3064
        %v3144 = vadd.f32 %v2899, %v3067
        %v3145 = vadd.f32 %v2900, %v3069
        %v3146 = vadd.f32 %v2901, %v3072
        %v3147 = vadd.f32 %v2902, %v3074
        %v3148 = vadd.f32 %v2903, %v3077
        %v3149 = vadd.f32 %v2904, %v3079
        %v3150 = vadd.f32 %v2905, %v3082
        %v3151 = vadd.f32 %v2906, %v3084
        %v3152 = vadd.f32 %v2907, %v3087
        %v3153 = vadd.f32 %v2908, %v3089
        %v3154 = vld [vmem:[%s1 + $0xf] sm:$0x1]
        %v3155 = vlaneseq
        %v3156 = vshrl.u32 %v3155, 7
        %v3157 = vsub.s32 0, %v3156
        %v3158 = vrot.slane %v3154, %v3157
        %v3159 = vmul.f32 %v1988, %v3158
        %v3160 = vmul.f32 %v1989, %v3158
        %v3161 = vmul.f32 %v1991, %v3158
        %v3162 = vmul.f32 %v1992, %v3158
        %v3163 = vmul.f32 %v1994, %v3158
        %v3164 = vmul.f32 %v1995, %v3158
        %v3165 = vmul.f32 %v1997, %v3158
        %v3166 = vmul.f32 %v1998, %v3158
        %v3167 = vmul.f32 %v2000, %v3158
        %v3168 = vmul.f32 %v2001, %v3158
        %v3169 = vmul.f32 %v2003, %v3158
        %v3170 = vmul.f32 %v2004, %v3158
        %v3171 = vmul.f32 %v2006, %v3158
        %v3172 = vmul.f32 %v2007, %v3158
        %v3173 = vmul.f32 %v2009, %v3158
        %v3174 = vmul.f32 %v2010, %v3158
        %v3175 = vmul.f32 %v2012, %v3158
        %v3176 = vmul.f32 %v2013, %v3158
        %v3177 = vmul.f32 %v2015, %v3158
        %v3178 = vmul.f32 %v2016, %v3158
        %v3179 = vmul.f32 %v2018, %v3158
        %v3180 = vmul.f32 %v2019, %v3158
        %v3181 = vmul.f32 %v2021, %v3158
        %v3182 = vmul.f32 %v2022, %v3158
        %v3183 = vmul.f32 %v2024, %v3158
        %v3184 = vmul.f32 %v2025, %v3158
        %v3185 = vmul.f32 %v2027, %v3158
        %v3186 = vmul.f32 %v2028, %v3158
        %v3187 = vmul.f32 %v2030, %v3158
        %v3188 = vmul.f32 %v2031, %v3158
        %v3189 = vmul.f32 %v2033, %v3158
        %v3190 = vmul.f32 %v2034, %v3158
        %v3191 = vadd.f32 %v3122, %v3159
        %v3192 = vadd.f32 %v3123, %v3160
        %v3193 = vadd.f32 %v3124, %v3161
        %v3194 = vadd.f32 %v3125, %v3162
        %v3195 = vadd.f32 %v3126, %v3163
        %v3196 = vadd.f32 %v3127, %v3164
        %v3197 = vadd.f32 %v3128, %v3165
        %v3198 = vadd.f32 %v3129, %v3166
        %v3199 = vadd.f32 %v3130, %v3167
        %v3200 = vadd.f32 %v3131, %v3168
        %v3201 = vadd.f32 %v3132, %v3169
        %v3202 = vadd.f32 %v3133, %v3170
        %v3203 = vadd.f32 %v3134, %v3171
        %v3204 = vadd.f32 %v3135, %v3172
        %v3205 = vadd.f32 %v3136, %v3173
        %v3206 = vadd.f32 %v3137, %v3174
        %v3207 = vadd.f32 %v3138, %v3175
        %v3208 = vadd.f32 %v3139, %v3176
        %v3209 = vadd.f32 %v3140, %v3177
        %v3210 = vadd.f32 %v3141, %v3178
        %v3211 = vadd.f32 %v3142, %v3179
        %v3212 = vadd.f32 %v3143, %v3180
        %v3213 = vadd.f32 %v3144, %v3181
        %v3214 = vadd.f32 %v3145, %v3182
        %v3215 = vadd.f32 %v3146, %v3183
        %v3216 = vadd.f32 %v3147, %v3184
        %v3217 = vadd.f32 %v3148, %v3185
        %v3218 = vadd.f32 %v3149, %v3186
        %v3219 = vadd.f32 %v3150, %v3187
        %v3220 = vadd.f32 %v3151, %v3188
        %v3221 = vadd.f32 %v3152, %v3189
        %v3222 = vadd.f32 %v3153, %v3190
        %v3223 = vld [vmem:[%s1 + $0x10] sm:$0x1]
        %v3224 = vlaneseq
        %v3225 = vshrl.u32 %v3224, 7
        %v3226 = vsub.s32 0, %v3225
        %v3227 = vrot.slane %v3223, %v3226
        %v3228 = vmul.f32 %v1988, %v3227
        %v3229 = vmul.f32 %v1989, %v3227
        %v3230 = vmul.f32 %v1990, %v3227
        %v3231 = vmul.f32 %v1991, %v3227
        %v3232 = vmul.f32 %v1992, %v3227
        %v3233 = vmul.f32 %v1993, %v3227
        %v3234 = vmul.f32 %v1994, %v3227
        %v3235 = vmul.f32 %v1995, %v3227
        %v3236 = vmul.f32 %v1996, %v3227
        %v3237 = vmul.f32 %v1997, %v3227
        %v3238 = vmul.f32 %v1998, %v3227
        %v3239 = vmul.f32 %v1999, %v3227
        %v3240 = vmul.f32 %v2000, %v3227
        %v3241 = vmul.f32 %v2001, %v3227
        %v3242 = vmul.f32 %v2002, %v3227
        %v3243 = vmul.f32 %v2003, %v3227
        %v3244 = vmul.f32 %v2004, %v3227
        %v3245 = vmul.f32 %v2005, %v3227
        %v3246 = vmul.f32 %v2006, %v3227
        %v3247 = vmul.f32 %v2007, %v3227
        %v3248 = vmul.f32 %v2008, %v3227
        %v3249 = vmul.f32 %v2009, %v3227
        %v3250 = vmul.f32 %v2010, %v3227
        %v3251 = vmul.f32 %v2011, %v3227
        %v3252 = vmul.f32 %v2012, %v3227
        %v3253 = vmul.f32 %v2013, %v3227
        %v3254 = vmul.f32 %v2014, %v3227
        %v3255 = vmul.f32 %v2015, %v3227
        %v3256 = vmul.f32 %v2016, %v3227
        %v3257 = vmul.f32 %v2017, %v3227
        %v3258 = vmul.f32 %v2018, %v3227
        %v3259 = vmul.f32 %v2019, %v3227
        %v3260 = vmul.f32 %v2020, %v3227
        %v3261 = vmul.f32 %v2021, %v3227
        %v3262 = vmul.f32 %v2022, %v3227
        %v3263 = vmul.f32 %v2023, %v3227
        %v3264 = vmul.f32 %v2024, %v3227
        %v3265 = vmul.f32 %v2025, %v3227
        %v3266 = vmul.f32 %v2026, %v3227
        %v3267 = vmul.f32 %v2027, %v3227
        %v3268 = vmul.f32 %v2028, %v3227
        %v3269 = vmul.f32 %v2029, %v3227
        %v3270 = vmul.f32 %v2030, %v3227
        %v3271 = vmul.f32 %v2031, %v3227
        %v3272 = vmul.f32 %v2032, %v3227
        %v3273 = vmul.f32 %v2033, %v3227
        %v3274 = vmul.f32 %v2034, %v3227
        %v3275 = vmul.f32 %v2035, %v3227
        %v3324 = vrot.slane %v3228, 1
        %v3325 = vrot.slane %v3229, 1
        %v3326 = vsel %vm470, %v3324, %v3325
        %v3327 = vrot.slane %v3230, 1
        %v3328 = vsel %vm470, %v3325, %v3327
        %v3329 = vrot.slane %v3231, 1
        %v3330 = vrot.slane %v3232, 1
        %v3331 = vsel %vm470, %v3329, %v3330
        %v3332 = vrot.slane %v3233, 1
        %v3333 = vsel %vm470, %v3330, %v3332
        %v3334 = vrot.slane %v3234, 1
        %v3335 = vrot.slane %v3235, 1
        %v3336 = vsel %vm470, %v3334, %v3335
        %v3337 = vrot.slane %v3236, 1
        %v3338 = vsel %vm470, %v3335, %v3337
        %v3339 = vrot.slane %v3237, 1
        %v3340 = vrot.slane %v3238, 1
        %v3341 = vsel %vm470, %v3339, %v3340
        %v3342 = vrot.slane %v3239, 1
        %v3343 = vsel %vm470, %v3340, %v3342
        %v3344 = vrot.slane %v3240, 1
        %v3345 = vrot.slane %v3241, 1
        %v3346 = vsel %vm470, %v3344, %v3345
        %v3347 = vrot.slane %v3242, 1
        %v3348 = vsel %vm470, %v3345, %v3347
        %v3349 = vrot.slane %v3243, 1
        %v3350 = vrot.slane %v3244, 1
        %v3351 = vsel %vm470, %v3349, %v3350
        %v3352 = vrot.slane %v3245, 1
        %v3353 = vsel %vm470, %v3350, %v3352
        %v3354 = vrot.slane %v3246, 1
        %v3355 = vrot.slane %v3247, 1
        %v3356 = vsel %vm470, %v3354, %v3355
        %v3357 = vrot.slane %v3248, 1
        %v3358 = vsel %vm470, %v3355, %v3357
        %v3359 = vrot.slane %v3249, 1
        %v3360 = vrot.slane %v3250, 1
        %v3361 = vsel %vm470, %v3359, %v3360
        %v3362 = vrot.slane %v3251, 1
        %v3363 = vsel %vm470, %v3360, %v3362
        %v3364 = vrot.slane %v3252, 1
        %v3365 = vrot.slane %v3253, 1
        %v3366 = vsel %vm470, %v3364, %v3365
        %v3367 = vrot.slane %v3254, 1
        %v3368 = vsel %vm470, %v3365, %v3367
        %v3369 = vrot.slane %v3255, 1
        %v3370 = vrot.slane %v3256, 1
        %v3371 = vsel %vm470, %v3369, %v3370
        %v3372 = vrot.slane %v3257, 1
        %v3373 = vsel %vm470, %v3370, %v3372
        %v3374 = vrot.slane %v3258, 1
        %v3375 = vrot.slane %v3259, 1
        %v3376 = vsel %vm470, %v3374, %v3375
        %v3377 = vrot.slane %v3260, 1
        %v3378 = vsel %vm470, %v3375, %v3377
        %v3379 = vrot.slane %v3261, 1
        %v3380 = vrot.slane %v3262, 1
        %v3381 = vsel %vm470, %v3379, %v3380
        %v3382 = vrot.slane %v3263, 1
        %v3383 = vsel %vm470, %v3380, %v3382
        %v3384 = vrot.slane %v3264, 1
        %v3385 = vrot.slane %v3265, 1
        %v3386 = vsel %vm470, %v3384, %v3385
        %v3387 = vrot.slane %v3266, 1
        %v3388 = vsel %vm470, %v3385, %v3387
        %v3389 = vrot.slane %v3267, 1
        %v3390 = vrot.slane %v3268, 1
        %v3391 = vsel %vm470, %v3389, %v3390
        %v3392 = vrot.slane %v3269, 1
        %v3393 = vsel %vm470, %v3390, %v3392
        %v3394 = vrot.slane %v3270, 1
        %v3395 = vrot.slane %v3271, 1
        %v3396 = vsel %vm470, %v3394, %v3395
        %v3397 = vrot.slane %v3272, 1
        %v3398 = vsel %vm470, %v3395, %v3397
        %v3399 = vrot.slane %v3273, 1
        %v3400 = vrot.slane %v3274, 1
        %v3401 = vsel %vm470, %v3399, %v3400
        %v3402 = vrot.slane %v3275, 1
        %v3403 = vsel %vm470, %v3400, %v3402
        %v3436 = vadd.f32 %v3191, %v3326
        %v3437 = vadd.f32 %v3192, %v3328
        %v3438 = vadd.f32 %v3193, %v3331
        %v3439 = vadd.f32 %v3194, %v3333
        %v3440 = vadd.f32 %v3195, %v3336
        %v3441 = vadd.f32 %v3196, %v3338
        %v3442 = vadd.f32 %v3197, %v3341
        %v3443 = vadd.f32 %v3198, %v3343
        %v3444 = vadd.f32 %v3199, %v3346
        %v3445 = vadd.f32 %v3200, %v3348
        %v3446 = vadd.f32 %v3201, %v3351
        %v3447 = vadd.f32 %v3202, %v3353
        %v3448 = vadd.f32 %v3203, %v3356
        %v3449 = vadd.f32 %v3204, %v3358
        %v3450 = vadd.f32 %v3205, %v3361
        %v3451 = vadd.f32 %v3206, %v3363
        %v3452 = vadd.f32 %v3207, %v3366
        %v3453 = vadd.f32 %v3208, %v3368
        %v3454 = vadd.f32 %v3209, %v3371
        %v3455 = vadd.f32 %v3210, %v3373
        %v3456 = vadd.f32 %v3211, %v3376
        %v3457 = vadd.f32 %v3212, %v3378
        %v3458 = vadd.f32 %v3213, %v3381
        %v3459 = vadd.f32 %v3214, %v3383
        %v3460 = vadd.f32 %v3215, %v3386
        %v3461 = vadd.f32 %v3216, %v3388
        %v3462 = vadd.f32 %v3217, %v3391
        %v3463 = vadd.f32 %v3218, %v3393
        %v3464 = vadd.f32 %v3219, %v3396
        %v3465 = vadd.f32 %v3220, %v3398
        %v3466 = vadd.f32 %v3221, %v3401
        %v3467 = vadd.f32 %v3222, %v3403
        %v3468 = vld [vmem:[%s1 + $0x11] sm:$0x1]
        %v3469 = vlaneseq
        %v3470 = vshrl.u32 %v3469, 7
        %v3471 = vsub.s32 0, %v3470
        %v3472 = vrot.slane %v3468, %v3471
        %v3473 = vmul.f32 %v1988, %v3472
        %v3474 = vmul.f32 %v1989, %v3472
        %v3475 = vmul.f32 %v1990, %v3472
        %v3476 = vmul.f32 %v1991, %v3472
        %v3477 = vmul.f32 %v1992, %v3472
        %v3478 = vmul.f32 %v1993, %v3472
        %v3479 = vmul.f32 %v1994, %v3472
        %v3480 = vmul.f32 %v1995, %v3472
        %v3481 = vmul.f32 %v1996, %v3472
        %v3482 = vmul.f32 %v1997, %v3472
        %v3483 = vmul.f32 %v1998, %v3472
        %v3484 = vmul.f32 %v1999, %v3472
        %v3485 = vmul.f32 %v2000, %v3472
        %v3486 = vmul.f32 %v2001, %v3472
        %v3487 = vmul.f32 %v2002, %v3472
        %v3488 = vmul.f32 %v2003, %v3472
        %v3489 = vmul.f32 %v2004, %v3472
        %v3490 = vmul.f32 %v2005, %v3472
        %v3491 = vmul.f32 %v2006, %v3472
        %v3492 = vmul.f32 %v2007, %v3472
        %v3493 = vmul.f32 %v2008, %v3472
        %v3494 = vmul.f32 %v2009, %v3472
        %v3495 = vmul.f32 %v2010, %v3472
        %v3496 = vmul.f32 %v2011, %v3472
        %v3497 = vmul.f32 %v2012, %v3472
        %v3498 = vmul.f32 %v2013, %v3472
        %v3499 = vmul.f32 %v2014, %v3472
        %v3500 = vmul.f32 %v2015, %v3472
        %v3501 = vmul.f32 %v2016, %v3472
        %v3502 = vmul.f32 %v2017, %v3472
        %v3503 = vmul.f32 %v2018, %v3472
        %v3504 = vmul.f32 %v2019, %v3472
        %v3505 = vmul.f32 %v2020, %v3472
        %v3506 = vmul.f32 %v2021, %v3472
        %v3507 = vmul.f32 %v2022, %v3472
        %v3508 = vmul.f32 %v2023, %v3472
        %v3509 = vmul.f32 %v2024, %v3472
        %v3510 = vmul.f32 %v2025, %v3472
        %v3511 = vmul.f32 %v2026, %v3472
        %v3512 = vmul.f32 %v2027, %v3472
        %v3513 = vmul.f32 %v2028, %v3472
        %v3514 = vmul.f32 %v2029, %v3472
        %v3515 = vmul.f32 %v2030, %v3472
        %v3516 = vmul.f32 %v2031, %v3472
        %v3517 = vmul.f32 %v2032, %v3472
        %v3518 = vmul.f32 %v2033, %v3472
        %v3519 = vmul.f32 %v2034, %v3472
        %v3520 = vmul.f32 %v2035, %v3472
        %v3569 = vrot.slane %v3473, 2
        %v3570 = vrot.slane %v3474, 2
        %v3571 = vsel %vm716, %v3569, %v3570
        %v3572 = vrot.slane %v3475, 2
        %v3573 = vsel %vm716, %v3570, %v3572
        %v3574 = vrot.slane %v3476, 2
        %v3575 = vrot.slane %v3477, 2
        %v3576 = vsel %vm716, %v3574, %v3575
        %v3577 = vrot.slane %v3478, 2
        %v3578 = vsel %vm716, %v3575, %v3577
        %v3579 = vrot.slane %v3479, 2
        %v3580 = vrot.slane %v3480, 2
        %v3581 = vsel %vm716, %v3579, %v3580
        %v3582 = vrot.slane %v3481, 2
        %v3583 = vsel %vm716, %v3580, %v3582
        %v3584 = vrot.slane %v3482, 2
        %v3585 = vrot.slane %v3483, 2
        %v3586 = vsel %vm716, %v3584, %v3585
        %v3587 = vrot.slane %v3484, 2
        %v3588 = vsel %vm716, %v3585, %v3587
        %v3589 = vrot.slane %v3485, 2
        %v3590 = vrot.slane %v3486, 2
        %v3591 = vsel %vm716, %v3589, %v3590
        %v3592 = vrot.slane %v3487, 2
        %v3593 = vsel %vm716, %v3590, %v3592
        %v3594 = vrot.slane %v3488, 2
        %v3595 = vrot.slane %v3489, 2
        %v3596 = vsel %vm716, %v3594, %v3595
        %v3597 = vrot.slane %v3490, 2
        %v3598 = vsel %vm716, %v3595, %v3597
        %v3599 = vrot.slane %v3491, 2
        %v3600 = vrot.slane %v3492, 2
        %v3601 = vsel %vm716, %v3599, %v3600
        %v3602 = vrot.slane %v3493, 2
        %v3603 = vsel %vm716, %v3600, %v3602
        %v3604 = vrot.slane %v3494, 2
        %v3605 = vrot.slane %v3495, 2
        %v3606 = vsel %vm716, %v3604, %v3605
        %v3607 = vrot.slane %v3496, 2
        %v3608 = vsel %vm716, %v3605, %v3607
        %v3609 = vrot.slane %v3497, 2
        %v3610 = vrot.slane %v3498, 2
        %v3611 = vsel %vm716, %v3609, %v3610
        %v3612 = vrot.slane %v3499, 2
        %v3613 = vsel %vm716, %v3610, %v3612
        %v3614 = vrot.slane %v3500, 2
        %v3615 = vrot.slane %v3501, 2
        %v3616 = vsel %vm716, %v3614, %v3615
        %v3617 = vrot.slane %v3502, 2
        %v3618 = vsel %vm716, %v3615, %v3617
        %v3619 = vrot.slane %v3503, 2
        %v3620 = vrot.slane %v3504, 2
        %v3621 = vsel %vm716, %v3619, %v3620
        %v3622 = vrot.slane %v3505, 2
        %v3623 = vsel %vm716, %v3620, %v3622
        %v3624 = vrot.slane %v3506, 2
        %v3625 = vrot.slane %v3507, 2
        %v3626 = vsel %vm716, %v3624, %v3625
        %v3627 = vrot.slane %v3508, 2
        %v3628 = vsel %vm716, %v3625, %v3627
        %v3629 = vrot.slane %v3509, 2
        %v3630 = vrot.slane %v3510, 2
        %v3631 = vsel %vm716, %v3629, %v3630
        %v3632 = vrot.slane %v3511, 2
        %v3633 = vsel %vm716, %v3630, %v3632
        %v3634 = vrot.slane %v3512, 2
        %v3635 = vrot.slane %v3513, 2
        %v3636 = vsel %vm716, %v3634, %v3635
        %v3637 = vrot.slane %v3514, 2
        %v3638 = vsel %vm716, %v3635, %v3637
        %v3639 = vrot.slane %v3515, 2
        %v3640 = vrot.slane %v3516, 2
        %v3641 = vsel %vm716, %v3639, %v3640
        %v3642 = vrot.slane %v3517, 2
        %v3643 = vsel %vm716, %v3640, %v3642
        %v3644 = vrot.slane %v3518, 2
        %v3645 = vrot.slane %v3519, 2
        %v3646 = vsel %vm716, %v3644, %v3645
        %v3647 = vrot.slane %v3520, 2
        %v3648 = vsel %vm716, %v3645, %v3647
        %v3681 = vadd.f32 %v3436, %v3571
        %v3682 = vadd.f32 %v3437, %v3573
        %v3683 = vadd.f32 %v3438, %v3576
        %v3684 = vadd.f32 %v3439, %v3578
        %v3685 = vadd.f32 %v3440, %v3581
        %v3686 = vadd.f32 %v3441, %v3583
        %v3687 = vadd.f32 %v3442, %v3586
        %v3688 = vadd.f32 %v3443, %v3588
        %v3689 = vadd.f32 %v3444, %v3591
        %v3690 = vadd.f32 %v3445, %v3593
        %v3691 = vadd.f32 %v3446, %v3596
        %v3692 = vadd.f32 %v3447, %v3598
        %v3693 = vadd.f32 %v3448, %v3601
        %v3694 = vadd.f32 %v3449, %v3603
        %v3695 = vadd.f32 %v3450, %v3606
        %v3696 = vadd.f32 %v3451, %v3608
        %v3697 = vadd.f32 %v3452, %v3611
        %v3698 = vadd.f32 %v3453, %v3613
        %v3699 = vadd.f32 %v3454, %v3616
        %v3700 = vadd.f32 %v3455, %v3618
        %v3701 = vadd.f32 %v3456, %v3621
        %v3702 = vadd.f32 %v3457, %v3623
        %v3703 = vadd.f32 %v3458, %v3626
        %v3704 = vadd.f32 %v3459, %v3628
        %v3705 = vadd.f32 %v3460, %v3631
        %v3706 = vadd.f32 %v3461, %v3633
        %v3707 = vadd.f32 %v3462, %v3636
        %v3708 = vadd.f32 %v3463, %v3638
        %v3709 = vadd.f32 %v3464, %v3641
        %v3710 = vadd.f32 %v3465, %v3643
        %v3711 = vadd.f32 %v3466, %v3646
        %v3712 = vadd.f32 %v3467, %v3648
        %s3713 = sadd.s32 %s24, 4
        %s3714 = smul.u32 %s3713, 432
        %s3715 = scalar_lea.vmem %s236, %s3714
        %v3716 = vld [vmem:[%s3715] sm:$0xff]
        %v3717 = vld [vmem:[%s3715 + $0x8] sm:$0xff]
        %v3718 = vld [vmem:[%s3715 + $0x10] sm:$0x3]
        %v3719 = vld [vmem:[%s3715 + $0x18] sm:$0xff]
        %v3720 = vld [vmem:[%s3715 + $0x20] sm:$0xff]
        %v3721 = vld [vmem:[%s3715 + $0x28] sm:$0x3]
        %v3722 = vld [vmem:[%s3715 + $0x30] sm:$0xff]
        %v3723 = vld [vmem:[%s3715 + $0x38] sm:$0xff]
        %v3724 = vld [vmem:[%s3715 + $0x40] sm:$0x3]
        %v3725 = vld [vmem:[%s3715 + $0x48] sm:$0xff]
        %v3726 = vld [vmem:[%s3715 + $0x50] sm:$0xff]
        %v3727 = vld [vmem:[%s3715 + $0x58] sm:$0x3]
        %v3728 = vld [vmem:[%s3715 + $0x60] sm:$0xff]
        %v3729 = vld [vmem:[%s3715 + $0x68] sm:$0xff]
        %v3730 = vld [vmem:[%s3715 + $0x70] sm:$0x3]
        %v3731 = vld [vmem:[%s3715 + $0x78] sm:$0xff]
        %v3732 = vld [vmem:[%s3715 + $0x80] sm:$0xff]
        %v3733 = vld [vmem:[%s3715 + $0x88] sm:$0x3]
        %v3734 = vld [vmem:[%s3715 + $0x90] sm:$0xff]
        %v3735 = vld [vmem:[%s3715 + $0x98] sm:$0xff]
        %v3736 = vld [vmem:[%s3715 + $0xa0] sm:$0x3]
        %v3737 = vld [vmem:[%s3715 + $0xa8] sm:$0xff]
        %v3738 = vld [vmem:[%s3715 + $0xb0] sm:$0xff]
        %v3739 = vld [vmem:[%s3715 + $0xb8] sm:$0x3]
        %v3740 = vld [vmem:[%s3715 + $0xc0] sm:$0xff]
        %v3741 = vld [vmem:[%s3715 + $0xc8] sm:$0xff]
        %v3742 = vld [vmem:[%s3715 + $0xd0] sm:$0x3]
        %v3743 = vld [vmem:[%s3715 + $0xd8] sm:$0xff]
        %v3744 = vld [vmem:[%s3715 + $0xe0] sm:$0xff]
        %v3745 = vld [vmem:[%s3715 + $0xe8] sm:$0x3]
        %v3746 = vld [vmem:[%s3715 + $0xf0] sm:$0xff]
        %v3747 = vld [vmem:[%s3715 + $0xf8] sm:$0xff]
        %v3748 = vld [vmem:[%s3715 + $0x100] sm:$0x3]
        %v3749 = vld [vmem:[%s3715 + $0x108] sm:$0xff]
        %v3750 = vld [vmem:[%s3715 + $0x110] sm:$0xff]
        %v3751 = vld [vmem:[%s3715 + $0x118] sm:$0x3]
        %v3752 = vld [vmem:[%s3715 + $0x120] sm:$0xff]
        %v3753 = vld [vmem:[%s3715 + $0x128] sm:$0xff]
        %v3754 = vld [vmem:[%s3715 + $0x130] sm:$0x3]
        %v3755 = vld [vmem:[%s3715 + $0x138] sm:$0xff]
        %v3756 = vld [vmem:[%s3715 + $0x140] sm:$0xff]
        %v3757 = vld [vmem:[%s3715 + $0x148] sm:$0x3]
        %v3758 = vld [vmem:[%s3715 + $0x150] sm:$0xff]
        %v3759 = vld [vmem:[%s3715 + $0x158] sm:$0xff]
        %v3760 = vld [vmem:[%s3715 + $0x160] sm:$0x3]
        %v3761 = vld [vmem:[%s3715 + $0x168] sm:$0xff]
        %v3762 = vld [vmem:[%s3715 + $0x170] sm:$0xff]
        %v3763 = vld [vmem:[%s3715 + $0x178] sm:$0x3]
        %v3764 = vld [vmem:[%s3715 + $0x180] sm:$0xff]
        %v3765 = vld [vmem:[%s3715 + $0x188] sm:$0xff]
        %v3766 = vld [vmem:[%s3715 + $0x190] sm:$0x3]
        %v3767 = vld [vmem:[%s3715 + $0x198] sm:$0xff]
        %v3768 = vld [vmem:[%s3715 + $0x1a0] sm:$0xff]
        %v3769 = vld [vmem:[%s3715 + $0x1a8] sm:$0x3]
        %v3770 = vld [vmem:[%s1 + $0x12] sm:$0x1]
        %v3771 = vlaneseq
        %v3772 = vshrl.u32 %v3771, 7
        %v3773 = vsub.s32 0, %v3772
        %v3774 = vrot.slane %v3770, %v3773
        %v3775 = vmul.f32 %v3716, %v3774
        %v3776 = vmul.f32 %v3717, %v3774
        %v3777 = vmul.f32 %v3719, %v3774
        %v3778 = vmul.f32 %v3720, %v3774
        %v3779 = vmul.f32 %v3722, %v3774
        %v3780 = vmul.f32 %v3723, %v3774
        %v3781 = vmul.f32 %v3725, %v3774
        %v3782 = vmul.f32 %v3726, %v3774
        %v3783 = vmul.f32 %v3728, %v3774
        %v3784 = vmul.f32 %v3729, %v3774
        %v3785 = vmul.f32 %v3731, %v3774
        %v3786 = vmul.f32 %v3732, %v3774
        %v3787 = vmul.f32 %v3734, %v3774
        %v3788 = vmul.f32 %v3735, %v3774
        %v3789 = vmul.f32 %v3737, %v3774
        %v3790 = vmul.f32 %v3738, %v3774
        %v3791 = vmul.f32 %v3740, %v3774
        %v3792 = vmul.f32 %v3741, %v3774
        %v3793 = vmul.f32 %v3743, %v3774
        %v3794 = vmul.f32 %v3744, %v3774
        %v3795 = vmul.f32 %v3746, %v3774
        %v3796 = vmul.f32 %v3747, %v3774
        %v3797 = vmul.f32 %v3749, %v3774
        %v3798 = vmul.f32 %v3750, %v3774
        %v3799 = vmul.f32 %v3752, %v3774
        %v3800 = vmul.f32 %v3753, %v3774
        %v3801 = vmul.f32 %v3755, %v3774
        %v3802 = vmul.f32 %v3756, %v3774
        %v3803 = vmul.f32 %v3758, %v3774
        %v3804 = vmul.f32 %v3759, %v3774
        %v3805 = vmul.f32 %v3761, %v3774
        %v3806 = vmul.f32 %v3762, %v3774
        %v3807 = vadd.f32 %v3681, %v3775
        %v3808 = vadd.f32 %v3682, %v3776
        %v3809 = vadd.f32 %v3683, %v3777
        %v3810 = vadd.f32 %v3684, %v3778
        %v3811 = vadd.f32 %v3685, %v3779
        %v3812 = vadd.f32 %v3686, %v3780
        %v3813 = vadd.f32 %v3687, %v3781
        %v3814 = vadd.f32 %v3688, %v3782
        %v3815 = vadd.f32 %v3689, %v3783
        %v3816 = vadd.f32 %v3690, %v3784
        %v3817 = vadd.f32 %v3691, %v3785
        %v3818 = vadd.f32 %v3692, %v3786
        %v3819 = vadd.f32 %v3693, %v3787
        %v3820 = vadd.f32 %v3694, %v3788
        %v3821 = vadd.f32 %v3695, %v3789
        %v3822 = vadd.f32 %v3696, %v3790
        %v3823 = vadd.f32 %v3697, %v3791
        %v3824 = vadd.f32 %v3698, %v3792
        %v3825 = vadd.f32 %v3699, %v3793
        %v3826 = vadd.f32 %v3700, %v3794
        %v3827 = vadd.f32 %v3701, %v3795
        %v3828 = vadd.f32 %v3702, %v3796
        %v3829 = vadd.f32 %v3703, %v3797
        %v3830 = vadd.f32 %v3704, %v3798
        %v3831 = vadd.f32 %v3705, %v3799
        %v3832 = vadd.f32 %v3706, %v3800
        %v3833 = vadd.f32 %v3707, %v3801
        %v3834 = vadd.f32 %v3708, %v3802
        %v3835 = vadd.f32 %v3709, %v3803
        %v3836 = vadd.f32 %v3710, %v3804
        %v3837 = vadd.f32 %v3711, %v3805
        %v3838 = vadd.f32 %v3712, %v3806
        %v3839 = vld [vmem:[%s1 + $0x13] sm:$0x1]
        %v3840 = vlaneseq
        %v3841 = vshrl.u32 %v3840, 7
        %v3842 = vsub.s32 0, %v3841
        %v3843 = vrot.slane %v3839, %v3842
        %v3844 = vmul.f32 %v3716, %v3843
        %v3845 = vmul.f32 %v3717, %v3843
        %v3846 = vmul.f32 %v3718, %v3843
        %v3847 = vmul.f32 %v3719, %v3843
        %v3848 = vmul.f32 %v3720, %v3843
        %v3849 = vmul.f32 %v3721, %v3843
        %v3850 = vmul.f32 %v3722, %v3843
        %v3851 = vmul.f32 %v3723, %v3843
        %v3852 = vmul.f32 %v3724, %v3843
        %v3853 = vmul.f32 %v3725, %v3843
        %v3854 = vmul.f32 %v3726, %v3843
        %v3855 = vmul.f32 %v3727, %v3843
        %v3856 = vmul.f32 %v3728, %v3843
        %v3857 = vmul.f32 %v3729, %v3843
        %v3858 = vmul.f32 %v3730, %v3843
        %v3859 = vmul.f32 %v3731, %v3843
        %v3860 = vmul.f32 %v3732, %v3843
        %v3861 = vmul.f32 %v3733, %v3843
        %v3862 = vmul.f32 %v3734, %v3843
        %v3863 = vmul.f32 %v3735, %v3843
        %v3864 = vmul.f32 %v3736, %v3843
        %v3865 = vmul.f32 %v3737, %v3843
        %v3866 = vmul.f32 %v3738, %v3843
        %v3867 = vmul.f32 %v3739, %v3843
        %v3868 = vmul.f32 %v3740, %v3843
        %v3869 = vmul.f32 %v3741, %v3843
        %v3870 = vmul.f32 %v3742, %v3843
        %v3871 = vmul.f32 %v3743, %v3843
        %v3872 = vmul.f32 %v3744, %v3843
        %v3873 = vmul.f32 %v3745, %v3843
        %v3874 = vmul.f32 %v3746, %v3843
        %v3875 = vmul.f32 %v3747, %v3843
        %v3876 = vmul.f32 %v3748, %v3843
        %v3877 = vmul.f32 %v3749, %v3843
        %v3878 = vmul.f32 %v3750, %v3843
        %v3879 = vmul.f32 %v3751, %v3843
        %v3880 = vmul.f32 %v3752, %v3843
        %v3881 = vmul.f32 %v3753, %v3843
        %v3882 = vmul.f32 %v3754, %v3843
        %v3883 = vmul.f32 %v3755, %v3843
        %v3884 = vmul.f32 %v3756, %v3843
        %v3885 = vmul.f32 %v3757, %v3843
        %v3886 = vmul.f32 %v3758, %v3843
        %v3887 = vmul.f32 %v3759, %v3843
        %v3888 = vmul.f32 %v3760, %v3843
        %v3889 = vmul.f32 %v3761, %v3843
        %v3890 = vmul.f32 %v3762, %v3843
        %v3891 = vmul.f32 %v3763, %v3843
        %v3940 = vrot.slane %v3844, 1
        %v3941 = vrot.slane %v3845, 1
        %v3942 = vsel %vm470, %v3940, %v3941
        %v3943 = vrot.slane %v3846, 1
        %v3944 = vsel %vm470, %v3941, %v3943
        %v3945 = vrot.slane %v3847, 1
        %v3946 = vrot.slane %v3848, 1
        %v3947 = vsel %vm470, %v3945, %v3946
        %v3948 = vrot.slane %v3849, 1
        %v3949 = vsel %vm470, %v3946, %v3948
        %v3950 = vrot.slane %v3850, 1
        %v3951 = vrot.slane %v3851, 1
        %v3952 = vsel %vm470, %v3950, %v3951
        %v3953 = vrot.slane %v3852, 1
        %v3954 = vsel %vm470, %v3951, %v3953
        %v3955 = vrot.slane %v3853, 1
        %v3956 = vrot.slane %v3854, 1
        %v3957 = vsel %vm470, %v3955, %v3956
        %v3958 = vrot.slane %v3855, 1
        %v3959 = vsel %vm470, %v3956, %v3958
        %v3960 = vrot.slane %v3856, 1
        %v3961 = vrot.slane %v3857, 1
        %v3962 = vsel %vm470, %v3960, %v3961
        %v3963 = vrot.slane %v3858, 1
        %v3964 = vsel %vm470, %v3961, %v3963
        %v3965 = vrot.slane %v3859, 1
        %v3966 = vrot.slane %v3860, 1
        %v3967 = vsel %vm470, %v3965, %v3966
        %v3968 = vrot.slane %v3861, 1
        %v3969 = vsel %vm470, %v3966, %v3968
        %v3970 = vrot.slane %v3862, 1
        %v3971 = vrot.slane %v3863, 1
        %v3972 = vsel %vm470, %v3970, %v3971
        %v3973 = vrot.slane %v3864, 1
        %v3974 = vsel %vm470, %v3971, %v3973
        %v3975 = vrot.slane %v3865, 1
        %v3976 = vrot.slane %v3866, 1
        %v3977 = vsel %vm470, %v3975, %v3976
        %v3978 = vrot.slane %v3867, 1
        %v3979 = vsel %vm470, %v3976, %v3978
        %v3980 = vrot.slane %v3868, 1
        %v3981 = vrot.slane %v3869, 1
        %v3982 = vsel %vm470, %v3980, %v3981
        %v3983 = vrot.slane %v3870, 1
        %v3984 = vsel %vm470, %v3981, %v3983
        %v3985 = vrot.slane %v3871, 1
        %v3986 = vrot.slane %v3872, 1
        %v3987 = vsel %vm470, %v3985, %v3986
        %v3988 = vrot.slane %v3873, 1
        %v3989 = vsel %vm470, %v3986, %v3988
        %v3990 = vrot.slane %v3874, 1
        %v3991 = vrot.slane %v3875, 1
        %v3992 = vsel %vm470, %v3990, %v3991
        %v3993 = vrot.slane %v3876, 1
        %v3994 = vsel %vm470, %v3991, %v3993
        %v3995 = vrot.slane %v3877, 1
        %v3996 = vrot.slane %v3878, 1
        %v3997 = vsel %vm470, %v3995, %v3996
        %v3998 = vrot.slane %v3879, 1
        %v3999 = vsel %vm470, %v3996, %v3998
        %v4000 = vrot.slane %v3880, 1
        %v4001 = vrot.slane %v3881, 1
        %v4002 = vsel %vm470, %v4000, %v4001
        %v4003 = vrot.slane %v3882, 1
        %v4004 = vsel %vm470, %v4001, %v4003
        %v4005 = vrot.slane %v3883, 1
        %v4006 = vrot.slane %v3884, 1
        %v4007 = vsel %vm470, %v4005, %v4006
        %v4008 = vrot.slane %v3885, 1
        %v4009 = vsel %vm470, %v4006, %v4008
        %v4010 = vrot.slane %v3886, 1
        %v4011 = vrot.slane %v3887, 1
        %v4012 = vsel %vm470, %v4010, %v4011
        %v4013 = vrot.slane %v3888, 1
        %v4014 = vsel %vm470, %v4011, %v4013
        %v4015 = vrot.slane %v3889, 1
        %v4016 = vrot.slane %v3890, 1
        %v4017 = vsel %vm470, %v4015, %v4016
        %v4018 = vrot.slane %v3891, 1
        %v4019 = vsel %vm470, %v4016, %v4018
        %v4052 = vadd.f32 %v3807, %v3942
        %v4053 = vadd.f32 %v3808, %v3944
        %v4054 = vadd.f32 %v3809, %v3947
        %v4055 = vadd.f32 %v3810, %v3949
        %v4056 = vadd.f32 %v3811, %v3952
        %v4057 = vadd.f32 %v3812, %v3954
        %v4058 = vadd.f32 %v3813, %v3957
        %v4059 = vadd.f32 %v3814, %v3959
        %v4060 = vadd.f32 %v3815, %v3962
        %v4061 = vadd.f32 %v3816, %v3964
        %v4062 = vadd.f32 %v3817, %v3967
        %v4063 = vadd.f32 %v3818, %v3969
        %v4064 = vadd.f32 %v3819, %v3972
        %v4065 = vadd.f32 %v3820, %v3974
        %v4066 = vadd.f32 %v3821, %v3977
        %v4067 = vadd.f32 %v3822, %v3979
        %v4068 = vadd.f32 %v3823, %v3982
        %v4069 = vadd.f32 %v3824, %v3984
        %v4070 = vadd.f32 %v3825, %v3987
        %v4071 = vadd.f32 %v3826, %v3989
        %v4072 = vadd.f32 %v3827, %v3992
        %v4073 = vadd.f32 %v3828, %v3994
        %v4074 = vadd.f32 %v3829, %v3997
        %v4075 = vadd.f32 %v3830, %v3999
        %v4076 = vadd.f32 %v3831, %v4002
        %v4077 = vadd.f32 %v3832, %v4004
        %v4078 = vadd.f32 %v3833, %v4007
        %v4079 = vadd.f32 %v3834, %v4009
        %v4080 = vadd.f32 %v3835, %v4012
        %v4081 = vadd.f32 %v3836, %v4014
        %v4082 = vadd.f32 %v3837, %v4017
        %v4083 = vadd.f32 %v3838, %v4019
        %v4084 = vld [vmem:[%s1 + $0x14] sm:$0x1]
        %v4085 = vlaneseq
        %v4086 = vshrl.u32 %v4085, 7
        %v4087 = vsub.s32 0, %v4086
        %v4088 = vrot.slane %v4084, %v4087
        %v4089 = vmul.f32 %v3716, %v4088
        %v4090 = vmul.f32 %v3717, %v4088
        %v4091 = vmul.f32 %v3718, %v4088
        %v4092 = vmul.f32 %v3719, %v4088
        %v4093 = vmul.f32 %v3720, %v4088
        %v4094 = vmul.f32 %v3721, %v4088
        %v4095 = vmul.f32 %v3722, %v4088
        %v4096 = vmul.f32 %v3723, %v4088
        %v4097 = vmul.f32 %v3724, %v4088
        %v4098 = vmul.f32 %v3725, %v4088
        %v4099 = vmul.f32 %v3726, %v4088
        %v4100 = vmul.f32 %v3727, %v4088
        %v4101 = vmul.f32 %v3728, %v4088
        %v4102 = vmul.f32 %v3729, %v4088
        %v4103 = vmul.f32 %v3730, %v4088
        %v4104 = vmul.f32 %v3731, %v4088
        %v4105 = vmul.f32 %v3732, %v4088
        %v4106 = vmul.f32 %v3733, %v4088
        %v4107 = vmul.f32 %v3734, %v4088
        %v4108 = vmul.f32 %v3735, %v4088
        %v4109 = vmul.f32 %v3736, %v4088
        %v4110 = vmul.f32 %v3737, %v4088
        %v4111 = vmul.f32 %v3738, %v4088
        %v4112 = vmul.f32 %v3739, %v4088
        %v4113 = vmul.f32 %v3740, %v4088
        %v4114 = vmul.f32 %v3741, %v4088
        %v4115 = vmul.f32 %v3742, %v4088
        %v4116 = vmul.f32 %v3743, %v4088
        %v4117 = vmul.f32 %v3744, %v4088
        %v4118 = vmul.f32 %v3745, %v4088
        %v4119 = vmul.f32 %v3746, %v4088
        %v4120 = vmul.f32 %v3747, %v4088
        %v4121 = vmul.f32 %v3748, %v4088
        %v4122 = vmul.f32 %v3749, %v4088
        %v4123 = vmul.f32 %v3750, %v4088
        %v4124 = vmul.f32 %v3751, %v4088
        %v4125 = vmul.f32 %v3752, %v4088
        %v4126 = vmul.f32 %v3753, %v4088
        %v4127 = vmul.f32 %v3754, %v4088
        %v4128 = vmul.f32 %v3755, %v4088
        %v4129 = vmul.f32 %v3756, %v4088
        %v4130 = vmul.f32 %v3757, %v4088
        %v4131 = vmul.f32 %v3758, %v4088
        %v4132 = vmul.f32 %v3759, %v4088
        %v4133 = vmul.f32 %v3760, %v4088
        %v4134 = vmul.f32 %v3761, %v4088
        %v4135 = vmul.f32 %v3762, %v4088
        %v4136 = vmul.f32 %v3763, %v4088
        %v4185 = vrot.slane %v4089, 2
        %v4186 = vrot.slane %v4090, 2
        %v4187 = vsel %vm716, %v4185, %v4186
        %v4188 = vrot.slane %v4091, 2
        %v4189 = vsel %vm716, %v4186, %v4188
        %v4190 = vrot.slane %v4092, 2
        %v4191 = vrot.slane %v4093, 2
        %v4192 = vsel %vm716, %v4190, %v4191
        %v4193 = vrot.slane %v4094, 2
        %v4194 = vsel %vm716, %v4191, %v4193
        %v4195 = vrot.slane %v4095, 2
        %v4196 = vrot.slane %v4096, 2
        %v4197 = vsel %vm716, %v4195, %v4196
        %v4198 = vrot.slane %v4097, 2
        %v4199 = vsel %vm716, %v4196, %v4198
        %v4200 = vrot.slane %v4098, 2
        %v4201 = vrot.slane %v4099, 2
        %v4202 = vsel %vm716, %v4200, %v4201
        %v4203 = vrot.slane %v4100, 2
        %v4204 = vsel %vm716, %v4201, %v4203
        %v4205 = vrot.slane %v4101, 2
        %v4206 = vrot.slane %v4102, 2
        %v4207 = vsel %vm716, %v4205, %v4206
        %v4208 = vrot.slane %v4103, 2
        %v4209 = vsel %vm716, %v4206, %v4208
        %v4210 = vrot.slane %v4104, 2
        %v4211 = vrot.slane %v4105, 2
        %v4212 = vsel %vm716, %v4210, %v4211
        %v4213 = vrot.slane %v4106, 2
        %v4214 = vsel %vm716, %v4211, %v4213
        %v4215 = vrot.slane %v4107, 2
        %v4216 = vrot.slane %v4108, 2
        %v4217 = vsel %vm716, %v4215, %v4216
        %v4218 = vrot.slane %v4109, 2
        %v4219 = vsel %vm716, %v4216, %v4218
        %v4220 = vrot.slane %v4110, 2
        %v4221 = vrot.slane %v4111, 2
        %v4222 = vsel %vm716, %v4220, %v4221
        %v4223 = vrot.slane %v4112, 2
        %v4224 = vsel %vm716, %v4221, %v4223
        %v4225 = vrot.slane %v4113, 2
        %v4226 = vrot.slane %v4114, 2
        %v4227 = vsel %vm716, %v4225, %v4226
        %v4228 = vrot.slane %v4115, 2
        %v4229 = vsel %vm716, %v4226, %v4228
        %v4230 = vrot.slane %v4116, 2
        %v4231 = vrot.slane %v4117, 2
        %v4232 = vsel %vm716, %v4230, %v4231
        %v4233 = vrot.slane %v4118, 2
        %v4234 = vsel %vm716, %v4231, %v4233
        %v4235 = vrot.slane %v4119, 2
        %v4236 = vrot.slane %v4120, 2
        %v4237 = vsel %vm716, %v4235, %v4236
        %v4238 = vrot.slane %v4121, 2
        %v4239 = vsel %vm716, %v4236, %v4238
        %v4240 = vrot.slane %v4122, 2
        %v4241 = vrot.slane %v4123, 2
        %v4242 = vsel %vm716, %v4240, %v4241
        %v4243 = vrot.slane %v4124, 2
        %v4244 = vsel %vm716, %v4241, %v4243
        %v4245 = vrot.slane %v4125, 2
        %v4246 = vrot.slane %v4126, 2
        %v4247 = vsel %vm716, %v4245, %v4246
        %v4248 = vrot.slane %v4127, 2
        %v4249 = vsel %vm716, %v4246, %v4248
        %v4250 = vrot.slane %v4128, 2
        %v4251 = vrot.slane %v4129, 2
        %v4252 = vsel %vm716, %v4250, %v4251
        %v4253 = vrot.slane %v4130, 2
        %v4254 = vsel %vm716, %v4251, %v4253
        %v4255 = vrot.slane %v4131, 2
        %v4256 = vrot.slane %v4132, 2
        %v4257 = vsel %vm716, %v4255, %v4256
        %v4258 = vrot.slane %v4133, 2
        %v4259 = vsel %vm716, %v4256, %v4258
        %v4260 = vrot.slane %v4134, 2
        %v4261 = vrot.slane %v4135, 2
        %v4262 = vsel %vm716, %v4260, %v4261
        %v4263 = vrot.slane %v4136, 2
        %v4264 = vsel %vm716, %v4261, %v4263
        %v4297 = vadd.f32 %v4052, %v4187
        %v4298 = vadd.f32 %v4053, %v4189
        %v4299 = vadd.f32 %v4054, %v4192
        %v4300 = vadd.f32 %v4055, %v4194
        %v4301 = vadd.f32 %v4056, %v4197
        %v4302 = vadd.f32 %v4057, %v4199
        %v4303 = vadd.f32 %v4058, %v4202
        %v4304 = vadd.f32 %v4059, %v4204
        %v4305 = vadd.f32 %v4060, %v4207
        %v4306 = vadd.f32 %v4061, %v4209
        %v4307 = vadd.f32 %v4062, %v4212
        %v4308 = vadd.f32 %v4063, %v4214
        %v4309 = vadd.f32 %v4064, %v4217
        %v4310 = vadd.f32 %v4065, %v4219
        %v4311 = vadd.f32 %v4066, %v4222
        %v4312 = vadd.f32 %v4067, %v4224
        %v4313 = vadd.f32 %v4068, %v4227
        %v4314 = vadd.f32 %v4069, %v4229
        %v4315 = vadd.f32 %v4070, %v4232
        %v4316 = vadd.f32 %v4071, %v4234
        %v4317 = vadd.f32 %v4072, %v4237
        %v4318 = vadd.f32 %v4073, %v4239
        %v4319 = vadd.f32 %v4074, %v4242
        %v4320 = vadd.f32 %v4075, %v4244
        %v4321 = vadd.f32 %v4076, %v4247
        %v4322 = vadd.f32 %v4077, %v4249
        %v4323 = vadd.f32 %v4078, %v4252
        %v4324 = vadd.f32 %v4079, %v4254
        %v4325 = vadd.f32 %v4080, %v4257
        %v4326 = vadd.f32 %v4081, %v4259
        %v4327 = vadd.f32 %v4082, %v4262
        %v4328 = vadd.f32 %v4083, %v4264
        %v4329 = vld [vmem:[%s1 + $0x15] sm:$0x1]
        %v4330 = vlaneseq
        %v4331 = vshrl.u32 %v4330, 7
        %v4332 = vsub.s32 0, %v4331
        %v4333 = vrot.slane %v4329, %v4332
        %v4334 = vmul.f32 %v3719, %v4333
        %v4335 = vmul.f32 %v3720, %v4333
        %v4336 = vmul.f32 %v3722, %v4333
        %v4337 = vmul.f32 %v3723, %v4333
        %v4338 = vmul.f32 %v3725, %v4333
        %v4339 = vmul.f32 %v3726, %v4333
        %v4340 = vmul.f32 %v3728, %v4333
        %v4341 = vmul.f32 %v3729, %v4333
        %v4342 = vmul.f32 %v3731, %v4333
        %v4343 = vmul.f32 %v3732, %v4333
        %v4344 = vmul.f32 %v3734, %v4333
        %v4345 = vmul.f32 %v3735, %v4333
        %v4346 = vmul.f32 %v3737, %v4333
        %v4347 = vmul.f32 %v3738, %v4333
        %v4348 = vmul.f32 %v3740, %v4333
        %v4349 = vmul.f32 %v3741, %v4333
        %v4350 = vmul.f32 %v3743, %v4333
        %v4351 = vmul.f32 %v3744, %v4333
        %v4352 = vmul.f32 %v3746, %v4333
        %v4353 = vmul.f32 %v3747, %v4333
        %v4354 = vmul.f32 %v3749, %v4333
        %v4355 = vmul.f32 %v3750, %v4333
        %v4356 = vmul.f32 %v3752, %v4333
        %v4357 = vmul.f32 %v3753, %v4333
        %v4358 = vmul.f32 %v3755, %v4333
        %v4359 = vmul.f32 %v3756, %v4333
        %v4360 = vmul.f32 %v3758, %v4333
        %v4361 = vmul.f32 %v3759, %v4333
        %v4362 = vmul.f32 %v3761, %v4333
        %v4363 = vmul.f32 %v3762, %v4333
        %v4364 = vmul.f32 %v3764, %v4333
        %v4365 = vmul.f32 %v3765, %v4333
        %v4366 = vadd.f32 %v4297, %v4334
        %v4367 = vadd.f32 %v4298, %v4335
        %v4368 = vadd.f32 %v4299, %v4336
        %v4369 = vadd.f32 %v4300, %v4337
        %v4370 = vadd.f32 %v4301, %v4338
        %v4371 = vadd.f32 %v4302, %v4339
        %v4372 = vadd.f32 %v4303, %v4340
        %v4373 = vadd.f32 %v4304, %v4341
        %v4374 = vadd.f32 %v4305, %v4342
        %v4375 = vadd.f32 %v4306, %v4343
        %v4376 = vadd.f32 %v4307, %v4344
        %v4377 = vadd.f32 %v4308, %v4345
        %v4378 = vadd.f32 %v4309, %v4346
        %v4379 = vadd.f32 %v4310, %v4347
        %v4380 = vadd.f32 %v4311, %v4348
        %v4381 = vadd.f32 %v4312, %v4349
        %v4382 = vadd.f32 %v4313, %v4350
        %v4383 = vadd.f32 %v4314, %v4351
        %v4384 = vadd.f32 %v4315, %v4352
        %v4385 = vadd.f32 %v4316, %v4353
        %v4386 = vadd.f32 %v4317, %v4354
        %v4387 = vadd.f32 %v4318, %v4355
        %v4388 = vadd.f32 %v4319, %v4356
        %v4389 = vadd.f32 %v4320, %v4357
        %v4390 = vadd.f32 %v4321, %v4358
        %v4391 = vadd.f32 %v4322, %v4359
        %v4392 = vadd.f32 %v4323, %v4360
        %v4393 = vadd.f32 %v4324, %v4361
        %v4394 = vadd.f32 %v4325, %v4362
        %v4395 = vadd.f32 %v4326, %v4363
        %v4396 = vadd.f32 %v4327, %v4364
        %v4397 = vadd.f32 %v4328, %v4365
        %v4398 = vld [vmem:[%s1 + $0x16] sm:$0x1]
        %v4399 = vlaneseq
        %v4400 = vshrl.u32 %v4399, 7
        %v4401 = vsub.s32 0, %v4400
        %v4402 = vrot.slane %v4398, %v4401
        %v4403 = vmul.f32 %v3719, %v4402
        %v4404 = vmul.f32 %v3720, %v4402
        %v4405 = vmul.f32 %v3721, %v4402
        %v4406 = vmul.f32 %v3722, %v4402
        %v4407 = vmul.f32 %v3723, %v4402
        %v4408 = vmul.f32 %v3724, %v4402
        %v4409 = vmul.f32 %v3725, %v4402
        %v4410 = vmul.f32 %v3726, %v4402
        %v4411 = vmul.f32 %v3727, %v4402
        %v4412 = vmul.f32 %v3728, %v4402
        %v4413 = vmul.f32 %v3729, %v4402
        %v4414 = vmul.f32 %v3730, %v4402
        %v4415 = vmul.f32 %v3731, %v4402
        %v4416 = vmul.f32 %v3732, %v4402
        %v4417 = vmul.f32 %v3733, %v4402
        %v4418 = vmul.f32 %v3734, %v4402
        %v4419 = vmul.f32 %v3735, %v4402
        %v4420 = vmul.f32 %v3736, %v4402
        %v4421 = vmul.f32 %v3737, %v4402
        %v4422 = vmul.f32 %v3738, %v4402
        %v4423 = vmul.f32 %v3739, %v4402
        %v4424 = vmul.f32 %v3740, %v4402
        %v4425 = vmul.f32 %v3741, %v4402
        %v4426 = vmul.f32 %v3742, %v4402
        %v4427 = vmul.f32 %v3743, %v4402
        %v4428 = vmul.f32 %v3744, %v4402
        %v4429 = vmul.f32 %v3745, %v4402
        %v4430 = vmul.f32 %v3746, %v4402
        %v4431 = vmul.f32 %v3747, %v4402
        %v4432 = vmul.f32 %v3748, %v4402
        %v4433 = vmul.f32 %v3749, %v4402
        %v4434 = vmul.f32 %v3750, %v4402
        %v4435 = vmul.f32 %v3751, %v4402
        %v4436 = vmul.f32 %v3752, %v4402
        %v4437 = vmul.f32 %v3753, %v4402
        %v4438 = vmul.f32 %v3754, %v4402
        %v4439 = vmul.f32 %v3755, %v4402
        %v4440 = vmul.f32 %v3756, %v4402
        %v4441 = vmul.f32 %v3757, %v4402
        %v4442 = vmul.f32 %v3758, %v4402
        %v4443 = vmul.f32 %v3759, %v4402
        %v4444 = vmul.f32 %v3760, %v4402
        %v4445 = vmul.f32 %v3761, %v4402
        %v4446 = vmul.f32 %v3762, %v4402
        %v4447 = vmul.f32 %v3763, %v4402
        %v4448 = vmul.f32 %v3764, %v4402
        %v4449 = vmul.f32 %v3765, %v4402
        %v4450 = vmul.f32 %v3766, %v4402
        %v4499 = vrot.slane %v4403, 1
        %v4500 = vrot.slane %v4404, 1
        %v4501 = vsel %vm470, %v4499, %v4500
        %v4502 = vrot.slane %v4405, 1
        %v4503 = vsel %vm470, %v4500, %v4502
        %v4504 = vrot.slane %v4406, 1
        %v4505 = vrot.slane %v4407, 1
        %v4506 = vsel %vm470, %v4504, %v4505
        %v4507 = vrot.slane %v4408, 1
        %v4508 = vsel %vm470, %v4505, %v4507
        %v4509 = vrot.slane %v4409, 1
        %v4510 = vrot.slane %v4410, 1
        %v4511 = vsel %vm470, %v4509, %v4510
        %v4512 = vrot.slane %v4411, 1
        %v4513 = vsel %vm470, %v4510, %v4512
        %v4514 = vrot.slane %v4412, 1
        %v4515 = vrot.slane %v4413, 1
        %v4516 = vsel %vm470, %v4514, %v4515
        %v4517 = vrot.slane %v4414, 1
        %v4518 = vsel %vm470, %v4515, %v4517
        %v4519 = vrot.slane %v4415, 1
        %v4520 = vrot.slane %v4416, 1
        %v4521 = vsel %vm470, %v4519, %v4520
        %v4522 = vrot.slane %v4417, 1
        %v4523 = vsel %vm470, %v4520, %v4522
        %v4524 = vrot.slane %v4418, 1
        %v4525 = vrot.slane %v4419, 1
        %v4526 = vsel %vm470, %v4524, %v4525
        %v4527 = vrot.slane %v4420, 1
        %v4528 = vsel %vm470, %v4525, %v4527
        %v4529 = vrot.slane %v4421, 1
        %v4530 = vrot.slane %v4422, 1
        %v4531 = vsel %vm470, %v4529, %v4530
        %v4532 = vrot.slane %v4423, 1
        %v4533 = vsel %vm470, %v4530, %v4532
        %v4534 = vrot.slane %v4424, 1
        %v4535 = vrot.slane %v4425, 1
        %v4536 = vsel %vm470, %v4534, %v4535
        %v4537 = vrot.slane %v4426, 1
        %v4538 = vsel %vm470, %v4535, %v4537
        %v4539 = vrot.slane %v4427, 1
        %v4540 = vrot.slane %v4428, 1
        %v4541 = vsel %vm470, %v4539, %v4540
        %v4542 = vrot.slane %v4429, 1
        %v4543 = vsel %vm470, %v4540, %v4542
        %v4544 = vrot.slane %v4430, 1
        %v4545 = vrot.slane %v4431, 1
        %v4546 = vsel %vm470, %v4544, %v4545
        %v4547 = vrot.slane %v4432, 1
        %v4548 = vsel %vm470, %v4545, %v4547
        %v4549 = vrot.slane %v4433, 1
        %v4550 = vrot.slane %v4434, 1
        %v4551 = vsel %vm470, %v4549, %v4550
        %v4552 = vrot.slane %v4435, 1
        %v4553 = vsel %vm470, %v4550, %v4552
        %v4554 = vrot.slane %v4436, 1
        %v4555 = vrot.slane %v4437, 1
        %v4556 = vsel %vm470, %v4554, %v4555
        %v4557 = vrot.slane %v4438, 1
        %v4558 = vsel %vm470, %v4555, %v4557
        %v4559 = vrot.slane %v4439, 1
        %v4560 = vrot.slane %v4440, 1
        %v4561 = vsel %vm470, %v4559, %v4560
        %v4562 = vrot.slane %v4441, 1
        %v4563 = vsel %vm470, %v4560, %v4562
        %v4564 = vrot.slane %v4442, 1
        %v4565 = vrot.slane %v4443, 1
        %v4566 = vsel %vm470, %v4564, %v4565
        %v4567 = vrot.slane %v4444, 1
        %v4568 = vsel %vm470, %v4565, %v4567
        %v4569 = vrot.slane %v4445, 1
        %v4570 = vrot.slane %v4446, 1
        %v4571 = vsel %vm470, %v4569, %v4570
        %v4572 = vrot.slane %v4447, 1
        %v4573 = vsel %vm470, %v4570, %v4572
        %v4574 = vrot.slane %v4448, 1
        %v4575 = vrot.slane %v4449, 1
        %v4576 = vsel %vm470, %v4574, %v4575
        %v4577 = vrot.slane %v4450, 1
        %v4578 = vsel %vm470, %v4575, %v4577
        %v4611 = vadd.f32 %v4366, %v4501
        %v4612 = vadd.f32 %v4367, %v4503
        %v4613 = vadd.f32 %v4368, %v4506
        %v4614 = vadd.f32 %v4369, %v4508
        %v4615 = vadd.f32 %v4370, %v4511
        %v4616 = vadd.f32 %v4371, %v4513
        %v4617 = vadd.f32 %v4372, %v4516
        %v4618 = vadd.f32 %v4373, %v4518
        %v4619 = vadd.f32 %v4374, %v4521
        %v4620 = vadd.f32 %v4375, %v4523
        %v4621 = vadd.f32 %v4376, %v4526
        %v4622 = vadd.f32 %v4377, %v4528
        %v4623 = vadd.f32 %v4378, %v4531
        %v4624 = vadd.f32 %v4379, %v4533
        %v4625 = vadd.f32 %v4380, %v4536
        %v4626 = vadd.f32 %v4381, %v4538
        %v4627 = vadd.f32 %v4382, %v4541
        %v4628 = vadd.f32 %v4383, %v4543
        %v4629 = vadd.f32 %v4384, %v4546
        %v4630 = vadd.f32 %v4385, %v4548
        %v4631 = vadd.f32 %v4386, %v4551
        %v4632 = vadd.f32 %v4387, %v4553
        %v4633 = vadd.f32 %v4388, %v4556
        %v4634 = vadd.f32 %v4389, %v4558
        %v4635 = vadd.f32 %v4390, %v4561
        %v4636 = vadd.f32 %v4391, %v4563
        %v4637 = vadd.f32 %v4392, %v4566
        %v4638 = vadd.f32 %v4393, %v4568
        %v4639 = vadd.f32 %v4394, %v4571
        %v4640 = vadd.f32 %v4395, %v4573
        %v4641 = vadd.f32 %v4396, %v4576
        %v4642 = vadd.f32 %v4397, %v4578
        %v4643 = vld [vmem:[%s1 + $0x17] sm:$0x1]
        %v4644 = vlaneseq
        %v4645 = vshrl.u32 %v4644, 7
        %v4646 = vsub.s32 0, %v4645
        %v4647 = vrot.slane %v4643, %v4646
        %v4648 = vmul.f32 %v3719, %v4647
        %v4649 = vmul.f32 %v3720, %v4647
        %v4650 = vmul.f32 %v3721, %v4647
        %v4651 = vmul.f32 %v3722, %v4647
        %v4652 = vmul.f32 %v3723, %v4647
        %v4653 = vmul.f32 %v3724, %v4647
        %v4654 = vmul.f32 %v3725, %v4647
        %v4655 = vmul.f32 %v3726, %v4647
        %v4656 = vmul.f32 %v3727, %v4647
        %v4657 = vmul.f32 %v3728, %v4647
        %v4658 = vmul.f32 %v3729, %v4647
        %v4659 = vmul.f32 %v3730, %v4647
        %v4660 = vmul.f32 %v3731, %v4647
        %v4661 = vmul.f32 %v3732, %v4647
        %v4662 = vmul.f32 %v3733, %v4647
        %v4663 = vmul.f32 %v3734, %v4647
        %v4664 = vmul.f32 %v3735, %v4647
        %v4665 = vmul.f32 %v3736, %v4647
        %v4666 = vmul.f32 %v3737, %v4647
        %v4667 = vmul.f32 %v3738, %v4647
        %v4668 = vmul.f32 %v3739, %v4647
        %v4669 = vmul.f32 %v3740, %v4647
        %v4670 = vmul.f32 %v3741, %v4647
        %v4671 = vmul.f32 %v3742, %v4647
        %v4672 = vmul.f32 %v3743, %v4647
        %v4673 = vmul.f32 %v3744, %v4647
        %v4674 = vmul.f32 %v3745, %v4647
        %v4675 = vmul.f32 %v3746, %v4647
        %v4676 = vmul.f32 %v3747, %v4647
        %v4677 = vmul.f32 %v3748, %v4647
        %v4678 = vmul.f32 %v3749, %v4647
        %v4679 = vmul.f32 %v3750, %v4647
        %v4680 = vmul.f32 %v3751, %v4647
        %v4681 = vmul.f32 %v3752, %v4647
        %v4682 = vmul.f32 %v3753, %v4647
        %v4683 = vmul.f32 %v3754, %v4647
        %v4684 = vmul.f32 %v3755, %v4647
        %v4685 = vmul.f32 %v3756, %v4647
        %v4686 = vmul.f32 %v3757, %v4647
        %v4687 = vmul.f32 %v3758, %v4647
        %v4688 = vmul.f32 %v3759, %v4647
        %v4689 = vmul.f32 %v3760, %v4647
        %v4690 = vmul.f32 %v3761, %v4647
        %v4691 = vmul.f32 %v3762, %v4647
        %v4692 = vmul.f32 %v3763, %v4647
        %v4693 = vmul.f32 %v3764, %v4647
        %v4694 = vmul.f32 %v3765, %v4647
        %v4695 = vmul.f32 %v3766, %v4647
        %v4744 = vrot.slane %v4648, 2
        %v4745 = vrot.slane %v4649, 2
        %v4746 = vsel %vm716, %v4744, %v4745
        %v4747 = vrot.slane %v4650, 2
        %v4748 = vsel %vm716, %v4745, %v4747
        %v4749 = vrot.slane %v4651, 2
        %v4750 = vrot.slane %v4652, 2
        %v4751 = vsel %vm716, %v4749, %v4750
        %v4752 = vrot.slane %v4653, 2
        %v4753 = vsel %vm716, %v4750, %v4752
        %v4754 = vrot.slane %v4654, 2
        %v4755 = vrot.slane %v4655, 2
        %v4756 = vsel %vm716, %v4754, %v4755
        %v4757 = vrot.slane %v4656, 2
        %v4758 = vsel %vm716, %v4755, %v4757
        %v4759 = vrot.slane %v4657, 2
        %v4760 = vrot.slane %v4658, 2
        %v4761 = vsel %vm716, %v4759, %v4760
        %v4762 = vrot.slane %v4659, 2
        %v4763 = vsel %vm716, %v4760, %v4762
        %v4764 = vrot.slane %v4660, 2
        %v4765 = vrot.slane %v4661, 2
        %v4766 = vsel %vm716, %v4764, %v4765
        %v4767 = vrot.slane %v4662, 2
        %v4768 = vsel %vm716, %v4765, %v4767
        %v4769 = vrot.slane %v4663, 2
        %v4770 = vrot.slane %v4664, 2
        %v4771 = vsel %vm716, %v4769, %v4770
        %v4772 = vrot.slane %v4665, 2
        %v4773 = vsel %vm716, %v4770, %v4772
        %v4774 = vrot.slane %v4666, 2
        %v4775 = vrot.slane %v4667, 2
        %v4776 = vsel %vm716, %v4774, %v4775
        %v4777 = vrot.slane %v4668, 2
        %v4778 = vsel %vm716, %v4775, %v4777
        %v4779 = vrot.slane %v4669, 2
        %v4780 = vrot.slane %v4670, 2
        %v4781 = vsel %vm716, %v4779, %v4780
        %v4782 = vrot.slane %v4671, 2
        %v4783 = vsel %vm716, %v4780, %v4782
        %v4784 = vrot.slane %v4672, 2
        %v4785 = vrot.slane %v4673, 2
        %v4786 = vsel %vm716, %v4784, %v4785
        %v4787 = vrot.slane %v4674, 2
        %v4788 = vsel %vm716, %v4785, %v4787
        %v4789 = vrot.slane %v4675, 2
        %v4790 = vrot.slane %v4676, 2
        %v4791 = vsel %vm716, %v4789, %v4790
        %v4792 = vrot.slane %v4677, 2
        %v4793 = vsel %vm716, %v4790, %v4792
        %v4794 = vrot.slane %v4678, 2
        %v4795 = vrot.slane %v4679, 2
        %v4796 = vsel %vm716, %v4794, %v4795
        %v4797 = vrot.slane %v4680, 2
        %v4798 = vsel %vm716, %v4795, %v4797
        %v4799 = vrot.slane %v4681, 2
        %v4800 = vrot.slane %v4682, 2
        %v4801 = vsel %vm716, %v4799, %v4800
        %v4802 = vrot.slane %v4683, 2
        %v4803 = vsel %vm716, %v4800, %v4802
        %v4804 = vrot.slane %v4684, 2
        %v4805 = vrot.slane %v4685, 2
        %v4806 = vsel %vm716, %v4804, %v4805
        %v4807 = vrot.slane %v4686, 2
        %v4808 = vsel %vm716, %v4805, %v4807
        %v4809 = vrot.slane %v4687, 2
        %v4810 = vrot.slane %v4688, 2
        %v4811 = vsel %vm716, %v4809, %v4810
        %v4812 = vrot.slane %v4689, 2
        %v4813 = vsel %vm716, %v4810, %v4812
        %v4814 = vrot.slane %v4690, 2
        %v4815 = vrot.slane %v4691, 2
        %v4816 = vsel %vm716, %v4814, %v4815
        %v4817 = vrot.slane %v4692, 2
        %v4818 = vsel %vm716, %v4815, %v4817
        %v4819 = vrot.slane %v4693, 2
        %v4820 = vrot.slane %v4694, 2
        %v4821 = vsel %vm716, %v4819, %v4820
        %v4822 = vrot.slane %v4695, 2
        %v4823 = vsel %vm716, %v4820, %v4822
        %v4856 = vadd.f32 %v4611, %v4746
        %v4857 = vadd.f32 %v4612, %v4748
        %v4858 = vadd.f32 %v4613, %v4751
        %v4859 = vadd.f32 %v4614, %v4753
        %v4860 = vadd.f32 %v4615, %v4756
        %v4861 = vadd.f32 %v4616, %v4758
        %v4862 = vadd.f32 %v4617, %v4761
        %v4863 = vadd.f32 %v4618, %v4763
        %v4864 = vadd.f32 %v4619, %v4766
        %v4865 = vadd.f32 %v4620, %v4768
        %v4866 = vadd.f32 %v4621, %v4771
        %v4867 = vadd.f32 %v4622, %v4773
        %v4868 = vadd.f32 %v4623, %v4776
        %v4869 = vadd.f32 %v4624, %v4778
        %v4870 = vadd.f32 %v4625, %v4781
        %v4871 = vadd.f32 %v4626, %v4783
        %v4872 = vadd.f32 %v4627, %v4786
        %v4873 = vadd.f32 %v4628, %v4788
        %v4874 = vadd.f32 %v4629, %v4791
        %v4875 = vadd.f32 %v4630, %v4793
        %v4876 = vadd.f32 %v4631, %v4796
        %v4877 = vadd.f32 %v4632, %v4798
        %v4878 = vadd.f32 %v4633, %v4801
        %v4879 = vadd.f32 %v4634, %v4803
        %v4880 = vadd.f32 %v4635, %v4806
        %v4881 = vadd.f32 %v4636, %v4808
        %v4882 = vadd.f32 %v4637, %v4811
        %v4883 = vadd.f32 %v4638, %v4813
        %v4884 = vadd.f32 %v4639, %v4816
        %v4885 = vadd.f32 %v4640, %v4818
        %v4886 = vadd.f32 %v4641, %v4821
        %v4887 = vadd.f32 %v4642, %v4823
        %v4888 = vld [vmem:[%s1 + $0x18] sm:$0x1]
        %v4889 = vlaneseq
        %v4890 = vshrl.u32 %v4889, 7
        %v4891 = vsub.s32 0, %v4890
        %v4892 = vrot.slane %v4888, %v4891
        %v4893 = vmul.f32 %v3722, %v4892
        %v4894 = vmul.f32 %v3723, %v4892
        %v4895 = vmul.f32 %v3725, %v4892
        %v4896 = vmul.f32 %v3726, %v4892
        %v4897 = vmul.f32 %v3728, %v4892
        %v4898 = vmul.f32 %v3729, %v4892
        %v4899 = vmul.f32 %v3731, %v4892
        %v4900 = vmul.f32 %v3732, %v4892
        %v4901 = vmul.f32 %v3734, %v4892
        %v4902 = vmul.f32 %v3735, %v4892
        %v4903 = vmul.f32 %v3737, %v4892
        %v4904 = vmul.f32 %v3738, %v4892
        %v4905 = vmul.f32 %v3740, %v4892
        %v4906 = vmul.f32 %v3741, %v4892
        %v4907 = vmul.f32 %v3743, %v4892
        %v4908 = vmul.f32 %v3744, %v4892
        %v4909 = vmul.f32 %v3746, %v4892
        %v4910 = vmul.f32 %v3747, %v4892
        %v4911 = vmul.f32 %v3749, %v4892
        %v4912 = vmul.f32 %v3750, %v4892
        %v4913 = vmul.f32 %v3752, %v4892
        %v4914 = vmul.f32 %v3753, %v4892
        %v4915 = vmul.f32 %v3755, %v4892
        %v4916 = vmul.f32 %v3756, %v4892
        %v4917 = vmul.f32 %v3758, %v4892
        %v4918 = vmul.f32 %v3759, %v4892
        %v4919 = vmul.f32 %v3761, %v4892
        %v4920 = vmul.f32 %v3762, %v4892
        %v4921 = vmul.f32 %v3764, %v4892
        %v4922 = vmul.f32 %v3765, %v4892
        %v4923 = vmul.f32 %v3767, %v4892
        %v4924 = vmul.f32 %v3768, %v4892
        %v4925 = vadd.f32 %v4856, %v4893
        %v4926 = vadd.f32 %v4857, %v4894
        %v4927 = vadd.f32 %v4858, %v4895
        %v4928 = vadd.f32 %v4859, %v4896
        %v4929 = vadd.f32 %v4860, %v4897
        %v4930 = vadd.f32 %v4861, %v4898
        %v4931 = vadd.f32 %v4862, %v4899
        %v4932 = vadd.f32 %v4863, %v4900
        %v4933 = vadd.f32 %v4864, %v4901
        %v4934 = vadd.f32 %v4865, %v4902
        %v4935 = vadd.f32 %v4866, %v4903
        %v4936 = vadd.f32 %v4867, %v4904
        %v4937 = vadd.f32 %v4868, %v4905
        %v4938 = vadd.f32 %v4869, %v4906
        %v4939 = vadd.f32 %v4870, %v4907
        %v4940 = vadd.f32 %v4871, %v4908
        %v4941 = vadd.f32 %v4872, %v4909
        %v4942 = vadd.f32 %v4873, %v4910
        %v4943 = vadd.f32 %v4874, %v4911
        %v4944 = vadd.f32 %v4875, %v4912
        %v4945 = vadd.f32 %v4876, %v4913
        %v4946 = vadd.f32 %v4877, %v4914
        %v4947 = vadd.f32 %v4878, %v4915
        %v4948 = vadd.f32 %v4879, %v4916
        %v4949 = vadd.f32 %v4880, %v4917
        %v4950 = vadd.f32 %v4881, %v4918
        %v4951 = vadd.f32 %v4882, %v4919
        %v4952 = vadd.f32 %v4883, %v4920
        %v4953 = vadd.f32 %v4884, %v4921
        %v4954 = vadd.f32 %v4885, %v4922
        %v4955 = vadd.f32 %v4886, %v4923
        %v4956 = vadd.f32 %v4887, %v4924
        %v4957 = vld [vmem:[%s1 + $0x19] sm:$0x1]
        %v4958 = vlaneseq
        %v4959 = vshrl.u32 %v4958, 7
        %v4960 = vsub.s32 0, %v4959
        %v4961 = vrot.slane %v4957, %v4960
        %v4962 = vmul.f32 %v3722, %v4961
        %v4963 = vmul.f32 %v3723, %v4961
        %v4964 = vmul.f32 %v3724, %v4961
        %v4965 = vmul.f32 %v3725, %v4961
        %v4966 = vmul.f32 %v3726, %v4961
        %v4967 = vmul.f32 %v3727, %v4961
        %v4968 = vmul.f32 %v3728, %v4961
        %v4969 = vmul.f32 %v3729, %v4961
        %v4970 = vmul.f32 %v3730, %v4961
        %v4971 = vmul.f32 %v3731, %v4961
        %v4972 = vmul.f32 %v3732, %v4961
        %v4973 = vmul.f32 %v3733, %v4961
        %v4974 = vmul.f32 %v3734, %v4961
        %v4975 = vmul.f32 %v3735, %v4961
        %v4976 = vmul.f32 %v3736, %v4961
        %v4977 = vmul.f32 %v3737, %v4961
        %v4978 = vmul.f32 %v3738, %v4961
        %v4979 = vmul.f32 %v3739, %v4961
        %v4980 = vmul.f32 %v3740, %v4961
        %v4981 = vmul.f32 %v3741, %v4961
        %v4982 = vmul.f32 %v3742, %v4961
        %v4983 = vmul.f32 %v3743, %v4961
        %v4984 = vmul.f32 %v3744, %v4961
        %v4985 = vmul.f32 %v3745, %v4961
        %v4986 = vmul.f32 %v3746, %v4961
        %v4987 = vmul.f32 %v3747, %v4961
        %v4988 = vmul.f32 %v3748, %v4961
        %v4989 = vmul.f32 %v3749, %v4961
        %v4990 = vmul.f32 %v3750, %v4961
        %v4991 = vmul.f32 %v3751, %v4961
        %v4992 = vmul.f32 %v3752, %v4961
        %v4993 = vmul.f32 %v3753, %v4961
        %v4994 = vmul.f32 %v3754, %v4961
        %v4995 = vmul.f32 %v3755, %v4961
        %v4996 = vmul.f32 %v3756, %v4961
        %v4997 = vmul.f32 %v3757, %v4961
        %v4998 = vmul.f32 %v3758, %v4961
        %v4999 = vmul.f32 %v3759, %v4961
        %v5000 = vmul.f32 %v3760, %v4961
        %v5001 = vmul.f32 %v3761, %v4961
        %v5002 = vmul.f32 %v3762, %v4961
        %v5003 = vmul.f32 %v3763, %v4961
        %v5004 = vmul.f32 %v3764, %v4961
        %v5005 = vmul.f32 %v3765, %v4961
        %v5006 = vmul.f32 %v3766, %v4961
        %v5007 = vmul.f32 %v3767, %v4961
        %v5008 = vmul.f32 %v3768, %v4961
        %v5009 = vmul.f32 %v3769, %v4961
        %v5058 = vrot.slane %v4962, 1
        %v5059 = vrot.slane %v4963, 1
        %v5060 = vsel %vm470, %v5058, %v5059
        %v5061 = vrot.slane %v4964, 1
        %v5062 = vsel %vm470, %v5059, %v5061
        %v5063 = vrot.slane %v4965, 1
        %v5064 = vrot.slane %v4966, 1
        %v5065 = vsel %vm470, %v5063, %v5064
        %v5066 = vrot.slane %v4967, 1
        %v5067 = vsel %vm470, %v5064, %v5066
        %v5068 = vrot.slane %v4968, 1
        %v5069 = vrot.slane %v4969, 1
        %v5070 = vsel %vm470, %v5068, %v5069
        %v5071 = vrot.slane %v4970, 1
        %v5072 = vsel %vm470, %v5069, %v5071
        %v5073 = vrot.slane %v4971, 1
        %v5074 = vrot.slane %v4972, 1
        %v5075 = vsel %vm470, %v5073, %v5074
        %v5076 = vrot.slane %v4973, 1
        %v5077 = vsel %vm470, %v5074, %v5076
        %v5078 = vrot.slane %v4974, 1
        %v5079 = vrot.slane %v4975, 1
        %v5080 = vsel %vm470, %v5078, %v5079
        %v5081 = vrot.slane %v4976, 1
        %v5082 = vsel %vm470, %v5079, %v5081
        %v5083 = vrot.slane %v4977, 1
        %v5084 = vrot.slane %v4978, 1
        %v5085 = vsel %vm470, %v5083, %v5084
        %v5086 = vrot.slane %v4979, 1
        %v5087 = vsel %vm470, %v5084, %v5086
        %v5088 = vrot.slane %v4980, 1
        %v5089 = vrot.slane %v4981, 1
        %v5090 = vsel %vm470, %v5088, %v5089
        %v5091 = vrot.slane %v4982, 1
        %v5092 = vsel %vm470, %v5089, %v5091
        %v5093 = vrot.slane %v4983, 1
        %v5094 = vrot.slane %v4984, 1
        %v5095 = vsel %vm470, %v5093, %v5094
        %v5096 = vrot.slane %v4985, 1
        %v5097 = vsel %vm470, %v5094, %v5096
        %v5098 = vrot.slane %v4986, 1
        %v5099 = vrot.slane %v4987, 1
        %v5100 = vsel %vm470, %v5098, %v5099
        %v5101 = vrot.slane %v4988, 1
        %v5102 = vsel %vm470, %v5099, %v5101
        %v5103 = vrot.slane %v4989, 1
        %v5104 = vrot.slane %v4990, 1
        %v5105 = vsel %vm470, %v5103, %v5104
        %v5106 = vrot.slane %v4991, 1
        %v5107 = vsel %vm470, %v5104, %v5106
        %v5108 = vrot.slane %v4992, 1
        %v5109 = vrot.slane %v4993, 1
        %v5110 = vsel %vm470, %v5108, %v5109
        %v5111 = vrot.slane %v4994, 1
        %v5112 = vsel %vm470, %v5109, %v5111
        %v5113 = vrot.slane %v4995, 1
        %v5114 = vrot.slane %v4996, 1
        %v5115 = vsel %vm470, %v5113, %v5114
        %v5116 = vrot.slane %v4997, 1
        %v5117 = vsel %vm470, %v5114, %v5116
        %v5118 = vrot.slane %v4998, 1
        %v5119 = vrot.slane %v4999, 1
        %v5120 = vsel %vm470, %v5118, %v5119
        %v5121 = vrot.slane %v5000, 1
        %v5122 = vsel %vm470, %v5119, %v5121
        %v5123 = vrot.slane %v5001, 1
        %v5124 = vrot.slane %v5002, 1
        %v5125 = vsel %vm470, %v5123, %v5124
        %v5126 = vrot.slane %v5003, 1
        %v5127 = vsel %vm470, %v5124, %v5126
        %v5128 = vrot.slane %v5004, 1
        %v5129 = vrot.slane %v5005, 1
        %v5130 = vsel %vm470, %v5128, %v5129
        %v5131 = vrot.slane %v5006, 1
        %v5132 = vsel %vm470, %v5129, %v5131
        %v5133 = vrot.slane %v5007, 1
        %v5134 = vrot.slane %v5008, 1
        %v5135 = vsel %vm470, %v5133, %v5134
        %v5136 = vrot.slane %v5009, 1
        %v5137 = vsel %vm470, %v5134, %v5136
        %v5170 = vadd.f32 %v4925, %v5060
        %v5171 = vadd.f32 %v4926, %v5062
        %v5172 = vadd.f32 %v4927, %v5065
        %v5173 = vadd.f32 %v4928, %v5067
        %v5174 = vadd.f32 %v4929, %v5070
        %v5175 = vadd.f32 %v4930, %v5072
        %v5176 = vadd.f32 %v4931, %v5075
        %v5177 = vadd.f32 %v4932, %v5077
        %v5178 = vadd.f32 %v4933, %v5080
        %v5179 = vadd.f32 %v4934, %v5082
        %v5180 = vadd.f32 %v4935, %v5085
        %v5181 = vadd.f32 %v4936, %v5087
        %v5182 = vadd.f32 %v4937, %v5090
        %v5183 = vadd.f32 %v4938, %v5092
        %v5184 = vadd.f32 %v4939, %v5095
        %v5185 = vadd.f32 %v4940, %v5097
        %v5186 = vadd.f32 %v4941, %v5100
        %v5187 = vadd.f32 %v4942, %v5102
        %v5188 = vadd.f32 %v4943, %v5105
        %v5189 = vadd.f32 %v4944, %v5107
        %v5190 = vadd.f32 %v4945, %v5110
        %v5191 = vadd.f32 %v4946, %v5112
        %v5192 = vadd.f32 %v4947, %v5115
        %v5193 = vadd.f32 %v4948, %v5117
        %v5194 = vadd.f32 %v4949, %v5120
        %v5195 = vadd.f32 %v4950, %v5122
        %v5196 = vadd.f32 %v4951, %v5125
        %v5197 = vadd.f32 %v4952, %v5127
        %v5198 = vadd.f32 %v4953, %v5130
        %v5199 = vadd.f32 %v4954, %v5132
        %v5200 = vadd.f32 %v4955, %v5135
        %v5201 = vadd.f32 %v4956, %v5137
        %v5202 = vld [vmem:[%s1 + $0x1a] sm:$0x1]
        %v5203 = vlaneseq
        %v5204 = vshrl.u32 %v5203, 7
        %v5205 = vsub.s32 0, %v5204
        %v5206 = vrot.slane %v5202, %v5205
        %v5207 = vmul.f32 %v3722, %v5206
        %v5208 = vmul.f32 %v3723, %v5206
        %v5209 = vmul.f32 %v3724, %v5206
        %v5210 = vmul.f32 %v3725, %v5206
        %v5211 = vmul.f32 %v3726, %v5206
        %v5212 = vmul.f32 %v3727, %v5206
        %v5213 = vmul.f32 %v3728, %v5206
        %v5214 = vmul.f32 %v3729, %v5206
        %v5215 = vmul.f32 %v3730, %v5206
        %v5216 = vmul.f32 %v3731, %v5206
        %v5217 = vmul.f32 %v3732, %v5206
        %v5218 = vmul.f32 %v3733, %v5206
        %v5219 = vmul.f32 %v3734, %v5206
        %v5220 = vmul.f32 %v3735, %v5206
        %v5221 = vmul.f32 %v3736, %v5206
        %v5222 = vmul.f32 %v3737, %v5206
        %v5223 = vmul.f32 %v3738, %v5206
        %v5224 = vmul.f32 %v3739, %v5206
        %v5225 = vmul.f32 %v3740, %v5206
        %v5226 = vmul.f32 %v3741, %v5206
        %v5227 = vmul.f32 %v3742, %v5206
        %v5228 = vmul.f32 %v3743, %v5206
        %v5229 = vmul.f32 %v3744, %v5206
        %v5230 = vmul.f32 %v3745, %v5206
        %v5231 = vmul.f32 %v3746, %v5206
        %v5232 = vmul.f32 %v3747, %v5206
        %v5233 = vmul.f32 %v3748, %v5206
        %v5234 = vmul.f32 %v3749, %v5206
        %v5235 = vmul.f32 %v3750, %v5206
        %v5236 = vmul.f32 %v3751, %v5206
        %v5237 = vmul.f32 %v3752, %v5206
        %v5238 = vmul.f32 %v3753, %v5206
        %v5239 = vmul.f32 %v3754, %v5206
        %v5240 = vmul.f32 %v3755, %v5206
        %v5241 = vmul.f32 %v3756, %v5206
        %v5242 = vmul.f32 %v3757, %v5206
        %v5243 = vmul.f32 %v3758, %v5206
        %v5244 = vmul.f32 %v3759, %v5206
        %v5245 = vmul.f32 %v3760, %v5206
        %v5246 = vmul.f32 %v3761, %v5206
        %v5247 = vmul.f32 %v3762, %v5206
        %v5248 = vmul.f32 %v3763, %v5206
        %v5249 = vmul.f32 %v3764, %v5206
        %v5250 = vmul.f32 %v3765, %v5206
        %v5251 = vmul.f32 %v3766, %v5206
        %v5252 = vmul.f32 %v3767, %v5206
        %v5253 = vmul.f32 %v3768, %v5206
        %v5254 = vmul.f32 %v3769, %v5206
        %v5303 = vrot.slane %v5207, 2
        %v5304 = vrot.slane %v5208, 2
        %v5305 = vsel %vm716, %v5303, %v5304
        %v5306 = vrot.slane %v5209, 2
        %v5307 = vsel %vm716, %v5304, %v5306
        %v5308 = vrot.slane %v5210, 2
        %v5309 = vrot.slane %v5211, 2
        %v5310 = vsel %vm716, %v5308, %v5309
        %v5311 = vrot.slane %v5212, 2
        %v5312 = vsel %vm716, %v5309, %v5311
        %v5313 = vrot.slane %v5213, 2
        %v5314 = vrot.slane %v5214, 2
        %v5315 = vsel %vm716, %v5313, %v5314
        %v5316 = vrot.slane %v5215, 2
        %v5317 = vsel %vm716, %v5314, %v5316
        %v5318 = vrot.slane %v5216, 2
        %v5319 = vrot.slane %v5217, 2
        %v5320 = vsel %vm716, %v5318, %v5319
        %v5321 = vrot.slane %v5218, 2
        %v5322 = vsel %vm716, %v5319, %v5321
        %v5323 = vrot.slane %v5219, 2
        %v5324 = vrot.slane %v5220, 2
        %v5325 = vsel %vm716, %v5323, %v5324
        %v5326 = vrot.slane %v5221, 2
        %v5327 = vsel %vm716, %v5324, %v5326
        %v5328 = vrot.slane %v5222, 2
        %v5329 = vrot.slane %v5223, 2
        %v5330 = vsel %vm716, %v5328, %v5329
        %v5331 = vrot.slane %v5224, 2
        %v5332 = vsel %vm716, %v5329, %v5331
        %v5333 = vrot.slane %v5225, 2
        %v5334 = vrot.slane %v5226, 2
        %v5335 = vsel %vm716, %v5333, %v5334
        %v5336 = vrot.slane %v5227, 2
        %v5337 = vsel %vm716, %v5334, %v5336
        %v5338 = vrot.slane %v5228, 2
        %v5339 = vrot.slane %v5229, 2
        %v5340 = vsel %vm716, %v5338, %v5339
        %v5341 = vrot.slane %v5230, 2
        %v5342 = vsel %vm716, %v5339, %v5341
        %v5343 = vrot.slane %v5231, 2
        %v5344 = vrot.slane %v5232, 2
        %v5345 = vsel %vm716, %v5343, %v5344
        %v5346 = vrot.slane %v5233, 2
        %v5347 = vsel %vm716, %v5344, %v5346
        %v5348 = vrot.slane %v5234, 2
        %v5349 = vrot.slane %v5235, 2
        %v5350 = vsel %vm716, %v5348, %v5349
        %v5351 = vrot.slane %v5236, 2
        %v5352 = vsel %vm716, %v5349, %v5351
        %v5353 = vrot.slane %v5237, 2
        %v5354 = vrot.slane %v5238, 2
        %v5355 = vsel %vm716, %v5353, %v5354
        %v5356 = vrot.slane %v5239, 2
        %v5357 = vsel %vm716, %v5354, %v5356
        %v5358 = vrot.slane %v5240, 2
        %v5359 = vrot.slane %v5241, 2
        %v5360 = vsel %vm716, %v5358, %v5359
        %v5361 = vrot.slane %v5242, 2
        %v5362 = vsel %vm716, %v5359, %v5361
        %v5363 = vrot.slane %v5243, 2
        %v5364 = vrot.slane %v5244, 2
        %v5365 = vsel %vm716, %v5363, %v5364
        %v5366 = vrot.slane %v5245, 2
        %v5367 = vsel %vm716, %v5364, %v5366
        %v5368 = vrot.slane %v5246, 2
        %v5369 = vrot.slane %v5247, 2
        %v5370 = vsel %vm716, %v5368, %v5369
        %v5371 = vrot.slane %v5248, 2
        %v5372 = vsel %vm716, %v5369, %v5371
        %v5373 = vrot.slane %v5249, 2
        %v5374 = vrot.slane %v5250, 2
        %v5375 = vsel %vm716, %v5373, %v5374
        %v5376 = vrot.slane %v5251, 2
        %v5377 = vsel %vm716, %v5374, %v5376
        %v5378 = vrot.slane %v5252, 2
        %v5379 = vrot.slane %v5253, 2
        %v5380 = vsel %vm716, %v5378, %v5379
        %v5381 = vrot.slane %v5254, 2
        %v5382 = vsel %vm716, %v5379, %v5381
        %v5415 = vadd.f32 %v5170, %v5305
        %v5416 = vadd.f32 %v5171, %v5307
        %v5417 = vadd.f32 %v5172, %v5310
        %v5418 = vadd.f32 %v5173, %v5312
        %v5419 = vadd.f32 %v5174, %v5315
        %v5420 = vadd.f32 %v5175, %v5317
        %v5421 = vadd.f32 %v5176, %v5320
        %v5422 = vadd.f32 %v5177, %v5322
        %v5423 = vadd.f32 %v5178, %v5325
        %v5424 = vadd.f32 %v5179, %v5327
        %v5425 = vadd.f32 %v5180, %v5330
        %v5426 = vadd.f32 %v5181, %v5332
        %v5427 = vadd.f32 %v5182, %v5335
        %v5428 = vadd.f32 %v5183, %v5337
        %v5429 = vadd.f32 %v5184, %v5340
        %v5430 = vadd.f32 %v5185, %v5342
        %v5431 = vadd.f32 %v5186, %v5345
        %v5432 = vadd.f32 %v5187, %v5347
        %v5433 = vadd.f32 %v5188, %v5350
        %v5434 = vadd.f32 %v5189, %v5352
        %v5435 = vadd.f32 %v5190, %v5355
        %v5436 = vadd.f32 %v5191, %v5357
        %v5437 = vadd.f32 %v5192, %v5360
        %v5438 = vadd.f32 %v5193, %v5362
        %v5439 = vadd.f32 %v5194, %v5365
        %v5440 = vadd.f32 %v5195, %v5367
        %v5441 = vadd.f32 %v5196, %v5370
        %v5442 = vadd.f32 %v5197, %v5372
        %v5443 = vadd.f32 %v5198, %v5375
        %v5444 = vadd.f32 %v5199, %v5377
        %v5445 = vadd.f32 %v5200, %v5380
        %v5446 = vadd.f32 %v5201, %v5382
        %v5447 = vmax.f32 %v5415, 0.0
        %v5448 = vmax.f32 %v5416, 0.0
        %v5449 = vmax.f32 %v5417, 0.0
        %v5450 = vmax.f32 %v5418, 0.0
        %v5451 = vmax.f32 %v5419, 0.0
        %v5452 = vmax.f32 %v5420, 0.0
        %v5453 = vmax.f32 %v5421, 0.0
        %v5454 = vmax.f32 %v5422, 0.0
        %v5455 = vmax.f32 %v5423, 0.0
        %v5456 = vmax.f32 %v5424, 0.0
        %v5457 = vmax.f32 %v5425, 0.0
        %v5458 = vmax.f32 %v5426, 0.0
        %v5459 = vmax.f32 %v5427, 0.0
        %v5460 = vmax.f32 %v5428, 0.0
        %v5461 = vmax.f32 %v5429, 0.0
        %v5462 = vmax.f32 %v5430, 0.0
        %v5463 = vmax.f32 %v5431, 0.0
        %v5464 = vmax.f32 %v5432, 0.0
        %v5465 = vmax.f32 %v5433, 0.0
        %v5466 = vmax.f32 %v5434, 0.0
        %v5467 = vmax.f32 %v5435, 0.0
        %v5468 = vmax.f32 %v5436, 0.0
        %v5469 = vmax.f32 %v5437, 0.0
        %v5470 = vmax.f32 %v5438, 0.0
        %v5471 = vmax.f32 %v5439, 0.0
        %v5472 = vmax.f32 %v5440, 0.0
        %v5473 = vmax.f32 %v5441, 0.0
        %v5474 = vmax.f32 %v5442, 0.0
        %v5475 = vmax.f32 %v5443, 0.0
        %v5476 = vmax.f32 %v5444, 0.0
        %v5477 = vmax.f32 %v5445, 0.0
        %v5478 = vmax.f32 %v5446, 0.0
        %v5479 = vld [vmem:[%s3] sm:$0xff]
        %v5480 = vld [vmem:[%s3 + $0x8] sm:$0xff]
        %v5481 = vld [vmem:[%s3 + $0x10] sm:$0xff]
        %v5482 = vld [vmem:[%s3 + $0x18] sm:$0xff]
        %v5483 = vld [vmem:[%s3 + $0x20] sm:$0xff]
        %v5484 = vld [vmem:[%s3 + $0x28] sm:$0xff]
        %v5485 = vld [vmem:[%s3 + $0x30] sm:$0xff]
        %v5486 = vld [vmem:[%s3 + $0x38] sm:$0xff]
        %v5487 = vld [vmem:[%s3 + $0x40] sm:$0xff]
        %v5488 = vld [vmem:[%s3 + $0x48] sm:$0xff]
        %v5489 = vld [vmem:[%s3 + $0x50] sm:$0xff]
        %v5490 = vld [vmem:[%s3 + $0x58] sm:$0xff]
        %v5491 = vld [vmem:[%s3 + $0x60] sm:$0xff]
        %v5492 = vld [vmem:[%s3 + $0x68] sm:$0xff]
        %v5493 = vld [vmem:[%s3 + $0x70] sm:$0xff]
        %v5494 = vld [vmem:[%s3 + $0x78] sm:$0xff]
        %v5495 = vld [vmem:[%s4] sm:$0x1]
        %v5497 = vlaneseq
        %v5498 = vshrl.u32 %v5497, 7
        %v5499 = vsub.s32 0, %v5498
        %v5500 = vrot.slane %v5495, %v5499
        %5502 = vmatprep.subr.mxu0 0.0
        %5503 = vmatpush1.msra.mxu0 %v5494
        %5504 = vmatprep.subr.mxu0 0.0
        %5505 = vmatpush1.msra.mxu0 %v5493
        %5506 = vmatprep.subr.mxu0 0.0
        %5507 = vmatpush1.msra.mxu0 %v5492
        %5508 = vmatprep.subr.mxu0 0.0
        %5509 = vmatpush1.msra.mxu0 %v5491
        %5510 = vmatprep.subr.mxu0 0.0
        %5511 = vmatpush1.msra.mxu0 %v5490
        %5512 = vmatprep.subr.mxu0 0.0
        %5513 = vmatpush1.msra.mxu0 %v5489
        %5514 = vmatprep.subr.mxu0 0.0
        %5515 = vmatpush1.msra.mxu0 %v5488
        %5516 = vmatprep.subr.mxu0 0.0
        %5517 = vmatpush1.msra.mxu0 %v5487
        %5518 = vmatprep.subr.mxu0 0.0
        %5519 = vmatpush1.msra.mxu0 %v5486
        %5520 = vmatprep.subr.mxu0 0.0
        %5521 = vmatpush1.msra.mxu0 %v5485
        %5522 = vmatprep.subr.mxu0 0.0
        %5523 = vmatpush1.msra.mxu0 %v5484
        %5524 = vmatprep.subr.mxu0 0.0
        %5525 = vmatpush1.msra.mxu0 %v5483
        %5526 = vmatprep.subr.mxu0 0.0
        %5527 = vmatpush1.msra.mxu0 %v5482
        %5528 = vmatprep.subr.mxu0 0.0
        %5529 = vmatpush1.msra.mxu0 %v5481
        %5530 = vmatprep.subr.mxu0 0.0
        %5531 = vmatpush1.msra.mxu0 %v5480
        %5532 = vmatprep.subr.mxu0 0.0
        %5533 = vmatpush1.msra.mxu0 %v5479
        %5534 = vmatprep.subr.mxu0 0.0
        %5535 = vmatpush2.msra.mxu0 0.0
        %5536 = vmatprep.subr.mxu0 0.0
        %5537 = vmatpush2.msra.mxu0 0.0
        %5538 = vmatprep.subr.mxu0 0.0
        %5539 = vmatpush2.msra.mxu0 0.0
        %5540 = vmatprep.subr.mxu0 0.0
        %5541 = vmatpush2.msra.mxu0 0.0
        %5542 = vmatprep.subr.mxu0 0.0
        %5543 = vmatpush2.msra.mxu0 0.0
        %5544 = vmatprep.subr.mxu0 0.0
        %5545 = vmatpush2.msra.mxu0 0.0
        %5546 = vmatprep.subr.mxu0 0.0
        %5547 = vmatpush2.msra.mxu0 0.0
        %5548 = vmatprep.subr.mxu0 0.0
        %5549 = vmatpush2.msra.mxu0 0.0
        %5550 = vmatprep.subr.mxu0 0.0
        %5551 = vmatpush2.msra.mxu0 0.0
        %5552 = vmatprep.subr.mxu0 0.0
        %5553 = vmatpush2.msra.mxu0 0.0
        %5554 = vmatprep.subr.mxu0 0.0
        %5555 = vmatpush2.msra.mxu0 0.0
        %5556 = vmatprep.subr.mxu0 0.0
        %5557 = vmatpush2.msra.mxu0 0.0
        %5558 = vmatprep.subr.mxu0 0.0
        %5559 = vmatpush2.msra.mxu0 0.0
        %5560 = vmatprep.subr.mxu0 0.0
        %5561 = vmatpush2.msra.mxu0 0.0
        %5562 = vmatprep.subr.mxu0 0.0
        %5563 = vmatpush2.msra.mxu0 0.0
        %5564 = vmatprep.subr.mxu0 0.0
        %5565 = vmatpush2.msra.mxu0 0.0
        %5566 = vmatprep.mubr.f32.mxu0 0.0
        %5567 = vmatmul.mubr.f32.gmra.mxu0 %v5447
        %v5568 = vpop.f32.mrf.mxu0
        %v5569 = vadd.f32 %v5500, %v5568
        %v5570 = vpop.f32.mrf.mxu0
        %5571 = vmatprep.mubr.f32.mxu0 0.0
        %5572 = vmatmul.mubr.f32.gmra.mxu0 %v5448
        %v5573 = vpop.f32.mrf.mxu0
        %v5574 = vadd.f32 %v5500, %v5573
        %v5575 = vpop.f32.mrf.mxu0
        %5576 = vmatprep.mubr.f32.mxu0 0.0
        %5577 = vmatmul.mubr.f32.gmra.mxu0 %v5449
        %v5578 = vpop.f32.mrf.mxu0
        %v5579 = vadd.f32 %v5500, %v5578
        %v5580 = vpop.f32.mrf.mxu0
        %5581 = vmatprep.mubr.f32.mxu0 0.0
        %5582 = vmatmul.mubr.f32.gmra.mxu0 %v5450
        %v5583 = vpop.f32.mrf.mxu0
        %v5584 = vadd.f32 %v5500, %v5583
        %v5585 = vpop.f32.mrf.mxu0
        %5586 = vmatprep.mubr.f32.mxu0 0.0
        %5587 = vmatmul.mubr.f32.gmra.mxu0 %v5451
        %v5588 = vpop.f32.mrf.mxu0
        %v5589 = vadd.f32 %v5500, %v5588
        %v5590 = vpop.f32.mrf.mxu0
        %5591 = vmatprep.mubr.f32.mxu0 0.0
        %5592 = vmatmul.mubr.f32.gmra.mxu0 %v5452
        %v5593 = vpop.f32.mrf.mxu0
        %v5594 = vadd.f32 %v5500, %v5593
        %v5595 = vpop.f32.mrf.mxu0
        %5596 = vmatprep.mubr.f32.mxu0 0.0
        %5597 = vmatmul.mubr.f32.gmra.mxu0 %v5453
        %v5598 = vpop.f32.mrf.mxu0
        %v5599 = vadd.f32 %v5500, %v5598
        %v5600 = vpop.f32.mrf.mxu0
        %5601 = vmatprep.mubr.f32.mxu0 0.0
        %5602 = vmatmul.mubr.f32.gmra.mxu0 %v5454
        %v5603 = vpop.f32.mrf.mxu0
        %v5604 = vadd.f32 %v5500, %v5603
        %v5605 = vpop.f32.mrf.mxu0
        %5606 = vmatprep.mubr.f32.mxu0 0.0
        %5607 = vmatmul.mubr.f32.gmra.mxu0 %v5455
        %v5608 = vpop.f32.mrf.mxu0
        %v5609 = vadd.f32 %v5500, %v5608
        %v5610 = vpop.f32.mrf.mxu0
        %5611 = vmatprep.mubr.f32.mxu0 0.0
        %5612 = vmatmul.mubr.f32.gmra.mxu0 %v5456
        %v5613 = vpop.f32.mrf.mxu0
        %v5614 = vadd.f32 %v5500, %v5613
        %v5615 = vpop.f32.mrf.mxu0
        %5616 = vmatprep.mubr.f32.mxu0 0.0
        %5617 = vmatmul.mubr.f32.gmra.mxu0 %v5457
        %v5618 = vpop.f32.mrf.mxu0
        %v5619 = vadd.f32 %v5500, %v5618
        %v5620 = vpop.f32.mrf.mxu0
        %5621 = vmatprep.mubr.f32.mxu0 0.0
        %5622 = vmatmul.mubr.f32.gmra.mxu0 %v5458
        %v5623 = vpop.f32.mrf.mxu0
        %v5624 = vadd.f32 %v5500, %v5623
        %v5625 = vpop.f32.mrf.mxu0
        %5626 = vmatprep.mubr.f32.mxu0 0.0
        %5627 = vmatmul.mubr.f32.gmra.mxu0 %v5459
        %v5628 = vpop.f32.mrf.mxu0
        %v5629 = vadd.f32 %v5500, %v5628
        %v5630 = vpop.f32.mrf.mxu0
        %5631 = vmatprep.mubr.f32.mxu0 0.0
        %5632 = vmatmul.mubr.f32.gmra.mxu0 %v5460
        %v5633 = vpop.f32.mrf.mxu0
        %v5634 = vadd.f32 %v5500, %v5633
        %v5635 = vpop.f32.mrf.mxu0
        %5636 = vmatprep.mubr.f32.mxu0 0.0
        %5637 = vmatmul.mubr.f32.gmra.mxu0 %v5461
        %v5638 = vpop.f32.mrf.mxu0
        %v5639 = vadd.f32 %v5500, %v5638
        %v5640 = vpop.f32.mrf.mxu0
        %5641 = vmatprep.mubr.f32.mxu0 0.0
        %5642 = vmatmul.mubr.f32.gmra.mxu0 %v5462
        %v5643 = vpop.f32.mrf.mxu0
        %v5644 = vadd.f32 %v5500, %v5643
        %v5645 = vpop.f32.mrf.mxu0
        %5646 = vmatprep.mubr.f32.mxu0 0.0
        %5647 = vmatmul.mubr.f32.gmra.mxu0 %v5463
        %v5648 = vpop.f32.mrf.mxu0
        %v5649 = vadd.f32 %v5500, %v5648
        %v5650 = vpop.f32.mrf.mxu0
        %5651 = vmatprep.mubr.f32.mxu0 0.0
        %5652 = vmatmul.mubr.f32.gmra.mxu0 %v5464
        %v5653 = vpop.f32.mrf.mxu0
        %v5654 = vadd.f32 %v5500, %v5653
        %v5655 = vpop.f32.mrf.mxu0
        %5656 = vmatprep.mubr.f32.mxu0 0.0
        %5657 = vmatmul.mubr.f32.gmra.mxu0 %v5465
        %v5658 = vpop.f32.mrf.mxu0
        %v5659 = vadd.f32 %v5500, %v5658
        %v5660 = vpop.f32.mrf.mxu0
        %5661 = vmatprep.mubr.f32.mxu0 0.0
        %5662 = vmatmul.mubr.f32.gmra.mxu0 %v5466
        %v5663 = vpop.f32.mrf.mxu0
        %v5664 = vadd.f32 %v5500, %v5663
        %v5665 = vpop.f32.mrf.mxu0
        %5666 = vmatprep.mubr.f32.mxu0 0.0
        %5667 = vmatmul.mubr.f32.gmra.mxu0 %v5467
        %v5668 = vpop.f32.mrf.mxu0
        %v5669 = vadd.f32 %v5500, %v5668
        %v5670 = vpop.f32.mrf.mxu0
        %5671 = vmatprep.mubr.f32.mxu0 0.0
        %5672 = vmatmul.mubr.f32.gmra.mxu0 %v5468
        %v5673 = vpop.f32.mrf.mxu0
        %v5674 = vadd.f32 %v5500, %v5673
        %v5675 = vpop.f32.mrf.mxu0
        %5676 = vmatprep.mubr.f32.mxu0 0.0
        %5677 = vmatmul.mubr.f32.gmra.mxu0 %v5469
        %v5678 = vpop.f32.mrf.mxu0
        %v5679 = vadd.f32 %v5500, %v5678
        %v5680 = vpop.f32.mrf.mxu0
        %5681 = vmatprep.mubr.f32.mxu0 0.0
        %5682 = vmatmul.mubr.f32.gmra.mxu0 %v5470
        %v5683 = vpop.f32.mrf.mxu0
        %v5684 = vadd.f32 %v5500, %v5683
        %v5685 = vpop.f32.mrf.mxu0
        %5686 = vmatprep.mubr.f32.mxu0 0.0
        %5687 = vmatmul.mubr.f32.gmra.mxu0 %v5471
        %v5688 = vpop.f32.mrf.mxu0
        %v5689 = vadd.f32 %v5500, %v5688
        %v5690 = vpop.f32.mrf.mxu0
        %5691 = vmatprep.mubr.f32.mxu0 0.0
        %5692 = vmatmul.mubr.f32.gmra.mxu0 %v5472
        %v5693 = vpop.f32.mrf.mxu0
        %v5694 = vadd.f32 %v5500, %v5693
        %v5695 = vpop.f32.mrf.mxu0
        %5696 = vmatprep.mubr.f32.mxu0 0.0
        %5697 = vmatmul.mubr.f32.gmra.mxu0 %v5473
        %v5698 = vpop.f32.mrf.mxu0
        %v5699 = vadd.f32 %v5500, %v5698
        %v5700 = vpop.f32.mrf.mxu0
        %5701 = vmatprep.mubr.f32.mxu0 0.0
        %5702 = vmatmul.mubr.f32.gmra.mxu0 %v5474
        %v5703 = vpop.f32.mrf.mxu0
        %v5704 = vadd.f32 %v5500, %v5703
        %v5705 = vpop.f32.mrf.mxu0
        %5706 = vmatprep.mubr.f32.mxu0 0.0
        %5707 = vmatmul.mubr.f32.gmra.mxu0 %v5475
        %v5708 = vpop.f32.mrf.mxu0
        %v5709 = vadd.f32 %v5500, %v5708
        %v5710 = vpop.f32.mrf.mxu0
        %5711 = vmatprep.mubr.f32.mxu0 0.0
        %5712 = vmatmul.mubr.f32.gmra.mxu0 %v5476
        %v5713 = vpop.f32.mrf.mxu0
        %v5714 = vadd.f32 %v5500, %v5713
        %v5715 = vpop.f32.mrf.mxu0
        %5716 = vmatprep.mubr.f32.mxu0 0.0
        %5717 = vmatmul.mubr.f32.gmra.mxu0 %v5477
        %v5718 = vpop.f32.mrf.mxu0
        %v5719 = vadd.f32 %v5500, %v5718
        %v5720 = vpop.f32.mrf.mxu0
        %5721 = vmatprep.mubr.f32.mxu0 0.0
        %5722 = vmatmul.mubr.f32.gmra.mxu0 %v5478
        %v5723 = vpop.f32.mrf.mxu0
        %v5724 = vadd.f32 %v5500, %v5723
        %v5725 = vpop.f32.mrf.mxu0
        %5726 = vdwg.mxu0
        %v5775 = vrot.slane %v1985, 1
        %v5776 = vrot.slane %v1986, 1
        %v5777 = vsel %vm470, %v5775, %v5776
        %v5778 = vrot.slane %v1987, 1
        %v5779 = vsel %vm470, %v5776, %v5778
        %v5780 = vrot.slane %v1988, 1
        %v5781 = vrot.slane %v1989, 1
        %v5782 = vsel %vm470, %v5780, %v5781
        %v5783 = vrot.slane %v1990, 1
        %v5784 = vsel %vm470, %v5781, %v5783
        %v5785 = vrot.slane %v1991, 1
        %v5786 = vrot.slane %v1992, 1
        %v5787 = vsel %vm470, %v5785, %v5786
        %v5788 = vrot.slane %v1993, 1
        %v5789 = vsel %vm470, %v5786, %v5788
        %v5790 = vrot.slane %v1994, 1
        %v5791 = vrot.slane %v1995, 1
        %v5792 = vsel %vm470, %v5790, %v5791
        %v5793 = vrot.slane %v1996, 1
        %v5794 = vsel %vm470, %v5791, %v5793
        %v5795 = vrot.slane %v1997, 1
        %v5796 = vrot.slane %v1998, 1
        %v5797 = vsel %vm470, %v5795, %v5796
        %v5798 = vrot.slane %v1999, 1
        %v5799 = vsel %vm470, %v5796, %v5798
        %v5800 = vrot.slane %v2000, 1
        %v5801 = vrot.slane %v2001, 1
        %v5802 = vsel %vm470, %v5800, %v5801
        %v5803 = vrot.slane %v2002, 1
        %v5804 = vsel %vm470, %v5801, %v5803
        %v5805 = vrot.slane %v2003, 1
        %v5806 = vrot.slane %v2004, 1
        %v5807 = vsel %vm470, %v5805, %v5806
        %v5808 = vrot.slane %v2005, 1
        %v5809 = vsel %vm470, %v5806, %v5808
        %v5810 = vrot.slane %v2006, 1
        %v5811 = vrot.slane %v2007, 1
        %v5812 = vsel %vm470, %v5810, %v5811
        %v5813 = vrot.slane %v2008, 1
        %v5814 = vsel %vm470, %v5811, %v5813
        %v5815 = vrot.slane %v2009, 1
        %v5816 = vrot.slane %v2010, 1
        %v5817 = vsel %vm470, %v5815, %v5816
        %v5818 = vrot.slane %v2011, 1
        %v5819 = vsel %vm470, %v5816, %v5818
        %v5820 = vrot.slane %v2012, 1
        %v5821 = vrot.slane %v2013, 1
        %v5822 = vsel %vm470, %v5820, %v5821
        %v5823 = vrot.slane %v2014, 1
        %v5824 = vsel %vm470, %v5821, %v5823
        %v5825 = vrot.slane %v2015, 1
        %v5826 = vrot.slane %v2016, 1
        %v5827 = vsel %vm470, %v5825, %v5826
        %v5828 = vrot.slane %v2017, 1
        %v5829 = vsel %vm470, %v5826, %v5828
        %v5830 = vrot.slane %v2018, 1
        %v5831 = vrot.slane %v2019, 1
        %v5832 = vsel %vm470, %v5830, %v5831
        %v5833 = vrot.slane %v2020, 1
        %v5834 = vsel %vm470, %v5831, %v5833
        %v5835 = vrot.slane %v2021, 1
        %v5836 = vrot.slane %v2022, 1
        %v5837 = vsel %vm470, %v5835, %v5836
        %v5838 = vrot.slane %v2023, 1
        %v5839 = vsel %vm470, %v5836, %v5838
        %v5840 = vrot.slane %v2024, 1
        %v5841 = vrot.slane %v2025, 1
        %v5842 = vsel %vm470, %v5840, %v5841
        %v5843 = vrot.slane %v2026, 1
        %v5844 = vsel %vm470, %v5841, %v5843
        %v5845 = vrot.slane %v2027, 1
        %v5846 = vrot.slane %v2028, 1
        %v5847 = vsel %vm470, %v5845, %v5846
        %v5848 = vrot.slane %v2029, 1
        %v5849 = vsel %vm470, %v5846, %v5848
        %v5850 = vrot.slane %v2030, 1
        %v5851 = vrot.slane %v2031, 1
        %v5852 = vsel %vm470, %v5850, %v5851
        %v5853 = vrot.slane %v2032, 1
        %v5854 = vsel %vm470, %v5851, %v5853
        %v5887 = vadd.f32 %v5569, %v5777
        %v5888 = vadd.f32 %v5574, %v5779
        %v5889 = vadd.f32 %v5579, %v5782
        %v5890 = vadd.f32 %v5584, %v5784
        %v5891 = vadd.f32 %v5589, %v5787
        %v5892 = vadd.f32 %v5594, %v5789
        %v5893 = vadd.f32 %v5599, %v5792
        %v5894 = vadd.f32 %v5604, %v5794
        %v5895 = vadd.f32 %v5609, %v5797
        %v5896 = vadd.f32 %v5614, %v5799
        %v5897 = vadd.f32 %v5619, %v5802
        %v5898 = vadd.f32 %v5624, %v5804
        %v5899 = vadd.f32 %v5629, %v5807
        %v5900 = vadd.f32 %v5634, %v5809
        %v5901 = vadd.f32 %v5639, %v5812
        %v5902 = vadd.f32 %v5644, %v5814
        %v5903 = vadd.f32 %v5649, %v5817
        %v5904 = vadd.f32 %v5654, %v5819
        %v5905 = vadd.f32 %v5659, %v5822
        %v5906 = vadd.f32 %v5664, %v5824
        %v5907 = vadd.f32 %v5669, %v5827
        %v5908 = vadd.f32 %v5674, %v5829
        %v5909 = vadd.f32 %v5679, %v5832
        %v5910 = vadd.f32 %v5684, %v5834
        %v5911 = vadd.f32 %v5689, %v5837
        %v5912 = vadd.f32 %v5694, %v5839
        %v5913 = vadd.f32 %v5699, %v5842
        %v5914 = vadd.f32 %v5704, %v5844
        %v5915 = vadd.f32 %v5709, %v5847
        %v5916 = vadd.f32 %v5714, %v5849
        %v5917 = vadd.f32 %v5719, %v5852
        %v5918 = vadd.f32 %v5724, %v5854
        %5919 = vst [vmem:[%s231] sm:$0xff] %v5887
        %5920 = vst [vmem:[%s231 + $0x8] sm:$0xff] %v5888
        %5921 = vst [vmem:[%s231 + $0x10] sm:$0xff] %v5889
        %5922 = vst [vmem:[%s231 + $0x18] sm:$0xff] %v5890
        %5923 = vst [vmem:[%s231 + $0x20] sm:$0xff] %v5891
        %5924 = vst [vmem:[%s231 + $0x28] sm:$0xff] %v5892
        %5925 = vst [vmem:[%s231 + $0x30] sm:$0xff] %v5893
        %5926 = vst [vmem:[%s231 + $0x38] sm:$0xff] %v5894
        %5927 = vst [vmem:[%s231 + $0x40] sm:$0xff] %v5895
        %5928 = vst [vmem:[%s231 + $0x48] sm:$0xff] %v5896
        %5929 = vst [vmem:[%s231 + $0x50] sm:$0xff] %v5897
        %5930 = vst [vmem:[%s231 + $0x58] sm:$0xff] %v5898
        %5931 = vst [vmem:[%s231 + $0x60] sm:$0xff] %v5899
        %5932 = vst [vmem:[%s231 + $0x68] sm:$0xff] %v5900
        %5933 = vst [vmem:[%s231 + $0x70] sm:$0xff] %v5901
        %5934 = vst [vmem:[%s231 + $0x78] sm:$0xff] %v5902
        %5935 = vst [vmem:[%s231 + $0x80] sm:$0xff] %v5903
        %5936 = vst [vmem:[%s231 + $0x88] sm:$0xff] %v5904
        %5937 = vst [vmem:[%s231 + $0x90] sm:$0xff] %v5905
        %5938 = vst [vmem:[%s231 + $0x98] sm:$0xff] %v5906
        %5939 = vst [vmem:[%s231 + $0xa0] sm:$0xff] %v5907
        %5940 = vst [vmem:[%s231 + $0xa8] sm:$0xff] %v5908
        %5941 = vst [vmem:[%s231 + $0xb0] sm:$0xff] %v5909
        %5942 = vst [vmem:[%s231 + $0xb8] sm:$0xff] %v5910
        %5943 = vst [vmem:[%s231 + $0xc0] sm:$0xff] %v5911
        %5944 = vst [vmem:[%s231 + $0xc8] sm:$0xff] %v5912
        %5945 = vst [vmem:[%s231 + $0xd0] sm:$0xff] %v5913
        %5946 = vst [vmem:[%s231 + $0xd8] sm:$0xff] %v5914
        %5947 = vst [vmem:[%s231 + $0xe0] sm:$0xff] %v5915
        %5948 = vst [vmem:[%s231 + $0xe8] sm:$0xff] %v5916
        %5949 = vst [vmem:[%s231 + $0xf0] sm:$0xff] %v5917
        %5950 = vst [vmem:[%s231 + $0xf8] sm:$0xff] %v5918
        %s5951 = sand.u32 %s151, 1
        %s5952 = scalar_lea.sflag [#allocation3], %s5951
        %s5953 = sand.u32 %s151, 1
        %s5954 = smul.addr %s5953, 256
        %s5955 = scalar_lea.vmem [#allocation2], %s5954
        // Predicated region
        $region41: #{dilated_residual_3d_forward.1} parent=39 // pred_check
          %p5956 = pneg %p161
        $region42: #{dilated_residual_3d_forward.1} parent=39 // pred_check_branch
          %5958 = sbr.rel (%p5956) target = $region44
        $region43: #{dilated_residual_3d_forward.1} parent=39 // pred_region
          %s5960 = ssub.s32 4096, 4096
          %5961 = vsyncadd %s5952, %s5960
          %s5962 = smul.addr %s24, 32
          %s5963 = smul.addr %s23, 256
          %s5964 = sadd.s32 %s5962, %s5963
          %s5965 = smul.addr %s5964, 128
          %s5966 = scalar_lea.hbm %s5, %s5965
          %s5967 = sshll.u32 %s5955, 4
          %s5968 = int_to_ptr.vmem [resolvable:$true] %s5967
          %5973 = dma.vmem_to_hbm [thread:$0]  %s5968, 4096, %s5966, %s5952, 128, 128, 8
        $region44: #{dilated_residual_3d_forward.1} parent=39 // pred_fallthru
          _
      $region40: #{dilated_residual_3d_forward.1} parent=5 // pred_fallthru
        _
      %p5974 = scmp.le.s32.totalorder 2, %s14
      // Predicated region
      $region45: #{dilated_residual_3d_forward.1} parent=5 // pred_check
        %p5975 = pneg %p5974
      $region46: #{dilated_residual_3d_forward.1} parent=5 // pred_check_branch
        %5977 = sbr.rel (%p5975) target = $region48
      $region47: #{dilated_residual_3d_forward.1} parent=5 // pred_region
        %s5978 = ssub.s32 %s14, 2
        // Predicated region
        $region49: #{dilated_residual_3d_forward.1} parent=47 // pred_check
          %p5979 = pneg %p167
        $region50: #{dilated_residual_3d_forward.1} parent=47 // pred_check_branch
          %5981 = sbr.rel (%p5979) target = $region52
        $region51: #{dilated_residual_3d_forward.1} parent=47 // pred_region
          %s5982 = sand.u32 %s152, 1
          %s5983 = scalar_lea.sflag [#allocation3], %s5982
          %s5984 = sand.u32 %s152, 1
          %s5985 = smul.addr %s5984, 256
          %s5986 = scalar_lea.vmem [#allocation2], %s5985
          %5987 = dma.done %s5983, 4096
        $region52: #{dilated_residual_3d_forward.1} parent=47 // pred_fallthru
          _
      $region48: #{dilated_residual_3d_forward.1} parent=5 // pred_fallthru
        _
    $region6: #{dilated_residual_3d_forward.1} parent=1 // loop_footer
      %s18 = sadd.s32 1, %s14
    $region7: #{dilated_residual_3d_forward.1} parent=1 // loop_footer_branch
      %13 = sbr.rel target = $region3
    $region8: #{dilated_residual_3d_forward.1} parent=1 // loop_exit
      _
    %5988 = vsyncpa [#allocation3], 1
    %s5989 = scalar_lea.sflag [#allocation3], 1
    %5990 = vsyncpa %s5989, 1

</llo_original>
